<compile_context>
chip_gen: v7x
topology: tpu7x:2x2x1
jax: 0.10.0
libtpu: 0.0.40
codegen_flags: <defaults>
</compile_context>

<pallas_src>
import jax
import jax.numpy as jnp
from jax import lax
from jax.experimental import pallas as pl
from jax.experimental.pallas import tpu as pltpu

N_LAYERS = 2          # kernel is specialized to the module default n_layers=2
NEG_INF = -1e30       # bias value for padded (fake) output classes


# ---------------------------------------------------------------------------
# Fused kernel: embedding gather + 2-layer LSTM recurrence + projection + log_softmax.
# Single invocation (no grid); everything is VMEM-resident.
# ---------------------------------------------------------------------------
def fused_lstm_kernel(xidx_ref, h0_ref, c0_ref,
                      emb_ref, wih0_ref, b0_ref,
                      whh0_ref, wih1_ref, whh1_ref, b1_ref,
                      wout_ref, bout_ref,
                      logp_ref, hn_ref, cn_ref,
                      xproj_sc, y_sc):
    TB = xidx_ref.shape[0]
    C = emb_ref.shape[0]
    _, B, H = h0_ref.shape
    T = TB // B
    G = 4 * H

    # ---- recurrent weights loaded once (loop-invariant) ----
    whh0 = whh0_ref[...]                                   # (H, 4H)
    wih1 = wih1_ref[...]                                   # (H, 4H)
    whh1 = whh1_ref[...]                                   # (H, 4H)
    b1b = jnp.broadcast_to(b1_ref[...], (B, G))            # hoisted bias broadcast

    # ---- in-kernel embedding gather (exact one-hot MXU matmul) +
    #      hoisted layer-0 input projection for ALL time steps ----
    idx = xidx_ref[...]                                                      # (T*B, 1) i32
    onehot = (lax.broadcasted_iota(jnp.int32, (TB, C), 1) == idx).astype(jnp.float32)
    x_emb = jnp.dot(onehot, emb_ref[...], preferred_element_type=jnp.float32)  # (T*B, E)
    xproj_sc[...] = (jnp.dot(x_emb, wih0_ref[...], preferred_element_type=jnp.float32)
                     + b0_ref[...])                        # (T*B, 4H), b0 folded in once

    def cell(gates, c_prev):
        # full-vreg transcendental sweeps, slice afterwards (torch gate order i, f, g, o)
        sg = jax.nn.sigmoid(gates)
        th = jnp.tanh(gates)
        i = sg[:, 0 * H:1 * H]
        f = sg[:, 1 * H:2 * H]
        g = th[:, 2 * H:3 * H]
        o = sg[:, 3 * H:4 * H]
        c_new = f * c_prev + i * g
        h_new = o * jnp.tanh(c_new)
        return h_new, c_new

    def step(t, carry):
        h0_, c0_, h1_, c1_ = carry
        row = pl.multiple_of(t * B, B)
        # layer 0: precomputed input projection + recurrent matmul (K = H only)
        g0 = xproj_sc[pl.ds(row, B), :] + jnp.dot(
            h0_, whh0, preferred_element_type=jnp.float32)
        h0n, c0n = cell(g0, c0_)
        # layer 1: two small dots, no per-step lane concat
        g1 = (jnp.dot(h0n, wih1, preferred_element_type=jnp.float32)
              + jnp.dot(h1_, whh1, preferred_element_type=jnp.float32) + b1b)
        h1n, c1n = cell(g1, c1_)
        y_sc[pl.ds(row, B), :] = h1n                 # sublane-aligned layer-1 output store
        return (h0n, c0n, h1n, c1n)

    carry0 = (h0_ref[0], c0_ref[0], h0_ref[1], c0_ref[1])
    h0f, c0f, h1f, c1f = lax.fori_loop(0, T, step, carry0, unroll=min(T, 8))

    hn_ref[0] = h0f
    hn_ref[1] = h1f
    cn_ref[0] = c0f
    cn_ref[1] = c1f

    # ---- fused projection + log_softmax over the lane-dense (padded to 128) class dim;
    #      padded classes carry bias -1e30 so they contribute nothing to the denominator.
    logits = (jnp.dot(y_sc[...], wout_ref[...], preferred_element_type=jnp.float32)
              + bout_ref[...])
    m = jnp.max(logits, axis=-1, keepdims=True)
    z = logits - m
    lse = jnp.log(jnp.sum(jnp.exp(z), axis=-1, keepdims=True))
    logp_ref[...] = z - lse                                # one (T*B, 128) unmasked store


def run_fused(xidx, h0, c0, emb, wih0, b0, whh0, wih1, whh1, b1, wout_pad, bout_pad):
    TB = xidx.shape[0]
    L, B, H = h0.shape
    T = TB // B
    C_pad = wout_pad.shape[1]
    return pl.pallas_call(
        fused_lstm_kernel,
        out_shape=(jax.ShapeDtypeStruct((TB, C_pad), jnp.float32),
                   jax.ShapeDtypeStruct((L, B, H), jnp.float32),
                   jax.ShapeDtypeStruct((L, B, H), jnp.float32)),
        scratch_shapes=[pltpu.VMEM((TB, 4 * H), jnp.float32),   # hoisted layer-0 Xproj
                        pltpu.VMEM((TB, H), jnp.float32)],      # layer-1 outputs
        compiler_params=pltpu.CompilerParams(vmem_limit_bytes=32 * 1024 * 1024),
    )(xidx, h0, c0, emb, wih0, b0, whh0, wih1, whh1, b1, wout_pad, bout_pad)


# ---------------------------------------------------------------------------
# Parameter init (deterministic, PyTorch-like distributions)
# ---------------------------------------------------------------------------
def init_params(key, n_chars, hidden_dim, embed_dim):
    H, E, C = hidden_dim, embed_dim, n_chars
    C_pad = -(-C // 128) * 128
    k = 1.0 / jnp.sqrt(H)
    ks = jax.random.split(key, 11)
    u = lambda kk, shape: jax.random.uniform(kk, shape, jnp.float32, -k, k)
    return {
        "embedding": jax.random.normal(ks[0], (C, E), jnp.float32),
        # per-layer weights, torch gate order i, f, g, o along the 4H axis
        "wih0": u(ks[1], (E, 4 * H)),
        "whh0": u(ks[2], (H, 4 * H)),
        "b0": u(ks[3], (1, 4 * H)) + u(ks[4], (1, 4 * H)),       # b_ih0 + b_hh0
        "wih1": u(ks[5], (H, 4 * H)),
        "whh1": u(ks[6], (H, 4 * H)),
        "b1": u(ks[7], (1, 4 * H)) + u(ks[8], (1, 4 * H)),       # b_ih1 + b_hh1
        # output projection padded to a lane-dense class dim (multiple of 128)
        "w_outT_pad": jnp.pad(u(ks[9], (H, C)), ((0, 0), (0, C_pad - C))),
        "b_out_pad": jnp.pad(u(ks[10], (1, C)), ((0, 0), (0, C_pad - C)),
                             constant_values=NEG_INF),
    }


# ---------------------------------------------------------------------------
# Forward: tiny batch pad (wrapper) -> fused Pallas kernel -> un-pad slices
# ---------------------------------------------------------------------------
def forward(params, X, h, bs=1):
    """X: int32 indices with T*bs elements (any shape). h = (h0, c0), each (2, bs, H)."""
    C = params["embedding"].shape[0]
    C_pad = params["w_outT_pad"].shape[1]
    Xf = X.reshape(-1, bs)                                          # (T, bs)
    T = Xf.shape[0]
    h0, c0 = h

    # pad batch up to a full sublane group (>= 8); padded rows compute independent garbage
    B_pad = max(8, -(-bs // 8) * 8)
    if B_pad != bs:
        Xf = jnp.pad(Xf, ((0, 0), (0, B_pad - bs)))
        pad3 = ((0, 0), (0, B_pad - bs), (0, 0))
        h0 = jnp.pad(h0, pad3)
        c0 = jnp.pad(c0, pad3)

    xidx = Xf.reshape(T * B_pad, 1).astype(jnp.int32)

    logp_flat, hn, cn = run_fused(xidx, h0, c0,
                                  params["embedding"], params["wih0"], params["b0"],
                                  params["whh0"], params["wih1"], params["whh1"],
                                  params["b1"],
                                  params["w_outT_pad"], params["b_out_pad"])
    logp = logp_flat.reshape(T, B_pad, C_pad)[:, :bs, :C]
    return logp, (hn[:, :bs], cn[:, :bs])


# ---------------------------------------------------------------------------
# Pure-JAX reference (for correctness check)
# ---------------------------------------------------------------------------
def forward_ref(params, X, h, bs=1):
    C, E = params["embedding"].shape
    H = params["whh0"].shape[0]
    emb = jnp.take(params["embedding"], X.reshape(-1), axis=0).reshape(-1, bs, E)
    h0, c0 = h

    def cell(gates, cp):
        i = jax.nn.sigmoid(gates[:, :H]); f = jax.nn.sigmoid(gates[:, H:2 * H])
        g = jnp.tanh(gates[:, 2 * H:3 * H]); o = jax.nn.sigmoid(gates[:, 3 * H:])
        c = f * cp + i * g
        return o * jnp.tanh(c), c

    def step(carry, x_t):
        h0_, c0_, h1_, c1_ = carry
        g0 = x_t @ params["wih0"] + h0_ @ params["whh0"] + params["b0"]
        h0n, c0n = cell(g0, c0_)
        g1 = h0n @ params["wih1"] + h1_ @ params["whh1"] + params["b1"]
        h1n, c1n = cell(g1, c1_)
        return (h0n, c0n, h1n, c1n), h1n

    carry, ys = jax.lax.scan(step, (h0[0], c0[0], h0[1], c0[1]), emb)
    logits = ys @ params["w_outT_pad"][:, :C] + params["b_out_pad"][:, :C]
    logp = jax.nn.log_softmax(logits, axis=2)
    hn = jnp.stack([carry[0], carry[2]]); cn = jnp.stack([carry[1], carry[3]])
    return logp, (hn, cn)


if __name__ == "__main__":
    n_chars, hidden_dim, embed_dim, n_layers = 16, 32, 32, 2
    T, bs = 8, 2
    assert n_layers == N_LAYERS

    key = jax.random.PRNGKey(0)
    kp, kx = jax.random.split(key)
    params = init_params(kp, n_chars, hidden_dim, embed_dim)

    X = jax.random.randint(kx, (T, bs), 0, n_chars, dtype=jnp.int32)
    h = (jnp.zeros((n_layers, bs, hidden_dim), jnp.float32),
         jnp.zeros((n_layers, bs, hidden_dim), jnp.float32))

    out, (hn, cn) = forward(params, X, h, bs=bs)
    jax.block_until_ready((out, hn, cn))

    out_r, (hn_r, cn_r) = forward_ref(params, X, h, bs=bs)
    assert out.shape == (T, bs, n_chars)
    assert jnp.allclose(out, out_r, atol=1e-4), "log_softmax output mismatch"
    assert jnp.allclose(hn, hn_r, atol=1e-4), "h_n mismatch"
    assert jnp.allclose(cn, cn_r, atol=1e-4), "c_n mismatch"

    print("KERNEL_OK")
</pallas_src>

<mosaic_0001>
module attributes {stable_mosaic.version = 11 : i64} {
  func.func @fused_lstm_kernel(%arg0: memref<64x1xi32, #tpu.memory_space<vmem>>, %arg1: memref<2x8x32xf32, #tpu.memory_space<vmem>>, %arg2: memref<2x8x32xf32, #tpu.memory_space<vmem>>, %arg3: memref<16x32xf32, #tpu.memory_space<vmem>>, %arg4: memref<32x128xf32, #tpu.memory_space<vmem>>, %arg5: memref<1x128xf32, #tpu.memory_space<vmem>>, %arg6: memref<32x128xf32, #tpu.memory_space<vmem>>, %arg7: memref<32x128xf32, #tpu.memory_space<vmem>>, %arg8: memref<32x128xf32, #tpu.memory_space<vmem>>, %arg9: memref<1x128xf32, #tpu.memory_space<vmem>>, %arg10: memref<32x128xf32, #tpu.memory_space<vmem>>, %arg11: memref<1x128xf32, #tpu.memory_space<vmem>>, %arg12: memref<64x128xf32, #tpu.memory_space<vmem>>, %arg13: memref<2x8x32xf32, #tpu.memory_space<vmem>>, %arg14: memref<2x8x32xf32, #tpu.memory_space<vmem>>, %arg15: memref<64x128xf32, #tpu.memory_space<vmem>>, %arg16: memref<64x32xf32, #tpu.memory_space<vmem>>) attributes {dimension_semantics = [], scalar_prefetch = 0 : i64, scratch_operands = 2 : i64, tpu.core_type = #tpu.core_type<tc>} {
    %c0 = arith.constant 0 : index
    %c0_0 = arith.constant 0 : index
    %0 = vector.load %arg6[%c0, %c0_0] : memref<32x128xf32, #tpu.memory_space<vmem>>, vector<32x128xf32>
    %c0_1 = arith.constant 0 : index
    %c0_2 = arith.constant 0 : index
    %1 = vector.load %arg7[%c0_1, %c0_2] : memref<32x128xf32, #tpu.memory_space<vmem>>, vector<32x128xf32>
    %c0_3 = arith.constant 0 : index
    %c0_4 = arith.constant 0 : index
    %2 = vector.load %arg8[%c0_3, %c0_4] : memref<32x128xf32, #tpu.memory_space<vmem>>, vector<32x128xf32>
    %c0_5 = arith.constant 0 : index
    %c0_6 = arith.constant 0 : index
    %3 = vector.load %arg9[%c0_5, %c0_6] : memref<1x128xf32, #tpu.memory_space<vmem>>, vector<1x128xf32>
    %4 = vector.shape_cast %3 : vector<1x128xf32> to vector<1x128xf32>
    %5 = vector.broadcast %4 : vector<1x128xf32> to vector<8x128xf32>
    %c0_7 = arith.constant 0 : index
    %c0_8 = arith.constant 0 : index
    %6 = vector.load %arg0[%c0_7, %c0_8] : memref<64x1xi32, #tpu.memory_space<vmem>>, vector<64x1xi32>
    %7 = tpu.iota {dimensions = array<i32: 1>} : vector<64x16xi32>
    %8 = vector.broadcast %6 : vector<64x1xi32> to vector<64x16xi32>
    %9 = arith.cmpi eq, %7, %8 : vector<64x16xi32>
    %10 = arith.extui %9 : vector<64x16xi1> to vector<64x16xi32>
    %11 = arith.sitofp %10 : vector<64x16xi32> to vector<64x16xf32>
    %c0_9 = arith.constant 0 : index
    %c0_10 = arith.constant 0 : index
    %12 = vector.load %arg3[%c0_9, %c0_10] : memref<16x32xf32, #tpu.memory_space<vmem>>, vector<16x32xf32>
    %cst = arith.constant dense<0.000000e+00> : vector<64x32xf32>
    %13 = tpu.matmul %11, %12, %cst {dimension_numbers = #tpu.dot_dimension_numbers<[1], [0], [0], [1], [0, 0, 1, 1], [], []>} : vector<64x16xf32>, vector<16x32xf32>, vector<64x32xf32> -> vector<64x32xf32>
    %c0_11 = arith.constant 0 : index
    %c0_12 = arith.constant 0 : index
    %14 = vector.load %arg4[%c0_11, %c0_12] : memref<32x128xf32, #tpu.memory_space<vmem>>, vector<32x128xf32>
    %cst_13 = arith.constant dense<0.000000e+00> : vector<64x128xf32>
    %15 = tpu.matmul %13, %14, %cst_13 {dimension_numbers = #tpu.dot_dimension_numbers<[1], [0], [0], [1], [0, 0, 1, 1], [], []>} : vector<64x32xf32>, vector<32x128xf32>, vector<64x128xf32> -> vector<64x128xf32>
    %c0_14 = arith.constant 0 : index
    %c0_15 = arith.constant 0 : index
    %16 = vector.load %arg5[%c0_14, %c0_15] : memref<1x128xf32, #tpu.memory_space<vmem>>, vector<1x128xf32>
    %17 = vector.broadcast %16 : vector<1x128xf32> to vector<64x128xf32>
    %18 = arith.addf %15, %17 : vector<64x128xf32>
    %c0_16 = arith.constant 0 : index
    %c0_17 = arith.constant 0 : index
    %19 = vector.load %arg15[%c0_16, %c0_17] : memref<64x128xf32, #tpu.memory_space<vmem>>, vector<64x128xf32>
    tpu.vector_store %arg15[%c0_16, %c0_17], %18 {strides = array<i32>} : memref<64x128xf32, #tpu.memory_space<vmem>>, vector<64x128xf32>,
    %c0_18 = arith.constant 0 : index
    %c0_19 = arith.constant 0 : index
    %c0_20 = arith.constant 0 : index
    %20 = vector.load %arg1[%c0_18, %c0_19, %c0_20] : memref<2x8x32xf32, #tpu.memory_space<vmem>>, vector<1x8x32xf32>
    %21 = vector.shape_cast %20 : vector<1x8x32xf32> to vector<8x32xf32>
    %c0_21 = arith.constant 0 : index
    %c0_22 = arith.constant 0 : index
    %c0_23 = arith.constant 0 : index
    %22 = vector.load %arg2[%c0_21, %c0_22, %c0_23] : memref<2x8x32xf32, #tpu.memory_space<vmem>>, vector<1x8x32xf32>
    %23 = vector.shape_cast %22 : vector<1x8x32xf32> to vector<8x32xf32>
    %c1 = arith.constant 1 : index
    %c0_24 = arith.constant 0 : index
    %c0_25 = arith.constant 0 : index
    %24 = vector.load %arg1[%c1, %c0_24, %c0_25] : memref<2x8x32xf32, #tpu.memory_space<vmem>>, vector<1x8x32xf32>
    %25 = vector.shape_cast %24 : vector<1x8x32xf32> to vector<8x32xf32>
    %c1_26 = arith.constant 1 : index
    %c0_27 = arith.constant 0 : index
    %c0_28 = arith.constant 0 : index
    %26 = vector.load %arg2[%c1_26, %c0_27, %c0_28] : memref<2x8x32xf32, #tpu.memory_space<vmem>>, vector<1x8x32xf32>
    %27 = vector.shape_cast %26 : vector<1x8x32xf32> to vector<8x32xf32>
    %c0_i32 = arith.constant 0 : i32
    %c8_i32 = arith.constant 8 : i32
    %28 = arith.muli %c0_i32, %c8_i32 : i32
    %29 = tpu.assume_multiple %28, 8 : i32
    %30 = arith.index_cast %29 : i32 to index
    %c0_29 = arith.constant 0 : index
    %31 = vector.load %arg15[%30, %c0_29] : memref<64x128xf32, #tpu.memory_space<vmem>>, vector<8x128xf32>
    %cst_30 = arith.constant dense<0.000000e+00> : vector<8x128xf32>
    %32 = tpu.matmul %21, %0, %cst_30 {dimension_numbers = #tpu.dot_dimension_numbers<[1], [0], [0], [1], [0, 0, 1, 1], [], []>} : vector<8x32xf32>, vector<32x128xf32>, vector<8x128xf32> -> vector<8x128xf32>
    %33 = arith.addf %31, %32 : vector<8x128xf32>
    %34 = arith.negf %33 : vector<8x128xf32>
    %35 = math.exp %34 : vector<8x128xf32>
    %cst_31 = arith.constant 1.000000e+00 : f32
    %36 = vector.broadcast %cst_31 : f32 to vector<8x128xf32>
    %37 = arith.addf %36, %35 : vector<8x128xf32>
    %38 = arith.divf %36, %37 : vector<8x128xf32>
    %39 = math.tanh %33 : vector<8x128xf32>
    %40 = vector.extract_strided_slice %38 {offsets = [0, 0], sizes = [8, 32], strides = [1, 1]} : vector<8x128xf32> to vector<8x32xf32>
    %41 = vector.extract_strided_slice %38 {offsets = [0, 32], sizes = [8, 32], strides = [1, 1]} : vector<8x128xf32> to vector<8x32xf32>
    %42 = vector.extract_strided_slice %39 {offsets = [0, 64], sizes = [8, 32], strides = [1, 1]} : vector<8x128xf32> to vector<8x32xf32>
    %43 = vector.extract_strided_slice %38 {offsets = [0, 96], sizes = [8, 32], strides = [1, 1]} : vector<8x128xf32> to vector<8x32xf32>
    %44 = arith.mulf %41, %23 : vector<8x32xf32>
    %45 = arith.mulf %40, %42 : vector<8x32xf32>
    %46 = arith.addf %44, %45 : vector<8x32xf32>
    %47 = math.tanh %46 : vector<8x32xf32>
    %48 = arith.mulf %43, %47 : vector<8x32xf32>
    %cst_32 = arith.constant dense<0.000000e+00> : vector<8x128xf32>
    %49 = tpu.matmul %48, %1, %cst_32 {dimension_numbers = #tpu.dot_dimension_numbers<[1], [0], [0], [1], [0, 0, 1, 1], [], []>} : vector<8x32xf32>, vector<32x128xf32>, vector<8x128xf32> -> vector<8x128xf32>
    %cst_33 = arith.constant dense<0.000000e+00> : vector<8x128xf32>
    %50 = tpu.matmul %25, %2, %cst_33 {dimension_numbers = #tpu.dot_dimension_numbers<[1], [0], [0], [1], [0, 0, 1, 1], [], []>} : vector<8x32xf32>, vector<32x128xf32>, vector<8x128xf32> -> vector<8x128xf32>
    %51 = arith.addf %49, %50 : vector<8x128xf32>
    %52 = arith.addf %51, %5 : vector<8x128xf32>
    %53 = arith.negf %52 : vector<8x128xf32>
    %54 = math.exp %53 : vector<8x128xf32>
    %cst_34 = arith.constant 1.000000e+00 : f32
    %55 = vector.broadcast %cst_34 : f32 to vector<8x128xf32>
    %56 = arith.addf %55, %54 : vector<8x128xf32>
    %57 = arith.divf %55, %56 : vector<8x128xf32>
    %58 = math.tanh %52 : vector<8x128xf32>
    %59 = vector.extract_strided_slice %57 {offsets = [0, 0], sizes = [8, 32], strides = [1, 1]} : vector<8x128xf32> to vector<8x32xf32>
    %60 = vector.extract_strided_slice %57 {offsets = [0, 32], sizes = [8, 32], strides = [1, 1]} : vector<8x128xf32> to vector<8x32xf32>
    %61 = vector.extract_strided_slice %58 {offsets = [0, 64], sizes = [8, 32], strides = [1, 1]} : vector<8x128xf32> to vector<8x32xf32>
    %62 = vector.extract_strided_slice %57 {offsets = [0, 96], sizes = [8, 32], strides = [1, 1]} : vector<8x128xf32> to vector<8x32xf32>
    %63 = arith.mulf %60, %27 : vector<8x32xf32>
    %64 = arith.mulf %59, %61 : vector<8x32xf32>
    %65 = arith.addf %63, %64 : vector<8x32xf32>
    %66 = math.tanh %65 : vector<8x32xf32>
    %67 = arith.mulf %62, %66 : vector<8x32xf32>
    %68 = arith.index_cast %29 : i32 to index
    %c0_35 = arith.constant 0 : index
    %69 = vector.load %arg16[%68, %c0_35] : memref<64x32xf32, #tpu.memory_space<vmem>>, vector<8x32xf32>
    tpu.vector_store %arg16[%68, %c0_35], %67 {strides = array<i32>} : memref<64x32xf32, #tpu.memory_space<vmem>>, vector<8x32xf32>,
    %c1_i32 = arith.constant 1 : i32
    %c8_i32_36 = arith.constant 8 : i32
    %70 = arith.muli %c1_i32, %c8_i32_36 : i32
    %71 = tpu.assume_multiple %70, 8 : i32
    %72 = arith.index_cast %71 : i32 to index
    %c0_37 = arith.constant 0 : index
    %73 = vector.load %arg15[%72, %c0_37] : memref<64x128xf32, #tpu.memory_space<vmem>>, vector<8x128xf32>
    %cst_38 = arith.constant dense<0.000000e+00> : vector<8x128xf32>
    %74 = tpu.matmul %48, %0, %cst_38 {dimension_numbers = #tpu.dot_dimension_numbers<[1], [0], [0], [1], [0, 0, 1, 1], [], []>} : vector<8x32xf32>, vector<32x128xf32>, vector<8x128xf32> -> vector<8x128xf32>
    %75 = arith.addf %73, %74 : vector<8x128xf32>
    %76 = arith.negf %75 : vector<8x128xf32>
    %77 = math.exp %76 : vector<8x128xf32>
    %cst_39 = arith.constant 1.000000e+00 : f32
    %78 = vector.broadcast %cst_39 : f32 to vector<8x128xf32>
    %79 = arith.addf %78, %77 : vector<8x128xf32>
    %80 = arith.divf %78, %79 : vector<8x128xf32>
    %81 = math.tanh %75 : vector<8x128xf32>
    %82 = vector.extract_strided_slice %80 {offsets = [0, 0], sizes = [8, 32], strides = [1, 1]} : vector<8x128xf32> to vector<8x32xf32>
    %83 = vector.extract_strided_slice %80 {offsets = [0, 32], sizes = [8, 32], strides = [1, 1]} : vector<8x128xf32> to vector<8x32xf32>
    %84 = vector.extract_strided_slice %81 {offsets = [0, 64], sizes = [8, 32], strides = [1, 1]} : vector<8x128xf32> to vector<8x32xf32>
    %85 = vector.extract_strided_slice %80 {offsets = [0, 96], sizes = [8, 32], strides = [1, 1]} : vector<8x128xf32> to vector<8x32xf32>
    %86 = arith.mulf %83, %46 : vector<8x32xf32>
    %87 = arith.mulf %82, %84 : vector<8x32xf32>
    %88 = arith.addf %86, %87 : vector<8x32xf32>
    %89 = math.tanh %88 : vector<8x32xf32>
    %90 = arith.mulf %85, %89 : vector<8x32xf32>
    %cst_40 = arith.constant dense<0.000000e+00> : vector<8x128xf32>
    %91 = tpu.matmul %90, %1, %cst_40 {dimension_numbers = #tpu.dot_dimension_numbers<[1], [0], [0], [1], [0, 0, 1, 1], [], []>} : vector<8x32xf32>, vector<32x128xf32>, vector<8x128xf32> -> vector<8x128xf32>
    %cst_41 = arith.constant dense<0.000000e+00> : vector<8x128xf32>
    %92 = tpu.matmul %67, %2, %cst_41 {dimension_numbers = #tpu.dot_dimension_numbers<[1], [0], [0], [1], [0, 0, 1, 1], [], []>} : vector<8x32xf32>, vector<32x128xf32>, vector<8x128xf32> -> vector<8x128xf32>
    %93 = arith.addf %91, %92 : vector<8x128xf32>
    %94 = arith.addf %93, %5 : vector<8x128xf32>
    %95 = arith.negf %94 : vector<8x128xf32>
    %96 = math.exp %95 : vector<8x128xf32>
    %cst_42 = arith.constant 1.000000e+00 : f32
    %97 = vector.broadcast %cst_42 : f32 to vector<8x128xf32>
    %98 = arith.addf %97, %96 : vector<8x128xf32>
    %99 = arith.divf %97, %98 : vector<8x128xf32>
    %100 = math.tanh %94 : vector<8x128xf32>
    %101 = vector.extract_strided_slice %99 {offsets = [0, 0], sizes = [8, 32], strides = [1, 1]} : vector<8x128xf32> to vector<8x32xf32>
    %102 = vector.extract_strided_slice %99 {offsets = [0, 32], sizes = [8, 32], strides = [1, 1]} : vector<8x128xf32> to vector<8x32xf32>
    %103 = vector.extract_strided_slice %100 {offsets = [0, 64], sizes = [8, 32], strides = [1, 1]} : vector<8x128xf32> to vector<8x32xf32>
    %104 = vector.extract_strided_slice %99 {offsets = [0, 96], sizes = [8, 32], strides = [1, 1]} : vector<8x128xf32> to vector<8x32xf32>
    %105 = arith.mulf %102, %65 : vector<8x32xf32>
    %106 = arith.mulf %101, %103 : vector<8x32xf32>
    %107 = arith.addf %105, %106 : vector<8x32xf32>
    %108 = math.tanh %107 : vector<8x32xf32>
    %109 = arith.mulf %104, %108 : vector<8x32xf32>
    %110 = arith.index_cast %71 : i32 to index
    %c0_43 = arith.constant 0 : index
    %111 = vector.load %arg16[%110, %c0_43] : memref<64x32xf32, #tpu.memory_space<vmem>>, vector<8x32xf32>
    tpu.vector_store %arg16[%110, %c0_43], %109 {strides = array<i32>} : memref<64x32xf32, #tpu.memory_space<vmem>>, vector<8x32xf32>,
    %c2_i32 = arith.constant 2 : i32
    %c8_i32_44 = arith.constant 8 : i32
    %112 = arith.muli %c2_i32, %c8_i32_44 : i32
    %113 = tpu.assume_multiple %112, 8 : i32
    %114 = arith.index_cast %113 : i32 to index
    %c0_45 = arith.constant 0 : index
    %115 = vector.load %arg15[%114, %c0_45] : memref<64x128xf32, #tpu.memory_space<vmem>>, vector<8x128xf32>
    %cst_46 = arith.constant dense<0.000000e+00> : vector<8x128xf32>
    %116 = tpu.matmul %90, %0, %cst_46 {dimension_numbers = #tpu.dot_dimension_numbers<[1], [0], [0], [1], [0, 0, 1, 1], [], []>} : vector<8x32xf32>, vector<32x128xf32>, vector<8x128xf32> -> vector<8x128xf32>
    %117 = arith.addf %115, %116 : vector<8x128xf32>
    %118 = arith.negf %117 : vector<8x128xf32>
    %119 = math.exp %118 : vector<8x128xf32>
    %cst_47 = arith.constant 1.000000e+00 : f32
    %120 = vector.broadcast %cst_47 : f32 to vector<8x128xf32>
    %121 = arith.addf %120, %119 : vector<8x128xf32>
    %122 = arith.divf %120, %121 : vector<8x128xf32>
    %123 = math.tanh %117 : vector<8x128xf32>
    %124 = vector.extract_strided_slice %122 {offsets = [0, 0], sizes = [8, 32], strides = [1, 1]} : vector<8x128xf32> to vector<8x32xf32>
    %125 = vector.extract_strided_slice %122 {offsets = [0, 32], sizes = [8, 32], strides = [1, 1]} : vector<8x128xf32> to vector<8x32xf32>
    %126 = vector.extract_strided_slice %123 {offsets = [0, 64], sizes = [8, 32], strides = [1, 1]} : vector<8x128xf32> to vector<8x32xf32>
    %127 = vector.extract_strided_slice %122 {offsets = [0, 96], sizes = [8, 32], strides = [1, 1]} : vector<8x128xf32> to vector<8x32xf32>
    %128 = arith.mulf %125, %88 : vector<8x32xf32>
    %129 = arith.mulf %124, %126 : vector<8x32xf32>
    %130 = arith.addf %128, %129 : vector<8x32xf32>
    %131 = math.tanh %130 : vector<8x32xf32>
    %132 = arith.mulf %127, %131 : vector<8x32xf32>
    %cst_48 = arith.constant dense<0.000000e+00> : vector<8x128xf32>
    %133 = tpu.matmul %132, %1, %cst_48 {dimension_numbers = #tpu.dot_dimension_numbers<[1], [0], [0], [1], [0, 0, 1, 1], [], []>} : vector<8x32xf32>, vector<32x128xf32>, vector<8x128xf32> -> vector<8x128xf32>
    %cst_49 = arith.constant dense<0.000000e+00> : vector<8x128xf32>
    %134 = tpu.matmul %109, %2, %cst_49 {dimension_numbers = #tpu.dot_dimension_numbers<[1], [0], [0], [1], [0, 0, 1, 1], [], []>} : vector<8x32xf32>, vector<32x128xf32>, vector<8x128xf32> -> vector<8x128xf32>
    %135 = arith.addf %133, %134 : vector<8x128xf32>
    %136 = arith.addf %135, %5 : vector<8x128xf32>
    %137 = arith.negf %136 : vector<8x128xf32>
    %138 = math.exp %137 : vector<8x128xf32>
    %cst_50 = arith.constant 1.000000e+00 : f32
    %139 = vector.broadcast %cst_50 : f32 to vector<8x128xf32>
    %140 = arith.addf %139, %138 : vector<8x128xf32>
    %141 = arith.divf %139, %140 : vector<8x128xf32>
    %142 = math.tanh %136 : vector<8x128xf32>
    %143 = vector.extract_strided_slice %141 {offsets = [0, 0], sizes = [8, 32], strides = [1, 1]} : vector<8x128xf32> to vector<8x32xf32>
    %144 = vector.extract_strided_slice %141 {offsets = [0, 32], sizes = [8, 32], strides = [1, 1]} : vector<8x128xf32> to vector<8x32xf32>
    %145 = vector.extract_strided_slice %142 {offsets = [0, 64], sizes = [8, 32], strides = [1, 1]} : vector<8x128xf32> to vector<8x32xf32>
    %146 = vector.extract_strided_slice %141 {offsets = [0, 96], sizes = [8, 32], strides = [1, 1]} : vector<8x128xf32> to vector<8x32xf32>
    %147 = arith.mulf %144, %107 : vector<8x32xf32>
    %148 = arith.mulf %143, %145 : vector<8x32xf32>
    %149 = arith.addf %147, %148 : vector<8x32xf32>
    %150 = math.tanh %149 : vector<8x32xf32>
    %151 = arith.mulf %146, %150 : vector<8x32xf32>
    %152 = arith.index_cast %113 : i32 to index
    %c0_51 = arith.constant 0 : index
    %153 = vector.load %arg16[%152, %c0_51] : memref<64x32xf32, #tpu.memory_space<vmem>>, vector<8x32xf32>
    tpu.vector_store %arg16[%152, %c0_51], %151 {strides = array<i32>} : memref<64x32xf32, #tpu.memory_space<vmem>>, vector<8x32xf32>,
    %c3_i32 = arith.constant 3 : i32
    %c8_i32_52 = arith.constant 8 : i32
    %154 = arith.muli %c3_i32, %c8_i32_52 : i32
    %155 = tpu.assume_multiple %154, 8 : i32
    %156 = arith.index_cast %155 : i32 to index
    %c0_53 = arith.constant 0 : index
    %157 = vector.load %arg15[%156, %c0_53] : memref<64x128xf32, #tpu.memory_space<vmem>>, vector<8x128xf32>
    %cst_54 = arith.constant dense<0.000000e+00> : vector<8x128xf32>
    %158 = tpu.matmul %132, %0, %cst_54 {dimension_numbers = #tpu.dot_dimension_numbers<[1], [0], [0], [1], [0, 0, 1, 1], [], []>} : vector<8x32xf32>, vector<32x128xf32>, vector<8x128xf32> -> vector<8x128xf32>
    %159 = arith.addf %157, %158 : vector<8x128xf32>
    %160 = arith.negf %159 : vector<8x128xf32>
    %161 = math.exp %160 : vector<8x128xf32>
    %cst_55 = arith.constant 1.000000e+00 : f32
    %162 = vector.broadcast %cst_55 : f32 to vector<8x128xf32>
    %163 = arith.addf %162, %161 : vector<8x128xf32>
    %164 = arith.divf %162, %163 : vector<8x128xf32>
    %165 = math.tanh %159 : vector<8x128xf32>
    %166 = vector.extract_strided_slice %164 {offsets = [0, 0], sizes = [8, 32], strides = [1, 1]} : vector<8x128xf32> to vector<8x32xf32>
    %167 = vector.extract_strided_slice %164 {offsets = [0, 32], sizes = [8, 32], strides = [1, 1]} : vector<8x128xf32> to vector<8x32xf32>
    %168 = vector.extract_strided_slice %165 {offsets = [0, 64], sizes = [8, 32], strides = [1, 1]} : vector<8x128xf32> to vector<8x32xf32>
    %169 = vector.extract_strided_slice %164 {offsets = [0, 96], sizes = [8, 32], strides = [1, 1]} : vector<8x128xf32> to vector<8x32xf32>
    %170 = arith.mulf %167, %130 : vector<8x32xf32>
    %171 = arith.mulf %166, %168 : vector<8x32xf32>
    %172 = arith.addf %170, %171 : vector<8x32xf32>
    %173 = math.tanh %172 : vector<8x32xf32>
    %174 = arith.mulf %169, %173 : vector<8x32xf32>
    %cst_56 = arith.constant dense<0.000000e+00> : vector<8x128xf32>
    %175 = tpu.matmul %174, %1, %cst_56 {dimension_numbers = #tpu.dot_dimension_numbers<[1], [0], [0], [1], [0, 0, 1, 1], [], []>} : vector<8x32xf32>, vector<32x128xf32>, vector<8x128xf32> -> vector<8x128xf32>
    %cst_57 = arith.constant dense<0.000000e+00> : vector<8x128xf32>
    %176 = tpu.matmul %151, %2, %cst_57 {dimension_numbers = #tpu.dot_dimension_numbers<[1], [0], [0], [1], [0, 0, 1, 1], [], []>} : vector<8x32xf32>, vector<32x128xf32>, vector<8x128xf32> -> vector<8x128xf32>
    %177 = arith.addf %175, %176 : vector<8x128xf32>
    %178 = arith.addf %177, %5 : vector<8x128xf32>
    %179 = arith.negf %178 : vector<8x128xf32>
    %180 = math.exp %179 : vector<8x128xf32>
    %cst_58 = arith.constant 1.000000e+00 : f32
    %181 = vector.broadcast %cst_58 : f32 to vector<8x128xf32>
    %182 = arith.addf %181, %180 : vector<8x128xf32>
    %183 = arith.divf %181, %182 : vector<8x128xf32>
    %184 = math.tanh %178 : vector<8x128xf32>
    %185 = vector.extract_strided_slice %183 {offsets = [0, 0], sizes = [8, 32], strides = [1, 1]} : vector<8x128xf32> to vector<8x32xf32>
    %186 = vector.extract_strided_slice %183 {offsets = [0, 32], sizes = [8, 32], strides = [1, 1]} : vector<8x128xf32> to vector<8x32xf32>
    %187 = vector.extract_strided_slice %184 {offsets = [0, 64], sizes = [8, 32], strides = [1, 1]} : vector<8x128xf32> to vector<8x32xf32>
    %188 = vector.extract_strided_slice %183 {offsets = [0, 96], sizes = [8, 32], strides = [1, 1]} : vector<8x128xf32> to vector<8x32xf32>
    %189 = arith.mulf %186, %149 : vector<8x32xf32>
    %190 = arith.mulf %185, %187 : vector<8x32xf32>
    %191 = arith.addf %189, %190 : vector<8x32xf32>
    %192 = math.tanh %191 : vector<8x32xf32>
    %193 = arith.mulf %188, %192 : vector<8x32xf32>
    %194 = arith.index_cast %155 : i32 to index
    %c0_59 = arith.constant 0 : index
    %195 = vector.load %arg16[%194, %c0_59] : memref<64x32xf32, #tpu.memory_space<vmem>>, vector<8x32xf32>
    tpu.vector_store %arg16[%194, %c0_59], %193 {strides = array<i32>} : memref<64x32xf32, #tpu.memory_space<vmem>>, vector<8x32xf32>,
    %c4_i32 = arith.constant 4 : i32
    %c8_i32_60 = arith.constant 8 : i32
    %196 = arith.muli %c4_i32, %c8_i32_60 : i32
    %197 = tpu.assume_multiple %196, 8 : i32
    %198 = arith.index_cast %197 : i32 to index
    %c0_61 = arith.constant 0 : index
    %199 = vector.load %arg15[%198, %c0_61] : memref<64x128xf32, #tpu.memory_space<vmem>>, vector<8x128xf32>
    %cst_62 = arith.constant dense<0.000000e+00> : vector<8x128xf32>
    %200 = tpu.matmul %174, %0, %cst_62 {dimension_numbers = #tpu.dot_dimension_numbers<[1], [0], [0], [1], [0, 0, 1, 1], [], []>} : vector<8x32xf32>, vector<32x128xf32>, vector<8x128xf32> -> vector<8x128xf32>
    %201 = arith.addf %199, %200 : vector<8x128xf32>
    %202 = arith.negf %201 : vector<8x128xf32>
    %203 = math.exp %202 : vector<8x128xf32>
    %cst_63 = arith.constant 1.000000e+00 : f32
    %204 = vector.broadcast %cst_63 : f32 to vector<8x128xf32>
    %205 = arith.addf %204, %203 : vector<8x128xf32>
    %206 = arith.divf %204, %205 : vector<8x128xf32>
    %207 = math.tanh %201 : vector<8x128xf32>
    %208 = vector.extract_strided_slice %206 {offsets = [0, 0], sizes = [8, 32], strides = [1, 1]} : vector<8x128xf32> to vector<8x32xf32>
    %209 = vector.extract_strided_slice %206 {offsets = [0, 32], sizes = [8, 32], strides = [1, 1]} : vector<8x128xf32> to vector<8x32xf32>
    %210 = vector.extract_strided_slice %207 {offsets = [0, 64], sizes = [8, 32], strides = [1, 1]} : vector<8x128xf32> to vector<8x32xf32>
    %211 = vector.extract_strided_slice %206 {offsets = [0, 96], sizes = [8, 32], strides = [1, 1]} : vector<8x128xf32> to vector<8x32xf32>
    %212 = arith.mulf %209, %172 : vector<8x32xf32>
    %213 = arith.mulf %208, %210 : vector<8x32xf32>
    %214 = arith.addf %212, %213 : vector<8x32xf32>
    %215 = math.tanh %214 : vector<8x32xf32>
    %216 = arith.mulf %211, %215 : vector<8x32xf32>
    %cst_64 = arith.constant dense<0.000000e+00> : vector<8x128xf32>
    %217 = tpu.matmul %216, %1, %cst_64 {dimension_numbers = #tpu.dot_dimension_numbers<[1], [0], [0], [1], [0, 0, 1, 1], [], []>} : vector<8x32xf32>, vector<32x128xf32>, vector<8x128xf32> -> vector<8x128xf32>
    %cst_65 = arith.constant dense<0.000000e+00> : vector<8x128xf32>
    %218 = tpu.matmul %193, %2, %cst_65 {dimension_numbers = #tpu.dot_dimension_numbers<[1], [0], [0], [1], [0, 0, 1, 1], [], []>} : vector<8x32xf32>, vector<32x128xf32>, vector<8x128xf32> -> vector<8x128xf32>
    %219 = arith.addf %217, %218 : vector<8x128xf32>
    %220 = arith.addf %219, %5 : vector<8x128xf32>
    %221 = arith.negf %220 : vector<8x128xf32>
    %222 = math.exp %221 : vector<8x128xf32>
    %cst_66 = arith.constant 1.000000e+00 : f32
    %223 = vector.broadcast %cst_66 : f32 to vector<8x128xf32>
    %224 = arith.addf %223, %222 : vector<8x128xf32>
    %225 = arith.divf %223, %224 : vector<8x128xf32>
    %226 = math.tanh %220 : vector<8x128xf32>
    %227 = vector.extract_strided_slice %225 {offsets = [0, 0], sizes = [8, 32], strides = [1, 1]} : vector<8x128xf32> to vector<8x32xf32>
    %228 = vector.extract_strided_slice %225 {offsets = [0, 32], sizes = [8, 32], strides = [1, 1]} : vector<8x128xf32> to vector<8x32xf32>
    %229 = vector.extract_strided_slice %226 {offsets = [0, 64], sizes = [8, 32], strides = [1, 1]} : vector<8x128xf32> to vector<8x32xf32>
    %230 = vector.extract_strided_slice %225 {offsets = [0, 96], sizes = [8, 32], strides = [1, 1]} : vector<8x128xf32> to vector<8x32xf32>
    %231 = arith.mulf %228, %191 : vector<8x32xf32>
    %232 = arith.mulf %227, %229 : vector<8x32xf32>
    %233 = arith.addf %231, %232 : vector<8x32xf32>
    %234 = math.tanh %233 : vector<8x32xf32>
    %235 = arith.mulf %230, %234 : vector<8x32xf32>
    %236 = arith.index_cast %197 : i32 to index
    %c0_67 = arith.constant 0 : index
    %237 = vector.load %arg16[%236, %c0_67] : memref<64x32xf32, #tpu.memory_space<vmem>>, vector<8x32xf32>
    tpu.vector_store %arg16[%236, %c0_67], %235 {strides = array<i32>} : memref<64x32xf32, #tpu.memory_space<vmem>>, vector<8x32xf32>,
    %c5_i32 = arith.constant 5 : i32
    %c8_i32_68 = arith.constant 8 : i32
    %238 = arith.muli %c5_i32, %c8_i32_68 : i32
    %239 = tpu.assume_multiple %238, 8 : i32
    %240 = arith.index_cast %239 : i32 to index
    %c0_69 = arith.constant 0 : index
    %241 = vector.load %arg15[%240, %c0_69] : memref<64x128xf32, #tpu.memory_space<vmem>>, vector<8x128xf32>
    %cst_70 = arith.constant dense<0.000000e+00> : vector<8x128xf32>
    %242 = tpu.matmul %216, %0, %cst_70 {dimension_numbers = #tpu.dot_dimension_numbers<[1], [0], [0], [1], [0, 0, 1, 1], [], []>} : vector<8x32xf32>, vector<32x128xf32>, vector<8x128xf32> -> vector<8x128xf32>
    %243 = arith.addf %241, %242 : vector<8x128xf32>
    %244 = arith.negf %243 : vector<8x128xf32>
    %245 = math.exp %244 : vector<8x128xf32>
    %cst_71 = arith.constant 1.000000e+00 : f32
    %246 = vector.broadcast %cst_71 : f32 to vector<8x128xf32>
    %247 = arith.addf %246, %245 : vector<8x128xf32>
    %248 = arith.divf %246, %247 : vector<8x128xf32>
    %249 = math.tanh %243 : vector<8x128xf32>
    %250 = vector.extract_strided_slice %248 {offsets = [0, 0], sizes = [8, 32], strides = [1, 1]} : vector<8x128xf32> to vector<8x32xf32>
    %251 = vector.extract_strided_slice %248 {offsets = [0, 32], sizes = [8, 32], strides = [1, 1]} : vector<8x128xf32> to vector<8x32xf32>
    %252 = vector.extract_strided_slice %249 {offsets = [0, 64], sizes = [8, 32], strides = [1, 1]} : vector<8x128xf32> to vector<8x32xf32>
    %253 = vector.extract_strided_slice %248 {offsets = [0, 96], sizes = [8, 32], strides = [1, 1]} : vector<8x128xf32> to vector<8x32xf32>
    %254 = arith.mulf %251, %214 : vector<8x32xf32>
    %255 = arith.mulf %250, %252 : vector<8x32xf32>
    %256 = arith.addf %254, %255 : vector<8x32xf32>
    %257 = math.tanh %256 : vector<8x32xf32>
    %258 = arith.mulf %253, %257 : vector<8x32xf32>
    %cst_72 = arith.constant dense<0.000000e+00> : vector<8x128xf32>
    %259 = tpu.matmul %258, %1, %cst_72 {dimension_numbers = #tpu.dot_dimension_numbers<[1], [0], [0], [1], [0, 0, 1, 1], [], []>} : vector<8x32xf32>, vector<32x128xf32>, vector<8x128xf32> -> vector<8x128xf32>
    %cst_73 = arith.constant dense<0.000000e+00> : vector<8x128xf32>
    %260 = tpu.matmul %235, %2, %cst_73 {dimension_numbers = #tpu.dot_dimension_numbers<[1], [0], [0], [1], [0, 0, 1, 1], [], []>} : vector<8x32xf32>, vector<32x128xf32>, vector<8x128xf32> -> vector<8x128xf32>
    %261 = arith.addf %259, %260 : vector<8x128xf32>
    %262 = arith.addf %261, %5 : vector<8x128xf32>
    %263 = arith.negf %262 : vector<8x128xf32>
    %264 = math.exp %263 : vector<8x128xf32>
    %cst_74 = arith.constant 1.000000e+00 : f32
    %265 = vector.broadcast %cst_74 : f32 to vector<8x128xf32>
    %266 = arith.addf %265, %264 : vector<8x128xf32>
    %267 = arith.divf %265, %266 : vector<8x128xf32>
    %268 = math.tanh %262 : vector<8x128xf32>
    %269 = vector.extract_strided_slice %267 {offsets = [0, 0], sizes = [8, 32], strides = [1, 1]} : vector<8x128xf32> to vector<8x32xf32>
    %270 = vector.extract_strided_slice %267 {offsets = [0, 32], sizes = [8, 32], strides = [1, 1]} : vector<8x128xf32> to vector<8x32xf32>
    %271 = vector.extract_strided_slice %268 {offsets = [0, 64], sizes = [8, 32], strides = [1, 1]} : vector<8x128xf32> to vector<8x32xf32>
    %272 = vector.extract_strided_slice %267 {offsets = [0, 96], sizes = [8, 32], strides = [1, 1]} : vector<8x128xf32> to vector<8x32xf32>
    %273 = arith.mulf %270, %233 : vector<8x32xf32>
    %274 = arith.mulf %269, %271 : vector<8x32xf32>
    %275 = arith.addf %273, %274 : vector<8x32xf32>
    %276 = math.tanh %275 : vector<8x32xf32>
    %277 = arith.mulf %272, %276 : vector<8x32xf32>
    %278 = arith.index_cast %239 : i32 to index
    %c0_75 = arith.constant 0 : index
    %279 = vector.load %arg16[%278, %c0_75] : memref<64x32xf32, #tpu.memory_space<vmem>>, vector<8x32xf32>
    tpu.vector_store %arg16[%278, %c0_75], %277 {strides = array<i32>} : memref<64x32xf32, #tpu.memory_space<vmem>>, vector<8x32xf32>,
    %c6_i32 = arith.constant 6 : i32
    %c8_i32_76 = arith.constant 8 : i32
    %280 = arith.muli %c6_i32, %c8_i32_76 : i32
    %281 = tpu.assume_multiple %280, 8 : i32
    %282 = arith.index_cast %281 : i32 to index
    %c0_77 = arith.constant 0 : index
    %283 = vector.load %arg15[%282, %c0_77] : memref<64x128xf32, #tpu.memory_space<vmem>>, vector<8x128xf32>
    %cst_78 = arith.constant dense<0.000000e+00> : vector<8x128xf32>
    %284 = tpu.matmul %258, %0, %cst_78 {dimension_numbers = #tpu.dot_dimension_numbers<[1], [0], [0], [1], [0, 0, 1, 1], [], []>} : vector<8x32xf32>, vector<32x128xf32>, vector<8x128xf32> -> vector<8x128xf32>
    %285 = arith.addf %283, %284 : vector<8x128xf32>
    %286 = arith.negf %285 : vector<8x128xf32>
    %287 = math.exp %286 : vector<8x128xf32>
    %cst_79 = arith.constant 1.000000e+00 : f32
    %288 = vector.broadcast %cst_79 : f32 to vector<8x128xf32>
    %289 = arith.addf %288, %287 : vector<8x128xf32>
    %290 = arith.divf %288, %289 : vector<8x128xf32>
    %291 = math.tanh %285 : vector<8x128xf32>
    %292 = vector.extract_strided_slice %290 {offsets = [0, 0], sizes = [8, 32], strides = [1, 1]} : vector<8x128xf32> to vector<8x32xf32>
    %293 = vector.extract_strided_slice %290 {offsets = [0, 32], sizes = [8, 32], strides = [1, 1]} : vector<8x128xf32> to vector<8x32xf32>
    %294 = vector.extract_strided_slice %291 {offsets = [0, 64], sizes = [8, 32], strides = [1, 1]} : vector<8x128xf32> to vector<8x32xf32>
    %295 = vector.extract_strided_slice %290 {offsets = [0, 96], sizes = [8, 32], strides = [1, 1]} : vector<8x128xf32> to vector<8x32xf32>
    %296 = arith.mulf %293, %256 : vector<8x32xf32>
    %297 = arith.mulf %292, %294 : vector<8x32xf32>
    %298 = arith.addf %296, %297 : vector<8x32xf32>
    %299 = math.tanh %298 : vector<8x32xf32>
    %300 = arith.mulf %295, %299 : vector<8x32xf32>
    %cst_80 = arith.constant dense<0.000000e+00> : vector<8x128xf32>
    %301 = tpu.matmul %300, %1, %cst_80 {dimension_numbers = #tpu.dot_dimension_numbers<[1], [0], [0], [1], [0, 0, 1, 1], [], []>} : vector<8x32xf32>, vector<32x128xf32>, vector<8x128xf32> -> vector<8x128xf32>
    %cst_81 = arith.constant dense<0.000000e+00> : vector<8x128xf32>
    %302 = tpu.matmul %277, %2, %cst_81 {dimension_numbers = #tpu.dot_dimension_numbers<[1], [0], [0], [1], [0, 0, 1, 1], [], []>} : vector<8x32xf32>, vector<32x128xf32>, vector<8x128xf32> -> vector<8x128xf32>
    %303 = arith.addf %301, %302 : vector<8x128xf32>
    %304 = arith.addf %303, %5 : vector<8x128xf32>
    %305 = arith.negf %304 : vector<8x128xf32>
    %306 = math.exp %305 : vector<8x128xf32>
    %cst_82 = arith.constant 1.000000e+00 : f32
    %307 = vector.broadcast %cst_82 : f32 to vector<8x128xf32>
    %308 = arith.addf %307, %306 : vector<8x128xf32>
    %309 = arith.divf %307, %308 : vector<8x128xf32>
    %310 = math.tanh %304 : vector<8x128xf32>
    %311 = vector.extract_strided_slice %309 {offsets = [0, 0], sizes = [8, 32], strides = [1, 1]} : vector<8x128xf32> to vector<8x32xf32>
    %312 = vector.extract_strided_slice %309 {offsets = [0, 32], sizes = [8, 32], strides = [1, 1]} : vector<8x128xf32> to vector<8x32xf32>
    %313 = vector.extract_strided_slice %310 {offsets = [0, 64], sizes = [8, 32], strides = [1, 1]} : vector<8x128xf32> to vector<8x32xf32>
    %314 = vector.extract_strided_slice %309 {offsets = [0, 96], sizes = [8, 32], strides = [1, 1]} : vector<8x128xf32> to vector<8x32xf32>
    %315 = arith.mulf %312, %275 : vector<8x32xf32>
    %316 = arith.mulf %311, %313 : vector<8x32xf32>
    %317 = arith.addf %315, %316 : vector<8x32xf32>
    %318 = math.tanh %317 : vector<8x32xf32>
    %319 = arith.mulf %314, %318 : vector<8x32xf32>
    %320 = arith.index_cast %281 : i32 to index
    %c0_83 = arith.constant 0 : index
    %321 = vector.load %arg16[%320, %c0_83] : memref<64x32xf32, #tpu.memory_space<vmem>>, vector<8x32xf32>
    tpu.vector_store %arg16[%320, %c0_83], %319 {strides = array<i32>} : memref<64x32xf32, #tpu.memory_space<vmem>>, vector<8x32xf32>,
    %c7_i32 = arith.constant 7 : i32
    %c8_i32_84 = arith.constant 8 : i32
    %322 = arith.muli %c7_i32, %c8_i32_84 : i32
    %323 = tpu.assume_multiple %322, 8 : i32
    %324 = arith.index_cast %323 : i32 to index
    %c0_85 = arith.constant 0 : index
    %325 = vector.load %arg15[%324, %c0_85] : memref<64x128xf32, #tpu.memory_space<vmem>>, vector<8x128xf32>
    %cst_86 = arith.constant dense<0.000000e+00> : vector<8x128xf32>
    %326 = tpu.matmul %300, %0, %cst_86 {dimension_numbers = #tpu.dot_dimension_numbers<[1], [0], [0], [1], [0, 0, 1, 1], [], []>} : vector<8x32xf32>, vector<32x128xf32>, vector<8x128xf32> -> vector<8x128xf32>
    %327 = arith.addf %325, %326 : vector<8x128xf32>
    %328 = arith.negf %327 : vector<8x128xf32>
    %329 = math.exp %328 : vector<8x128xf32>
    %cst_87 = arith.constant 1.000000e+00 : f32
    %330 = vector.broadcast %cst_87 : f32 to vector<8x128xf32>
    %331 = arith.addf %330, %329 : vector<8x128xf32>
    %332 = arith.divf %330, %331 : vector<8x128xf32>
    %333 = math.tanh %327 : vector<8x128xf32>
    %334 = vector.extract_strided_slice %332 {offsets = [0, 0], sizes = [8, 32], strides = [1, 1]} : vector<8x128xf32> to vector<8x32xf32>
    %335 = vector.extract_strided_slice %332 {offsets = [0, 32], sizes = [8, 32], strides = [1, 1]} : vector<8x128xf32> to vector<8x32xf32>
    %336 = vector.extract_strided_slice %333 {offsets = [0, 64], sizes = [8, 32], strides = [1, 1]} : vector<8x128xf32> to vector<8x32xf32>
    %337 = vector.extract_strided_slice %332 {offsets = [0, 96], sizes = [8, 32], strides = [1, 1]} : vector<8x128xf32> to vector<8x32xf32>
    %338 = arith.mulf %335, %298 : vector<8x32xf32>
    %339 = arith.mulf %334, %336 : vector<8x32xf32>
    %340 = arith.addf %338, %339 : vector<8x32xf32>
    %341 = math.tanh %340 : vector<8x32xf32>
    %342 = arith.mulf %337, %341 : vector<8x32xf32>
    %cst_88 = arith.constant dense<0.000000e+00> : vector<8x128xf32>
    %343 = tpu.matmul %342, %1, %cst_88 {dimension_numbers = #tpu.dot_dimension_numbers<[1], [0], [0], [1], [0, 0, 1, 1], [], []>} : vector<8x32xf32>, vector<32x128xf32>, vector<8x128xf32> -> vector<8x128xf32>
    %cst_89 = arith.constant dense<0.000000e+00> : vector<8x128xf32>
    %344 = tpu.matmul %319, %2, %cst_89 {dimension_numbers = #tpu.dot_dimension_numbers<[1], [0], [0], [1], [0, 0, 1, 1], [], []>} : vector<8x32xf32>, vector<32x128xf32>, vector<8x128xf32> -> vector<8x128xf32>
    %345 = arith.addf %343, %344 : vector<8x128xf32>
    %346 = arith.addf %345, %5 : vector<8x128xf32>
    %347 = arith.negf %346 : vector<8x128xf32>
    %348 = math.exp %347 : vector<8x128xf32>
    %cst_90 = arith.constant 1.000000e+00 : f32
    %349 = vector.broadcast %cst_90 : f32 to vector<8x128xf32>
    %350 = arith.addf %349, %348 : vector<8x128xf32>
    %351 = arith.divf %349, %350 : vector<8x128xf32>
    %352 = math.tanh %346 : vector<8x128xf32>
    %353 = vector.extract_strided_slice %351 {offsets = [0, 0], sizes = [8, 32], strides = [1, 1]} : vector<8x128xf32> to vector<8x32xf32>
    %354 = vector.extract_strided_slice %351 {offsets = [0, 32], sizes = [8, 32], strides = [1, 1]} : vector<8x128xf32> to vector<8x32xf32>
    %355 = vector.extract_strided_slice %352 {offsets = [0, 64], sizes = [8, 32], strides = [1, 1]} : vector<8x128xf32> to vector<8x32xf32>
    %356 = vector.extract_strided_slice %351 {offsets = [0, 96], sizes = [8, 32], strides = [1, 1]} : vector<8x128xf32> to vector<8x32xf32>
    %357 = arith.mulf %354, %317 : vector<8x32xf32>
    %358 = arith.mulf %353, %355 : vector<8x32xf32>
    %359 = arith.addf %357, %358 : vector<8x32xf32>
    %360 = math.tanh %359 : vector<8x32xf32>
    %361 = arith.mulf %356, %360 : vector<8x32xf32>
    %362 = arith.index_cast %323 : i32 to index
    %c0_91 = arith.constant 0 : index
    %363 = vector.load %arg16[%362, %c0_91] : memref<64x32xf32, #tpu.memory_space<vmem>>, vector<8x32xf32>
    tpu.vector_store %arg16[%362, %c0_91], %361 {strides = array<i32>} : memref<64x32xf32, #tpu.memory_space<vmem>>, vector<8x32xf32>,
    %c8_i32_92 = arith.constant 8 : i32
    %c0_93 = arith.constant 0 : index
    %c0_94 = arith.constant 0 : index
    %c0_95 = arith.constant 0 : index
    %364 = vector.load %arg13[%c0_93, %c0_94, %c0_95] : memref<2x8x32xf32, #tpu.memory_space<vmem>>, vector<1x8x32xf32>
    %365 = vector.shape_cast %364 : vector<1x8x32xf32> to vector<8x32xf32>
    %366 = vector.shape_cast %342 : vector<8x32xf32> to vector<1x8x32xf32>
    tpu.vector_store %arg13[%c0_93, %c0_94, %c0_95], %366 {strides = array<i32>} : memref<2x8x32xf32, #tpu.memory_space<vmem>>, vector<1x8x32xf32>,
    %c1_96 = arith.constant 1 : index
    %c0_97 = arith.constant 0 : index
    %c0_98 = arith.constant 0 : index
    %367 = vector.load %arg13[%c1_96, %c0_97, %c0_98] : memref<2x8x32xf32, #tpu.memory_space<vmem>>, vector<1x8x32xf32>
    %368 = vector.shape_cast %367 : vector<1x8x32xf32> to vector<8x32xf32>
    %369 = vector.shape_cast %361 : vector<8x32xf32> to vector<1x8x32xf32>
    tpu.vector_store %arg13[%c1_96, %c0_97, %c0_98], %369 {strides = array<i32>} : memref<2x8x32xf32, #tpu.memory_space<vmem>>, vector<1x8x32xf32>,
    %c0_99 = arith.constant 0 : index
    %c0_100 = arith.constant 0 : index
    %c0_101 = arith.constant 0 : index
    %370 = vector.load %arg14[%c0_99, %c0_100, %c0_101] : memref<2x8x32xf32, #tpu.memory_space<vmem>>, vector<1x8x32xf32>
    %371 = vector.shape_cast %370 : vector<1x8x32xf32> to vector<8x32xf32>
    %372 = vector.shape_cast %340 : vector<8x32xf32> to vector<1x8x32xf32>
    tpu.vector_store %arg14[%c0_99, %c0_100, %c0_101], %372 {strides = array<i32>} : memref<2x8x32xf32, #tpu.memory_space<vmem>>, vector<1x8x32xf32>,
    %c1_102 = arith.constant 1 : index
    %c0_103 = arith.constant 0 : index
    %c0_104 = arith.constant 0 : index
    %373 = vector.load %arg14[%c1_102, %c0_103, %c0_104] : memref<2x8x32xf32, #tpu.memory_space<vmem>>, vector<1x8x32xf32>
    %374 = vector.shape_cast %373 : vector<1x8x32xf32> to vector<8x32xf32>
    %375 = vector.shape_cast %359 : vector<8x32xf32> to vector<1x8x32xf32>
    tpu.vector_store %arg14[%c1_102, %c0_103, %c0_104], %375 {strides = array<i32>} : memref<2x8x32xf32, #tpu.memory_space<vmem>>, vector<1x8x32xf32>,
    %c0_105 = arith.constant 0 : index
    %c0_106 = arith.constant 0 : index
    %376 = vector.load %arg16[%c0_105, %c0_106] : memref<64x32xf32, #tpu.memory_space<vmem>>, vector<64x32xf32>
    %c0_107 = arith.constant 0 : index
    %c0_108 = arith.constant 0 : index
    %377 = vector.load %arg10[%c0_107, %c0_108] : memref<32x128xf32, #tpu.memory_space<vmem>>, vector<32x128xf32>
    %cst_109 = arith.constant dense<0.000000e+00> : vector<64x128xf32>
    %378 = tpu.matmul %376, %377, %cst_109 {dimension_numbers = #tpu.dot_dimension_numbers<[1], [0], [0], [1], [0, 0, 1, 1], [], []>} : vector<64x32xf32>, vector<32x128xf32>, vector<64x128xf32> -> vector<64x128xf32>
    %c0_110 = arith.constant 0 : index
    %c0_111 = arith.constant 0 : index
    %379 = vector.load %arg11[%c0_110, %c0_111] : memref<1x128xf32, #tpu.memory_space<vmem>>, vector<1x128xf32>
    %380 = vector.broadcast %379 : vector<1x128xf32> to vector<64x128xf32>
    %381 = arith.addf %378, %380 : vector<64x128xf32>
    %cst_112 = arith.constant dense<0xFF800000> : vector<64xf32>
    %382 = vector.multi_reduction <maximumf>, %381, %cst_112 [1] : vector<64x128xf32> to vector<64xf32>
    %383 = vector.shape_cast %382 : vector<64xf32> to vector<64x1xf32>
    %384 = vector.broadcast %383 : vector<64x1xf32> to vector<64x128xf32>
    %385 = arith.subf %381, %384 : vector<64x128xf32>
    %386 = math.exp %385 : vector<64x128xf32>
    %cst_113 = arith.constant dense<0.000000e+00> : vector<64xf32>
    %387 = vector.multi_reduction <add>, %386, %cst_113 [1] : vector<64x128xf32> to vector<64xf32>
    %388 = vector.shape_cast %387 : vector<64xf32> to vector<64x1xf32>
    %389 = math.log %388 : vector<64x1xf32>
    %390 = vector.broadcast %389 : vector<64x1xf32> to vector<64x128xf32>
    %391 = arith.subf %385, %390 : vector<64x128xf32>
    %c0_114 = arith.constant 0 : index
    %c0_115 = arith.constant 0 : index
    %392 = vector.load %arg12[%c0_114, %c0_115] : memref<64x128xf32, #tpu.memory_space<vmem>>, vector<64x128xf32>
    tpu.vector_store %arg12[%c0_114, %c0_115], %391 {strides = array<i32>} : memref<64x128xf32, #tpu.memory_space<vmem>>, vector<64x128xf32>,
    return
  }
}

</mosaic_0001>

<llo_original>
// kernel: tpu_custom_call.1
$region0: #{tpu_custom_call.1}
  #allocation0 [shape = 'u32[]', space=smem, size = 0x4, offset = 0x4, fixed_abs, tag = 'smem constant byte address 0x4 - core index']
  #allocation1 [shape = 'u32[144,128]{1,0:T(1,128)}', space=vmem, size = 0x12000, scoped, tag = 'internal scratch']
  #allocation2 [shape = 'f32[64,128]{1,0:T(8,128)}', space=vmem, size = 0x8000, scoped, tag = 'scratch operand']
  #allocation3 [shape = 'f32[64,32]{1,0:T(8,128)}', space=vmem, size = 0x8000, scoped, tag = 'scratch operand']
  %s0 = inlined_call_operand.vmem [shape: s32[64,1], index: 0, kind: input, shape index: {}]
  %s1 = inlined_call_operand.hbm [shape: f32[2,8,32], index: 1, kind: input, shape index: {}]
  %s2 = inlined_call_operand.hbm [shape: f32[2,8,32], index: 2, kind: input, shape index: {}]
  %s3 = inlined_call_operand.hbm [shape: f32[16,32], index: 3, kind: input, shape index: {}]
  %s4 = inlined_call_operand.vmem [shape: f32[32,128], index: 4, kind: input, shape index: {}]
  %s5 = inlined_call_operand.vmem [shape: f32[1,128], index: 5, kind: input, shape index: {}]
  %s6 = inlined_call_operand.vmem [shape: f32[32,128], index: 6, kind: input, shape index: {}]
  %s7 = inlined_call_operand.hbm [shape: f32[32,128], index: 7, kind: input, shape index: {}]
  %s8 = inlined_call_operand.hbm [shape: f32[32,128], index: 8, kind: input, shape index: {}]
  %s9 = inlined_call_operand.vmem [shape: f32[1,128], index: 9, kind: input, shape index: {}]
  %s10 = inlined_call_operand.vmem [shape: f32[32,128], index: 10, kind: input, shape index: {}]
  %s11 = inlined_call_operand.vmem [shape: f32[1,128], index: 11, kind: input, shape index: {}]
  %s12 = inlined_call_operand.hbm [shape: f32[64,128], index: 12, kind: output, shape index: {0}]
  %s13 = inlined_call_operand.hbm [shape: f32[2,8,32], index: 13, kind: output, shape index: {1}]
  %s14 = inlined_call_operand.hbm [shape: f32[2,8,32], index: 14, kind: output, shape index: {2}]
  %15 = xla_tuple %s12, %s13, %s14
  %s16 = sld [smem:[#allocation0]]
  $region94: #{tpu_custom_call.1} parent=0
    _
  %s18 = ssub.s32 1, %s16
  %s19 = scalar_select 0, %s18, %s16
  $region1: #{tpu_custom_call.1} parent=0
    #allocation4 [shape = 'u8[8192]{0}', space=vmem, size = 0x2000, scoped, tag = 'input window, operand 1, single buffered']
    #allocation5 [shape = 's32[1]{0}', space=sflag, size = 0x4, scoped, tag = 'scoped memory for tpu_custom_call.1']
    #allocation6 [shape = 's32[1]{0}', space=sflag, size = 0x4, scoped, tag = 'scoped memory for tpu_custom_call.1']
    #allocation7 [shape = 'u8[8192]{0}', space=vmem, size = 0x2000, scoped, tag = 'input window, operand 2, single buffered']
    #allocation8 [shape = 's32[1]{0}', space=sflag, size = 0x4, scoped, tag = 'scoped memory for tpu_custom_call.1']
    #allocation9 [shape = 'u8[8192]{0}', space=vmem, size = 0x2000, scoped, tag = 'input window, operand 3, single buffered']
    #allocation10 [shape = 'u8[16384]{0}', space=vmem, size = 0x4000, scoped, tag = 'input window, operand 7, single buffered']
    #allocation11 [shape = 's32[1]{0}', space=sflag, size = 0x4, scoped, tag = 'scoped memory for tpu_custom_call.1']
    #allocation12 [shape = 'u8[16384]{0}', space=vmem, size = 0x4000, scoped, tag = 'input window, operand 8, single buffered']
    #allocation13 [shape = 'u8[32768]{0}', space=vmem, size = 0x8000, scoped, tag = 'output window, operand 0, single buffered']
    #allocation14 [shape = 'u8[8192]{0}', space=vmem, size = 0x2000, scoped, tag = 'output window, operand 1, single buffered']
    #allocation15 [shape = 's32[1]{0}', space=sflag, size = 0x4, scoped, tag = 'scoped memory for tpu_custom_call.1']
    #allocation16 [shape = 'u8[8192]{0}', space=vmem, size = 0x2000, scoped, tag = 'output window, operand 2, single buffered']
    %20 = vsyncpa [#allocation5], 0
    %21 = vsyncpa [#allocation8], 0
    %22 = vsyncpa [#allocation11], 0
    %23 = vsyncpa [#allocation6], 0
    %24 = vsyncpa [#allocation15], 0
    // Predicated region
    $region2: #{tpu_custom_call.1} parent=1 // pred_check
      _
    $region3: #{tpu_custom_call.1} parent=1 // pred_check_branch
      %26 = sbr.rel (0) target = $region5
    $region4: #{tpu_custom_call.1} parent=1 // pred_region
      _
    $region5: #{tpu_custom_call.1} parent=1 // pred_fallthru
      _
    // Predicated region
    $region6: #{tpu_custom_call.1} parent=1 // pred_check
      _
    $region7: #{tpu_custom_call.1} parent=1 // pred_check_branch
      %28 = sbr.rel (0) target = $region9
    $region8: #{tpu_custom_call.1} parent=1 // pred_region
      %s30 = ssub.s32 256, 256
      %31 = vsyncadd [#allocation5], %s30
      %s32 = sshll.u32 [#allocation4], 4
      %s33 = int_to_ptr.vmem [resolvable:$true] %s32
      %38 = dma.hbm_to_vmem [thread:$0]  %s1, 256, %s33, [#allocation5], 128, 128, 8
    $region9: #{tpu_custom_call.1} parent=1 // pred_fallthru
      _
    // Predicated region
    $region10: #{tpu_custom_call.1} parent=1 // pred_check
      _
    $region11: #{tpu_custom_call.1} parent=1 // pred_check_branch
      %40 = sbr.rel (0) target = $region13
    $region12: #{tpu_custom_call.1} parent=1 // pred_region
      %s42 = ssub.s32 256, 256
      %43 = vsyncadd [#allocation8], %s42
      %s44 = sshll.u32 [#allocation7], 4
      %s45 = int_to_ptr.vmem [resolvable:$true] %s44
      %50 = dma.hbm_to_vmem [thread:$0]  %s2, 256, %s45, [#allocation8], 128, 128, 8
    $region13: #{tpu_custom_call.1} parent=1 // pred_fallthru
      _
    // Predicated region
    $region14: #{tpu_custom_call.1} parent=1 // pred_check
      _
    $region15: #{tpu_custom_call.1} parent=1 // pred_check_branch
      %52 = sbr.rel (0) target = $region17
    $region16: #{tpu_custom_call.1} parent=1 // pred_region
      %s54 = ssub.s32 256, 256
      %55 = vsyncadd [#allocation8], %s54
      %s56 = sshll.u32 [#allocation9], 4
      %s57 = int_to_ptr.vmem [resolvable:$true] %s56
      %62 = dma.hbm_to_vmem [thread:$0]  %s3, 256, %s57, [#allocation8], 128, 128, 8
    $region17: #{tpu_custom_call.1} parent=1 // pred_fallthru
      _
    // Predicated region
    $region18: #{tpu_custom_call.1} parent=1 // pred_check
      _
    $region19: #{tpu_custom_call.1} parent=1 // pred_check_branch
      %64 = sbr.rel (0) target = $region21
    $region20: #{tpu_custom_call.1} parent=1 // pred_region
      _
    $region21: #{tpu_custom_call.1} parent=1 // pred_fallthru
      _
    // Predicated region
    $region22: #{tpu_custom_call.1} parent=1 // pred_check
      _
    $region23: #{tpu_custom_call.1} parent=1 // pred_check_branch
      %66 = sbr.rel (0) target = $region25
    $region24: #{tpu_custom_call.1} parent=1 // pred_region
      _
    $region25: #{tpu_custom_call.1} parent=1 // pred_fallthru
      _
    // Predicated region
    $region26: #{tpu_custom_call.1} parent=1 // pred_check
      _
    $region27: #{tpu_custom_call.1} parent=1 // pred_check_branch
      %68 = sbr.rel (0) target = $region29
    $region28: #{tpu_custom_call.1} parent=1 // pred_region
      _
    $region29: #{tpu_custom_call.1} parent=1 // pred_fallthru
      _
    // Predicated region
    $region30: #{tpu_custom_call.1} parent=1 // pred_check
      _
    $region31: #{tpu_custom_call.1} parent=1 // pred_check_branch
      %70 = sbr.rel (0) target = $region33
    $region32: #{tpu_custom_call.1} parent=1 // pred_region
      %s72 = ssub.s32 512, 512
      %73 = vsyncadd [#allocation11], %s72
      %s74 = sshll.u32 [#allocation10], 4
      %s75 = int_to_ptr.vmem [resolvable:$true] %s74
      %80 = dma.hbm_to_vmem [thread:$0]  %s7, 512, %s75, [#allocation11], 128, 128, 8
    $region33: #{tpu_custom_call.1} parent=1 // pred_fallthru
      _
    // Predicated region
    $region34: #{tpu_custom_call.1} parent=1 // pred_check
      _
    $region35: #{tpu_custom_call.1} parent=1 // pred_check_branch
      %82 = sbr.rel (0) target = $region37
    $region36: #{tpu_custom_call.1} parent=1 // pred_region
      %s84 = ssub.s32 512, 512
      %85 = vsyncadd [#allocation11], %s84
      %s86 = sshll.u32 [#allocation12], 4
      %s87 = int_to_ptr.vmem [resolvable:$true] %s86
      %92 = dma.hbm_to_vmem [thread:$0]  %s8, 512, %s87, [#allocation11], 128, 128, 8
    $region37: #{tpu_custom_call.1} parent=1 // pred_fallthru
      _
    // Predicated region
    $region38: #{tpu_custom_call.1} parent=1 // pred_check
      _
    $region39: #{tpu_custom_call.1} parent=1 // pred_check_branch
      %94 = sbr.rel (0) target = $region41
    $region40: #{tpu_custom_call.1} parent=1 // pred_region
      _
    $region41: #{tpu_custom_call.1} parent=1 // pred_fallthru
      _
    // Predicated region
    $region42: #{tpu_custom_call.1} parent=1 // pred_check
      _
    $region43: #{tpu_custom_call.1} parent=1 // pred_check_branch
      %96 = sbr.rel (0) target = $region45
    $region44: #{tpu_custom_call.1} parent=1 // pred_region
      _
    $region45: #{tpu_custom_call.1} parent=1 // pred_fallthru
      _
    // Predicated region
    $region46: #{tpu_custom_call.1} parent=1 // pred_check
      _
    $region47: #{tpu_custom_call.1} parent=1 // pred_check_branch
      %98 = sbr.rel (0) target = $region49
    $region48: #{tpu_custom_call.1} parent=1 // pred_region
      _
    $region49: #{tpu_custom_call.1} parent=1 // pred_fallthru
      _
    // Predicated region
    $region50: #{tpu_custom_call.1} parent=1 // pred_check
      _
    $region51: #{tpu_custom_call.1} parent=1 // pred_check_branch
      %100 = sbr.rel (0) target = $region53
    $region52: #{tpu_custom_call.1} parent=1 // pred_region
      %101 = dma.done [#allocation5], 256
    $region53: #{tpu_custom_call.1} parent=1 // pred_fallthru
      _
    // Predicated region
    $region54: #{tpu_custom_call.1} parent=1 // pred_check
      _
    $region55: #{tpu_custom_call.1} parent=1 // pred_check_branch
      %103 = sbr.rel (0) target = $region57
    $region56: #{tpu_custom_call.1} parent=1 // pred_region
      %104 = dma.done [#allocation8], 256
    $region57: #{tpu_custom_call.1} parent=1 // pred_fallthru
      _
    // Predicated region
    $region58: #{tpu_custom_call.1} parent=1 // pred_check
      _
    $region59: #{tpu_custom_call.1} parent=1 // pred_check_branch
      %106 = sbr.rel (0) target = $region61
    $region60: #{tpu_custom_call.1} parent=1 // pred_region
      %107 = dma.done [#allocation8], 256
    $region61: #{tpu_custom_call.1} parent=1 // pred_fallthru
      _
    // Predicated region
    $region62: #{tpu_custom_call.1} parent=1 // pred_check
      _
    $region63: #{tpu_custom_call.1} parent=1 // pred_check_branch
      %109 = sbr.rel (0) target = $region65
    $region64: #{tpu_custom_call.1} parent=1 // pred_region
      %110 = dma.done [#allocation11], 512
    $region65: #{tpu_custom_call.1} parent=1 // pred_fallthru
      _
    // Predicated region
    $region66: #{tpu_custom_call.1} parent=1 // pred_check
      _
    $region67: #{tpu_custom_call.1} parent=1 // pred_check_branch
      %112 = sbr.rel (0) target = $region69
    $region68: #{tpu_custom_call.1} parent=1 // pred_region
      %113 = dma.done [#allocation11], 512
    $region69: #{tpu_custom_call.1} parent=1 // pred_fallthru
      _
    %v114 = vld [vmem:[%s6] sm:$0xff]
    %v115 = vld [vmem:[%s6 + $0x8] sm:$0xff]
    %v116 = vld [vmem:[%s6 + $0x10] sm:$0xff]
    %v117 = vld [vmem:[%s6 + $0x18] sm:$0xff]
    %v118 = vld [vmem:[#allocation10] sm:$0xff]
    %v119 = vld [vmem:[#allocation10 + $0x8] sm:$0xff]
    %v120 = vld [vmem:[#allocation10 + $0x10] sm:$0xff]
    %v121 = vld [vmem:[#allocation10 + $0x18] sm:$0xff]
    %v122 = vld [vmem:[#allocation12] sm:$0xff]
    %v123 = vld [vmem:[#allocation12 + $0x8] sm:$0xff]
    %v124 = vld [vmem:[#allocation12 + $0x10] sm:$0xff]
    %v125 = vld [vmem:[#allocation12 + $0x18] sm:$0xff]
    %v126 = vld [vmem:[%s9] sm:$0x1]
    %v128 = vlaneseq
    %v129 = vshrl.u32 %v128, 7
    %v130 = vsub.s32 0, %v129
    %v131 = vrot.slane %v126, %v130
    %v133 = vld [vmem:[%s0] sm:$0xff]
    %v134 = vld [vmem:[%s0 + $0x8] sm:$0xff]
    %v135 = vld [vmem:[%s0 + $0x10] sm:$0xff]
    %v136 = vld [vmem:[%s0 + $0x18] sm:$0xff]
    %v137 = vld [vmem:[%s0 + $0x20] sm:$0xff]
    %v138 = vld [vmem:[%s0 + $0x28] sm:$0xff]
    %v139 = vld [vmem:[%s0 + $0x30] sm:$0xff]
    %v140 = vld [vmem:[%s0 + $0x38] sm:$0xff]
    %v141 = vlaneseq
    %v142 = vand.u32 %v141, 127
    %143 = vset.pattern.permute.xlu0 0
    %144 = vperm.xlu0 %143, %v133
    %v145 = vpop.permute.xlu0 %144
    %146 = vset.pattern.permute.xlu0 0
    %147 = vperm.xlu0 %146, %v134
    %v148 = vpop.permute.xlu0 %147
    %149 = vset.pattern.permute.xlu0 0
    %150 = vperm.xlu0 %149, %v135
    %v151 = vpop.permute.xlu0 %150
    %152 = vset.pattern.permute.xlu0 0
    %153 = vperm.xlu0 %152, %v136
    %v154 = vpop.permute.xlu0 %153
    %155 = vset.pattern.permute.xlu0 0
    %156 = vperm.xlu0 %155, %v137
    %v157 = vpop.permute.xlu0 %156
    %158 = vset.pattern.permute.xlu0 0
    %159 = vperm.xlu0 %158, %v138
    %v160 = vpop.permute.xlu0 %159
    %161 = vset.pattern.permute.xlu0 0
    %162 = vperm.xlu0 %161, %v139
    %v163 = vpop.permute.xlu0 %162
    %164 = vset.pattern.permute.xlu0 0
    %165 = vperm.xlu0 %164, %v140
    %v166 = vpop.permute.xlu0 %165
    %vm167 = vcmp.eq.s32.totalorder %v142, %v145
    %vm168 = vcmp.eq.s32.totalorder %v142, %v148
    %vm169 = vcmp.eq.s32.totalorder %v142, %v151
    %vm170 = vcmp.eq.s32.totalorder %v142, %v154
    %vm171 = vcmp.eq.s32.totalorder %v142, %v157
    %vm172 = vcmp.eq.s32.totalorder %v142, %v160
    %vm173 = vcmp.eq.s32.totalorder %v142, %v163
    %vm174 = vcmp.eq.s32.totalorder %v142, %v166
    %v175 = vsel %vm167, 1, 0
    %v176 = vsel %vm168, 1, 0
    %v177 = vsel %vm169, 1, 0
    %v178 = vsel %vm170, 1, 0
    %v179 = vsel %vm171, 1, 0
    %v180 = vsel %vm172, 1, 0
    %v181 = vsel %vm173, 1, 0
    %v182 = vsel %vm174, 1, 0
    %v183 = vcvt.s32.f32 %v175
    %v184 = vcvt.s32.f32 %v176
    %v185 = vcvt.s32.f32 %v177
    %v186 = vcvt.s32.f32 %v178
    %v187 = vcvt.s32.f32 %v179
    %v188 = vcvt.s32.f32 %v180
    %v189 = vcvt.s32.f32 %v181
    %v190 = vcvt.s32.f32 %v182
    %v191 = vld [vmem:[#allocation9] sm:$0xff]
    %v192 = vld [vmem:[#allocation9 + $0x8] sm:$0xff]
    %vm193 = vcmask 130048
    %v195 = vsel %vm193, %v183, 0
    %v198 = vsel %vm193, %v184, 0
    %v201 = vsel %vm193, %v185, 0
    %v204 = vsel %vm193, %v186, 0
    %v207 = vsel %vm193, %v187, 0
    %v210 = vsel %vm193, %v188, 0
    %v213 = vsel %vm193, %v189, 0
    %v216 = vsel %vm193, %v190, 0
    %218 = vmatprep.subr.mxu0 0.0
    %219 = vmatpush1.msra.mxu0 %v191
    %220 = vmatprep.subr.mxu0 0.0
    %221 = vmatpush1.msra.mxu0 %v192
    %222 = vmatprep.subr.mxu0 0.0
    %223 = vmatpush1.msra.mxu0 0.0
    %224 = vmatprep.subr.mxu0 0.0
    %225 = vmatpush1.msra.mxu0 0.0
    %226 = vmatprep.subr.mxu0 0.0
    %227 = vmatpush1.msra.mxu0 0.0
    %228 = vmatprep.subr.mxu0 0.0
    %229 = vmatpush1.msra.mxu0 0.0
    %230 = vmatprep.subr.mxu0 0.0
    %231 = vmatpush1.msra.mxu0 0.0
    %232 = vmatprep.subr.mxu0 0.0
    %233 = vmatpush1.msra.mxu0 0.0
    %234 = vmatprep.subr.mxu0 0.0
    %235 = vmatpush1.msra.mxu0 0.0
    %236 = vmatprep.subr.mxu0 0.0
    %237 = vmatpush1.msra.mxu0 0.0
    %238 = vmatprep.subr.mxu0 0.0
    %239 = vmatpush1.msra.mxu0 0.0
    %240 = vmatprep.subr.mxu0 0.0
    %241 = vmatpush1.msra.mxu0 0.0
    %242 = vmatprep.subr.mxu0 0.0
    %243 = vmatpush1.msra.mxu0 0.0
    %244 = vmatprep.subr.mxu0 0.0
    %245 = vmatpush1.msra.mxu0 0.0
    %246 = vmatprep.subr.mxu0 0.0
    %247 = vmatpush1.msra.mxu0 0.0
    %248 = vmatprep.subr.mxu0 0.0
    %249 = vmatpush1.msra.mxu0 0.0
    %250 = vmatprep.subr.mxu0 0.0
    %251 = vmatpush1.msra.mxu0 0.0
    %252 = vmatprep.subr.mxu0 0.0
    %253 = vmatpush1.msra.mxu0 0.0
    %254 = vmatprep.subr.mxu0 0.0
    %255 = vmatpush1.msra.mxu0 0.0
    %256 = vmatprep.subr.mxu0 0.0
    %257 = vmatpush1.msra.mxu0 0.0
    %258 = vmatprep.subr.mxu0 0.0
    %259 = vmatpush1.msra.mxu0 0.0
    %260 = vmatprep.subr.mxu0 0.0
    %261 = vmatpush1.msra.mxu0 0.0
    %262 = vmatprep.subr.mxu0 0.0
    %263 = vmatpush1.msra.mxu0 0.0
    %264 = vmatprep.subr.mxu0 0.0
    %265 = vmatpush1.msra.mxu0 0.0
    %266 = vmatprep.subr.mxu0 0.0
    %267 = vmatpush1.msra.mxu0 0.0
    %268 = vmatprep.subr.mxu0 0.0
    %269 = vmatpush1.msra.mxu0 0.0
    %270 = vmatprep.subr.mxu0 0.0
    %271 = vmatpush1.msra.mxu0 0.0
    %272 = vmatprep.subr.mxu0 0.0
    %273 = vmatpush1.msra.mxu0 0.0
    %274 = vmatprep.subr.mxu0 0.0
    %275 = vmatpush1.msra.mxu0 0.0
    %276 = vmatprep.subr.mxu0 0.0
    %277 = vmatpush1.msra.mxu0 0.0
    %278 = vmatprep.subr.mxu0 0.0
    %279 = vmatpush1.msra.mxu0 0.0
    %280 = vmatprep.subr.mxu0 0.0
    %281 = vmatpush1.msra.mxu0 0.0
    %282 = vmatprep.mubr.f32.mxu0 0.0
    %283 = vmatmul.mubr.f32.gmra.mrb[0].mxu0 %v195
    %v284 = vpop.f32.mrb[0].mxu0
    %v285 = vadd.f32 0.0, %v284
    %v286 = vpop.f32.mrb[0].mxu0
    %287 = vmatprep.mubr.f32.mxu0 0.0
    %288 = vmatmul.mubr.f32.gmra.mrb[0].mxu0 %v198
    %v289 = vpop.f32.mrb[0].mxu0
    %v290 = vadd.f32 0.0, %v289
    %v291 = vpop.f32.mrb[0].mxu0
    %292 = vmatprep.mubr.f32.mxu0 0.0
    %293 = vmatmul.mubr.f32.gmra.mrb[0].mxu0 %v201
    %v294 = vpop.f32.mrb[0].mxu0
    %v295 = vadd.f32 0.0, %v294
    %v296 = vpop.f32.mrb[0].mxu0
    %297 = vmatprep.mubr.f32.mxu0 0.0
    %298 = vmatmul.mubr.f32.gmra.mrb[0].mxu0 %v204
    %v299 = vpop.f32.mrb[0].mxu0
    %v300 = vadd.f32 0.0, %v299
    %v301 = vpop.f32.mrb[0].mxu0
    %302 = vmatprep.mubr.f32.mxu0 0.0
    %303 = vmatmul.mubr.f32.gmra.mrb[0].mxu0 %v207
    %v304 = vpop.f32.mrb[0].mxu0
    %v305 = vadd.f32 0.0, %v304
    %v306 = vpop.f32.mrb[0].mxu0
    %307 = vmatprep.mubr.f32.mxu0 0.0
    %308 = vmatmul.mubr.f32.gmra.mrb[0].mxu0 %v210
    %v309 = vpop.f32.mrb[0].mxu0
    %v310 = vadd.f32 0.0, %v309
    %v311 = vpop.f32.mrb[0].mxu0
    %312 = vmatprep.mubr.f32.mxu0 0.0
    %313 = vmatmul.mubr.f32.gmra.mrb[0].mxu0 %v213
    %v314 = vpop.f32.mrb[0].mxu0
    %v315 = vadd.f32 0.0, %v314
    %v316 = vpop.f32.mrb[0].mxu0
    %317 = vmatprep.mubr.f32.mxu0 0.0
    %318 = vmatmul.mubr.f32.gmra.mrb[0].mxu0 %v216
    %v319 = vpop.f32.mrb[0].mxu0
    %v320 = vadd.f32 0.0, %v319
    %v321 = vpop.f32.mrb[0].mxu0
    %322 = vdwg.mxu0
    %v323 = vld [vmem:[%s4] sm:$0xff]
    %v324 = vld [vmem:[%s4 + $0x8] sm:$0xff]
    %v325 = vld [vmem:[%s4 + $0x10] sm:$0xff]
    %v326 = vld [vmem:[%s4 + $0x18] sm:$0xff]
    %v327 = vld [vmem:[%s5] sm:$0x1]
    %v329 = vlaneseq
    %v330 = vshrl.u32 %v329, 7
    %v331 = vsub.s32 0, %v330
    %v332 = vrot.slane %v327, %v331
    %vm334 = vcmask 261120
    %v336 = vsel %vm334, %v285, 0
    %v339 = vsel %vm334, %v290, 0
    %v342 = vsel %vm334, %v295, 0
    %v345 = vsel %vm334, %v300, 0
    %v348 = vsel %vm334, %v305, 0
    %v351 = vsel %vm334, %v310, 0
    %v354 = vsel %vm334, %v315, 0
    %v357 = vsel %vm334, %v320, 0
    %359 = vmatprep.subr.mxu0 0.0
    %360 = vmatpush1.msra.mxu0 %v323
    %361 = vmatprep.subr.mxu0 0.0
    %362 = vmatpush1.msra.mxu0 %v324
    %363 = vmatprep.subr.mxu0 0.0
    %364 = vmatpush1.msra.mxu0 %v325
    %365 = vmatprep.subr.mxu0 0.0
    %366 = vmatpush1.msra.mxu0 %v326
    %367 = vmatprep.subr.mxu0 0.0
    %368 = vmatpush1.msra.mxu0 0.0
    %369 = vmatprep.subr.mxu0 0.0
    %370 = vmatpush1.msra.mxu0 0.0
    %371 = vmatprep.subr.mxu0 0.0
    %372 = vmatpush1.msra.mxu0 0.0
    %373 = vmatprep.subr.mxu0 0.0
    %374 = vmatpush1.msra.mxu0 0.0
    %375 = vmatprep.subr.mxu0 0.0
    %376 = vmatpush1.msra.mxu0 0.0
    %377 = vmatprep.subr.mxu0 0.0
    %378 = vmatpush1.msra.mxu0 0.0
    %379 = vmatprep.subr.mxu0 0.0
    %380 = vmatpush1.msra.mxu0 0.0
    %381 = vmatprep.subr.mxu0 0.0
    %382 = vmatpush1.msra.mxu0 0.0
    %383 = vmatprep.subr.mxu0 0.0
    %384 = vmatpush1.msra.mxu0 0.0
    %385 = vmatprep.subr.mxu0 0.0
    %386 = vmatpush1.msra.mxu0 0.0
    %387 = vmatprep.subr.mxu0 0.0
    %388 = vmatpush1.msra.mxu0 0.0
    %389 = vmatprep.subr.mxu0 0.0
    %390 = vmatpush1.msra.mxu0 0.0
    %391 = vmatprep.subr.mxu0 0.0
    %392 = vmatpush1.msra.mxu0 0.0
    %393 = vmatprep.subr.mxu0 0.0
    %394 = vmatpush1.msra.mxu0 0.0
    %395 = vmatprep.subr.mxu0 0.0
    %396 = vmatpush1.msra.mxu0 0.0
    %397 = vmatprep.subr.mxu0 0.0
    %398 = vmatpush1.msra.mxu0 0.0
    %399 = vmatprep.subr.mxu0 0.0
    %400 = vmatpush1.msra.mxu0 0.0
    %401 = vmatprep.subr.mxu0 0.0
    %402 = vmatpush1.msra.mxu0 0.0
    %403 = vmatprep.subr.mxu0 0.0
    %404 = vmatpush1.msra.mxu0 0.0
    %405 = vmatprep.subr.mxu0 0.0
    %406 = vmatpush1.msra.mxu0 0.0
    %407 = vmatprep.subr.mxu0 0.0
    %408 = vmatpush1.msra.mxu0 0.0
    %409 = vmatprep.subr.mxu0 0.0
    %410 = vmatpush1.msra.mxu0 0.0
    %411 = vmatprep.subr.mxu0 0.0
    %412 = vmatpush1.msra.mxu0 0.0
    %413 = vmatprep.subr.mxu0 0.0
    %414 = vmatpush1.msra.mxu0 0.0
    %415 = vmatprep.subr.mxu0 0.0
    %416 = vmatpush1.msra.mxu0 0.0
    %417 = vmatprep.subr.mxu0 0.0
    %418 = vmatpush1.msra.mxu0 0.0
    %419 = vmatprep.subr.mxu0 0.0
    %420 = vmatpush1.msra.mxu0 0.0
    %421 = vmatprep.subr.mxu0 0.0
    %422 = vmatpush1.msra.mxu0 0.0
    %423 = vmatprep.mubr.f32.mxu0 0.0
    %424 = vmatmul.mubr.f32.gmra.mrb[0].mxu0 %v336
    %v425 = vpop.f32.mrb[0].mxu0
    %v426 = vadd.f32 %v332, %v425
    %v427 = vpop.f32.mrb[0].mxu0
    %428 = vmatprep.mubr.f32.mxu0 0.0
    %429 = vmatmul.mubr.f32.gmra.mrb[0].mxu0 %v339
    %v430 = vpop.f32.mrb[0].mxu0
    %v431 = vadd.f32 %v332, %v430
    %v432 = vpop.f32.mrb[0].mxu0
    %433 = vmatprep.mubr.f32.mxu0 0.0
    %434 = vmatmul.mubr.f32.gmra.mrb[0].mxu0 %v342
    %v435 = vpop.f32.mrb[0].mxu0
    %v436 = vadd.f32 %v332, %v435
    %v437 = vpop.f32.mrb[0].mxu0
    %438 = vmatprep.mubr.f32.mxu0 0.0
    %439 = vmatmul.mubr.f32.gmra.mrb[0].mxu0 %v345
    %v440 = vpop.f32.mrb[0].mxu0
    %v441 = vadd.f32 %v332, %v440
    %v442 = vpop.f32.mrb[0].mxu0
    %443 = vmatprep.mubr.f32.mxu0 0.0
    %444 = vmatmul.mubr.f32.gmra.mrb[0].mxu0 %v348
    %v445 = vpop.f32.mrb[0].mxu0
    %v446 = vadd.f32 %v332, %v445
    %v447 = vpop.f32.mrb[0].mxu0
    %448 = vmatprep.mubr.f32.mxu0 0.0
    %449 = vmatmul.mubr.f32.gmra.mrb[0].mxu0 %v351
    %v450 = vpop.f32.mrb[0].mxu0
    %v451 = vadd.f32 %v332, %v450
    %v452 = vpop.f32.mrb[0].mxu0
    %453 = vmatprep.mubr.f32.mxu0 0.0
    %454 = vmatmul.mubr.f32.gmra.mrb[0].mxu0 %v354
    %v455 = vpop.f32.mrb[0].mxu0
    %v456 = vadd.f32 %v332, %v455
    %v457 = vpop.f32.mrb[0].mxu0
    %458 = vmatprep.mubr.f32.mxu0 0.0
    %459 = vmatmul.mubr.f32.gmra.mrb[0].mxu0 %v357
    %v460 = vpop.f32.mrb[0].mxu0
    %v461 = vadd.f32 %v332, %v460
    %v462 = vpop.f32.mrb[0].mxu0
    %463 = vdwg.mxu0
    %464 = vst [vmem:[#allocation2] sm:$0xff] %v426
    %465 = vst [vmem:[#allocation2 + $0x8] sm:$0xff] %v431
    %466 = vst [vmem:[#allocation2 + $0x10] sm:$0xff] %v436
    %467 = vst [vmem:[#allocation2 + $0x18] sm:$0xff] %v441
    %468 = vst [vmem:[#allocation2 + $0x20] sm:$0xff] %v446
    %469 = vst [vmem:[#allocation2 + $0x28] sm:$0xff] %v451
    %470 = vst [vmem:[#allocation2 + $0x30] sm:$0xff] %v456
    %471 = vst [vmem:[#allocation2 + $0x38] sm:$0xff] %v461
    %v472 = vld [vmem:[#allocation4] sm:$0xff]
    %v473 = vld [vmem:[#allocation7] sm:$0xff]
    %s474 = scalar_lea.vmem [#allocation4], 8
    %v475 = vld [vmem:[%s474] sm:$0xff]
    %s476 = scalar_lea.vmem [#allocation7], 8
    %v477 = vld [vmem:[%s476] sm:$0xff]
    %v478 = vld [vmem:[#allocation2] sm:$0xff]
    %v480 = vsel %vm334, %v472, 0
    %482 = vmatprep.subr.mxu0 0.0
    %483 = vmatpush1.msra.mxu0 %v114
    %484 = vmatprep.subr.mxu0 0.0
    %485 = vmatpush1.msra.mxu0 %v115
    %486 = vmatprep.subr.mxu0 0.0
    %487 = vmatpush1.msra.mxu0 %v116
    %488 = vmatprep.subr.mxu0 0.0
    %489 = vmatpush1.msra.mxu0 %v117
    %490 = vmatprep.subr.mxu0 0.0
    %491 = vmatpush1.msra.mxu0 0.0
    %492 = vmatprep.subr.mxu0 0.0
    %493 = vmatpush1.msra.mxu0 0.0
    %494 = vmatprep.subr.mxu0 0.0
    %495 = vmatpush1.msra.mxu0 0.0
    %496 = vmatprep.subr.mxu0 0.0
    %497 = vmatpush1.msra.mxu0 0.0
    %498 = vmatprep.subr.mxu0 0.0
    %499 = vmatpush1.msra.mxu0 0.0
    %500 = vmatprep.subr.mxu0 0.0
    %501 = vmatpush1.msra.mxu0 0.0
    %502 = vmatprep.subr.mxu0 0.0
    %503 = vmatpush1.msra.mxu0 0.0
    %504 = vmatprep.subr.mxu0 0.0
    %505 = vmatpush1.msra.mxu0 0.0
    %506 = vmatprep.subr.mxu0 0.0
    %507 = vmatpush1.msra.mxu0 0.0
    %508 = vmatprep.subr.mxu0 0.0
    %509 = vmatpush1.msra.mxu0 0.0
    %510 = vmatprep.subr.mxu0 0.0
    %511 = vmatpush1.msra.mxu0 0.0
    %512 = vmatprep.subr.mxu0 0.0
    %513 = vmatpush1.msra.mxu0 0.0
    %514 = vmatprep.subr.mxu0 0.0
    %515 = vmatpush1.msra.mxu0 0.0
    %516 = vmatprep.subr.mxu0 0.0
    %517 = vmatpush1.msra.mxu0 0.0
    %518 = vmatprep.subr.mxu0 0.0
    %519 = vmatpush1.msra.mxu0 0.0
    %520 = vmatprep.subr.mxu0 0.0
    %521 = vmatpush1.msra.mxu0 0.0
    %522 = vmatprep.subr.mxu0 0.0
    %523 = vmatpush1.msra.mxu0 0.0
    %524 = vmatprep.subr.mxu0 0.0
    %525 = vmatpush1.msra.mxu0 0.0
    %526 = vmatprep.subr.mxu0 0.0
    %527 = vmatpush1.msra.mxu0 0.0
    %528 = vmatprep.subr.mxu0 0.0
    %529 = vmatpush1.msra.mxu0 0.0
    %530 = vmatprep.subr.mxu0 0.0
    %531 = vmatpush1.msra.mxu0 0.0
    %532 = vmatprep.subr.mxu0 0.0
    %533 = vmatpush1.msra.mxu0 0.0
    %534 = vmatprep.subr.mxu0 0.0
    %535 = vmatpush1.msra.mxu0 0.0
    %536 = vmatprep.subr.mxu0 0.0
    %537 = vmatpush1.msra.mxu0 0.0
    %538 = vmatprep.subr.mxu0 0.0
    %539 = vmatpush1.msra.mxu0 0.0
    %540 = vmatprep.subr.mxu0 0.0
    %541 = vmatpush1.msra.mxu0 0.0
    %542 = vmatprep.subr.mxu0 0.0
    %543 = vmatpush1.msra.mxu0 0.0
    %544 = vmatprep.subr.mxu0 0.0
    %545 = vmatpush1.msra.mxu0 0.0
    %546 = vmatprep.mubr.f32.mxu0 0.0
    %547 = vmatmul.mubr.f32.gmra.mrb[0].mxu0 %v480
    %v548 = vpop.f32.mrb[0].mxu0
    %v549 = vadd.f32 0.0, %v548
    %v550 = vpop.f32.mrb[0].mxu0
    %551 = vdwg.mxu0
    %v552 = vadd.f32 %v478, %v549
    %v553 = vxor.u32 %v552, 2147483648
    %v554 = vmul.f32 %v553, 1.442695
    %v555 = vpow.pop %v554
    %v556 = vadd.f32 %v555, 1.0
    %v557 = vrcp.pop %v556
    %v558 = vmul.f32 1.0, %v557
    %v559 = vtanh.pop %v552
    %561 = vrot.lane.b32.xlu0 %v473, 32
    %v562 = vpop.permute.xlu0 %561
    %v564 = vmul.f32 %v558, %v562
    %566 = vrot.lane.b32.xlu0 %v559, 64
    %v567 = vpop.permute.xlu0 %566
    %v569 = vmul.f32 %v558, %v567
    %571 = vrot.lane.b32.xlu0 %v569, 32
    %v572 = vpop.permute.xlu0 %571
    %v574 = vadd.f32 %v564, %v572
    %v575 = vtanh.pop %v574
    %577 = vrot.lane.b32.xlu0 %v575, 64
    %v578 = vpop.permute.xlu0 %577
    %v580 = vmul.f32 %v558, %v578
    %v582 = vsel %vm334, %v475, 0
    %584 = vmatprep.subr.mxu0 0.0
    %585 = vmatpush1.msra.mxu0 %v122
    %586 = vmatprep.subr.mxu0 0.0
    %587 = vmatpush1.msra.mxu0 %v123
    %588 = vmatprep.subr.mxu0 0.0
    %589 = vmatpush1.msra.mxu0 %v124
    %590 = vmatprep.subr.mxu0 0.0
    %591 = vmatpush1.msra.mxu0 %v125
    %592 = vmatprep.subr.mxu0 0.0
    %593 = vmatpush1.msra.mxu0 0.0
    %594 = vmatprep.subr.mxu0 0.0
    %595 = vmatpush1.msra.mxu0 0.0
    %596 = vmatprep.subr.mxu0 0.0
    %597 = vmatpush1.msra.mxu0 0.0
    %598 = vmatprep.subr.mxu0 0.0
    %599 = vmatpush1.msra.mxu0 0.0
    %600 = vmatprep.subr.mxu0 0.0
    %601 = vmatpush1.msra.mxu0 0.0
    %602 = vmatprep.subr.mxu0 0.0
    %603 = vmatpush1.msra.mxu0 0.0
    %604 = vmatprep.subr.mxu0 0.0
    %605 = vmatpush1.msra.mxu0 0.0
    %606 = vmatprep.subr.mxu0 0.0
    %607 = vmatpush1.msra.mxu0 0.0
    %608 = vmatprep.subr.mxu0 0.0
    %609 = vmatpush1.msra.mxu0 0.0
    %610 = vmatprep.subr.mxu0 0.0
    %611 = vmatpush1.msra.mxu0 0.0
    %612 = vmatprep.subr.mxu0 0.0
    %613 = vmatpush1.msra.mxu0 0.0
    %614 = vmatprep.subr.mxu0 0.0
    %615 = vmatpush1.msra.mxu0 0.0
    %616 = vmatprep.subr.mxu0 0.0
    %617 = vmatpush1.msra.mxu0 0.0
    %618 = vmatprep.subr.mxu0 0.0
    %619 = vmatpush1.msra.mxu0 0.0
    %620 = vmatprep.subr.mxu0 0.0
    %621 = vmatpush1.msra.mxu0 0.0
    %622 = vmatprep.subr.mxu0 0.0
    %623 = vmatpush1.msra.mxu0 0.0
    %624 = vmatprep.subr.mxu0 0.0
    %625 = vmatpush1.msra.mxu0 0.0
    %626 = vmatprep.subr.mxu0 0.0
    %627 = vmatpush1.msra.mxu0 0.0
    %628 = vmatprep.subr.mxu0 0.0
    %629 = vmatpush1.msra.mxu0 0.0
    %630 = vmatprep.subr.mxu0 0.0
    %631 = vmatpush1.msra.mxu0 0.0
    %632 = vmatprep.subr.mxu0 0.0
    %633 = vmatpush1.msra.mxu0 0.0
    %634 = vmatprep.subr.mxu0 0.0
    %635 = vmatpush1.msra.mxu0 0.0
    %636 = vmatprep.subr.mxu0 0.0
    %637 = vmatpush1.msra.mxu0 0.0
    %638 = vmatprep.subr.mxu0 0.0
    %639 = vmatpush1.msra.mxu0 0.0
    %640 = vmatprep.subr.mxu0 0.0
    %641 = vmatpush1.msra.mxu0 0.0
    %642 = vmatprep.subr.mxu0 0.0
    %643 = vmatpush1.msra.mxu0 0.0
    %644 = vmatprep.subr.mxu0 0.0
    %645 = vmatpush1.msra.mxu0 0.0
    %646 = vmatprep.subr.mxu0 0.0
    %647 = vmatpush1.msra.mxu0 0.0
    %648 = vmatprep.mubr.f32.mxu0 0.0
    %649 = vmatmul.mubr.f32.gmra.mrb[0].mxu0 %v582
    %v650 = vpop.f32.mrb[0].mxu0
    %v651 = vadd.f32 0.0, %v650
    %v652 = vpop.f32.mrb[0].mxu0
    %653 = vdwg.mxu0
    %655 = vrot.lane.b32.xlu0 %v580, 32
    %v656 = vpop.permute.xlu0 %655
    %v657 = vsel %vm334, %v656, 0
    %659 = vmatprep.subr.mxu0 0.0
    %660 = vmatpush1.msra.mxu0 %v118
    %661 = vmatprep.subr.mxu0 0.0
    %662 = vmatpush1.msra.mxu0 %v119
    %663 = vmatprep.subr.mxu0 0.0
    %664 = vmatpush1.msra.mxu0 %v120
    %665 = vmatprep.subr.mxu0 0.0
    %666 = vmatpush1.msra.mxu0 %v121
    %667 = vmatprep.subr.mxu0 0.0
    %668 = vmatpush1.msra.mxu0 0.0
    %669 = vmatprep.subr.mxu0 0.0
    %670 = vmatpush1.msra.mxu0 0.0
    %671 = vmatprep.subr.mxu0 0.0
    %672 = vmatpush1.msra.mxu0 0.0
    %673 = vmatprep.subr.mxu0 0.0
    %674 = vmatpush1.msra.mxu0 0.0
    %675 = vmatprep.subr.mxu0 0.0
    %676 = vmatpush1.msra.mxu0 0.0
    %677 = vmatprep.subr.mxu0 0.0
    %678 = vmatpush1.msra.mxu0 0.0
    %679 = vmatprep.subr.mxu0 0.0
    %680 = vmatpush1.msra.mxu0 0.0
    %681 = vmatprep.subr.mxu0 0.0
    %682 = vmatpush1.msra.mxu0 0.0
    %683 = vmatprep.subr.mxu0 0.0
    %684 = vmatpush1.msra.mxu0 0.0
    %685 = vmatprep.subr.mxu0 0.0
    %686 = vmatpush1.msra.mxu0 0.0
    %687 = vmatprep.subr.mxu0 0.0
    %688 = vmatpush1.msra.mxu0 0.0
    %689 = vmatprep.subr.mxu0 0.0
    %690 = vmatpush1.msra.mxu0 0.0
    %691 = vmatprep.subr.mxu0 0.0
    %692 = vmatpush1.msra.mxu0 0.0
    %693 = vmatprep.subr.mxu0 0.0
    %694 = vmatpush1.msra.mxu0 0.0
    %695 = vmatprep.subr.mxu0 0.0
    %696 = vmatpush1.msra.mxu0 0.0
    %697 = vmatprep.subr.mxu0 0.0
    %698 = vmatpush1.msra.mxu0 0.0
    %699 = vmatprep.subr.mxu0 0.0
    %700 = vmatpush1.msra.mxu0 0.0
    %701 = vmatprep.subr.mxu0 0.0
    %702 = vmatpush1.msra.mxu0 0.0
    %703 = vmatprep.subr.mxu0 0.0
    %704 = vmatpush1.msra.mxu0 0.0
    %705 = vmatprep.subr.mxu0 0.0
    %706 = vmatpush1.msra.mxu0 0.0
    %707 = vmatprep.subr.mxu0 0.0
    %708 = vmatpush1.msra.mxu0 0.0
    %709 = vmatprep.subr.mxu0 0.0
    %710 = vmatpush1.msra.mxu0 0.0
    %711 = vmatprep.subr.mxu0 0.0
    %712 = vmatpush1.msra.mxu0 0.0
    %713 = vmatprep.subr.mxu0 0.0
    %714 = vmatpush1.msra.mxu0 0.0
    %715 = vmatprep.subr.mxu0 0.0
    %716 = vmatpush1.msra.mxu0 0.0
    %717 = vmatprep.subr.mxu0 0.0
    %718 = vmatpush1.msra.mxu0 0.0
    %719 = vmatprep.subr.mxu0 0.0
    %720 = vmatpush1.msra.mxu0 0.0
    %721 = vmatprep.subr.mxu0 0.0
    %722 = vmatpush1.msra.mxu0 0.0
    %723 = vmatprep.mubr.f32.mxu0 0.0
    %724 = vmatmul.mubr.f32.gmra.mrb[0].mxu0 %v657
    %v725 = vpop.f32.mrb[0].mxu0
    %v726 = vadd.f32 %v651, %v725
    %v727 = vpop.f32.mrb[0].mxu0
    %728 = vdwg.mxu0
    %v729 = vadd.f32 %v726, %v131
    %v730 = vxor.u32 %v729, 2147483648
    %v731 = vmul.f32 %v730, 1.442695
    %v732 = vpow.pop %v731
    %v733 = vadd.f32 %v732, 1.0
    %v734 = vrcp.pop %v733
    %v735 = vmul.f32 1.0, %v734
    %v736 = vtanh.pop %v729
    %738 = vrot.lane.b32.xlu0 %v477, 32
    %v739 = vpop.permute.xlu0 %738
    %v741 = vmul.f32 %v735, %v739
    %743 = vrot.lane.b32.xlu0 %v736, 64
    %v744 = vpop.permute.xlu0 %743
    %v746 = vmul.f32 %v735, %v744
    %748 = vrot.lane.b32.xlu0 %v746, 32
    %v749 = vpop.permute.xlu0 %748
    %v751 = vadd.f32 %v741, %v749
    %v752 = vtanh.pop %v751
    %754 = vrot.lane.b32.xlu0 %v752, 64
    %v755 = vpop.permute.xlu0 %754
    %v757 = vmul.f32 %v735, %v755
    %759 = vrot.lane.b32.xlu0 %v757, 32
    %v760 = vpop.permute.xlu0 %759
    %762 = vst.msk [vmem:[#allocation3] sm:$0xff] %vm334, %v760
    %s763 = scalar_lea.vmem [#allocation2], 8
    %v764 = vld [vmem:[%s763] sm:$0xff]
    %765 = vmatprep.subr.mxu0 0.0
    %766 = vmatpush1.msra.mxu0 %v114
    %767 = vmatprep.subr.mxu0 0.0
    %768 = vmatpush1.msra.mxu0 %v115
    %769 = vmatprep.subr.mxu0 0.0
    %770 = vmatpush1.msra.mxu0 %v116
    %771 = vmatprep.subr.mxu0 0.0
    %772 = vmatpush1.msra.mxu0 %v117
    %773 = vmatprep.subr.mxu0 0.0
    %774 = vmatpush1.msra.mxu0 0.0
    %775 = vmatprep.subr.mxu0 0.0
    %776 = vmatpush1.msra.mxu0 0.0
    %777 = vmatprep.subr.mxu0 0.0
    %778 = vmatpush1.msra.mxu0 0.0
    %779 = vmatprep.subr.mxu0 0.0
    %780 = vmatpush1.msra.mxu0 0.0
    %781 = vmatprep.subr.mxu0 0.0
    %782 = vmatpush1.msra.mxu0 0.0
    %783 = vmatprep.subr.mxu0 0.0
    %784 = vmatpush1.msra.mxu0 0.0
    %785 = vmatprep.subr.mxu0 0.0
    %786 = vmatpush1.msra.mxu0 0.0
    %787 = vmatprep.subr.mxu0 0.0
    %788 = vmatpush1.msra.mxu0 0.0
    %789 = vmatprep.subr.mxu0 0.0
    %790 = vmatpush1.msra.mxu0 0.0
    %791 = vmatprep.subr.mxu0 0.0
    %792 = vmatpush1.msra.mxu0 0.0
    %793 = vmatprep.subr.mxu0 0.0
    %794 = vmatpush1.msra.mxu0 0.0
    %795 = vmatprep.subr.mxu0 0.0
    %796 = vmatpush1.msra.mxu0 0.0
    %797 = vmatprep.subr.mxu0 0.0
    %798 = vmatpush1.msra.mxu0 0.0
    %799 = vmatprep.subr.mxu0 0.0
    %800 = vmatpush1.msra.mxu0 0.0
    %801 = vmatprep.subr.mxu0 0.0
    %802 = vmatpush1.msra.mxu0 0.0
    %803 = vmatprep.subr.mxu0 0.0
    %804 = vmatpush1.msra.mxu0 0.0
    %805 = vmatprep.subr.mxu0 0.0
    %806 = vmatpush1.msra.mxu0 0.0
    %807 = vmatprep.subr.mxu0 0.0
    %808 = vmatpush1.msra.mxu0 0.0
    %809 = vmatprep.subr.mxu0 0.0
    %810 = vmatpush1.msra.mxu0 0.0
    %811 = vmatprep.subr.mxu0 0.0
    %812 = vmatpush1.msra.mxu0 0.0
    %813 = vmatprep.subr.mxu0 0.0
    %814 = vmatpush1.msra.mxu0 0.0
    %815 = vmatprep.subr.mxu0 0.0
    %816 = vmatpush1.msra.mxu0 0.0
    %817 = vmatprep.subr.mxu0 0.0
    %818 = vmatpush1.msra.mxu0 0.0
    %819 = vmatprep.subr.mxu0 0.0
    %820 = vmatpush1.msra.mxu0 0.0
    %821 = vmatprep.subr.mxu0 0.0
    %822 = vmatpush1.msra.mxu0 0.0
    %823 = vmatprep.subr.mxu0 0.0
    %824 = vmatpush1.msra.mxu0 0.0
    %825 = vmatprep.subr.mxu0 0.0
    %826 = vmatpush1.msra.mxu0 0.0
    %827 = vmatprep.subr.mxu0 0.0
    %828 = vmatpush1.msra.mxu0 0.0
    %829 = vmatprep.mubr.f32.mxu0 0.0
    %830 = vmatmul.mubr.f32.gmra.mrb[0].mxu0 %v657
    %v831 = vpop.f32.mrb[0].mxu0
    %v832 = vadd.f32 0.0, %v831
    %v833 = vpop.f32.mrb[0].mxu0
    %834 = vdwg.mxu0
    %v835 = vadd.f32 %v764, %v832
    %v836 = vxor.u32 %v835, 2147483648
    %v837 = vmul.f32 %v836, 1.442695
    %v838 = vpow.pop %v837
    %v839 = vadd.f32 %v838, 1.0
    %v840 = vrcp.pop %v839
    %v841 = vmul.f32 1.0, %v840
    %v842 = vtanh.pop %v835
    %v843 = vmul.f32 %v841, %v574
    %845 = vrot.lane.b32.xlu0 %v842, 64
    %v846 = vpop.permute.xlu0 %845
    %v848 = vmul.f32 %v841, %v846
    %850 = vrot.lane.b32.xlu0 %v848, 32
    %v851 = vpop.permute.xlu0 %850
    %v853 = vadd.f32 %v843, %v851
    %v854 = vtanh.pop %v853
    %856 = vrot.lane.b32.xlu0 %v854, 64
    %v857 = vpop.permute.xlu0 %856
    %v859 = vmul.f32 %v841, %v857
    %v860 = vsel %vm334, %v760, 0
    %862 = vmatprep.subr.mxu0 0.0
    %863 = vmatpush1.msra.mxu0 %v122
    %864 = vmatprep.subr.mxu0 0.0
    %865 = vmatpush1.msra.mxu0 %v123
    %866 = vmatprep.subr.mxu0 0.0
    %867 = vmatpush1.msra.mxu0 %v124
    %868 = vmatprep.subr.mxu0 0.0
    %869 = vmatpush1.msra.mxu0 %v125
    %870 = vmatprep.subr.mxu0 0.0
    %871 = vmatpush1.msra.mxu0 0.0
    %872 = vmatprep.subr.mxu0 0.0
    %873 = vmatpush1.msra.mxu0 0.0
    %874 = vmatprep.subr.mxu0 0.0
    %875 = vmatpush1.msra.mxu0 0.0
    %876 = vmatprep.subr.mxu0 0.0
    %877 = vmatpush1.msra.mxu0 0.0
    %878 = vmatprep.subr.mxu0 0.0
    %879 = vmatpush1.msra.mxu0 0.0
    %880 = vmatprep.subr.mxu0 0.0
    %881 = vmatpush1.msra.mxu0 0.0
    %882 = vmatprep.subr.mxu0 0.0
    %883 = vmatpush1.msra.mxu0 0.0
    %884 = vmatprep.subr.mxu0 0.0
    %885 = vmatpush1.msra.mxu0 0.0
    %886 = vmatprep.subr.mxu0 0.0
    %887 = vmatpush1.msra.mxu0 0.0
    %888 = vmatprep.subr.mxu0 0.0
    %889 = vmatpush1.msra.mxu0 0.0
    %890 = vmatprep.subr.mxu0 0.0
    %891 = vmatpush1.msra.mxu0 0.0
    %892 = vmatprep.subr.mxu0 0.0
    %893 = vmatpush1.msra.mxu0 0.0
    %894 = vmatprep.subr.mxu0 0.0
    %895 = vmatpush1.msra.mxu0 0.0
    %896 = vmatprep.subr.mxu0 0.0
    %897 = vmatpush1.msra.mxu0 0.0
    %898 = vmatprep.subr.mxu0 0.0
    %899 = vmatpush1.msra.mxu0 0.0
    %900 = vmatprep.subr.mxu0 0.0
    %901 = vmatpush1.msra.mxu0 0.0
    %902 = vmatprep.subr.mxu0 0.0
    %903 = vmatpush1.msra.mxu0 0.0
    %904 = vmatprep.subr.mxu0 0.0
    %905 = vmatpush1.msra.mxu0 0.0
    %906 = vmatprep.subr.mxu0 0.0
    %907 = vmatpush1.msra.mxu0 0.0
    %908 = vmatprep.subr.mxu0 0.0
    %909 = vmatpush1.msra.mxu0 0.0
    %910 = vmatprep.subr.mxu0 0.0
    %911 = vmatpush1.msra.mxu0 0.0
    %912 = vmatprep.subr.mxu0 0.0
    %913 = vmatpush1.msra.mxu0 0.0
    %914 = vmatprep.subr.mxu0 0.0
    %915 = vmatpush1.msra.mxu0 0.0
    %916 = vmatprep.subr.mxu0 0.0
    %917 = vmatpush1.msra.mxu0 0.0
    %918 = vmatprep.subr.mxu0 0.0
    %919 = vmatpush1.msra.mxu0 0.0
    %920 = vmatprep.subr.mxu0 0.0
    %921 = vmatpush1.msra.mxu0 0.0
    %922 = vmatprep.subr.mxu0 0.0
    %923 = vmatpush1.msra.mxu0 0.0
    %924 = vmatprep.subr.mxu0 0.0
    %925 = vmatpush1.msra.mxu0 0.0
    %926 = vmatprep.mubr.f32.mxu0 0.0
    %927 = vmatmul.mubr.f32.gmra.mrb[0].mxu0 %v860
    %v928 = vpop.f32.mrb[0].mxu0
    %v929 = vadd.f32 0.0, %v928
    %v930 = vpop.f32.mrb[0].mxu0
    %931 = vdwg.mxu0
    %933 = vrot.lane.b32.xlu0 %v859, 32
    %v934 = vpop.permute.xlu0 %933
    %v935 = vsel %vm334, %v934, 0
    %937 = vmatprep.subr.mxu0 0.0
    %938 = vmatpush1.msra.mxu0 %v118
    %939 = vmatprep.subr.mxu0 0.0
    %940 = vmatpush1.msra.mxu0 %v119
    %941 = vmatprep.subr.mxu0 0.0
    %942 = vmatpush1.msra.mxu0 %v120
    %943 = vmatprep.subr.mxu0 0.0
    %944 = vmatpush1.msra.mxu0 %v121
    %945 = vmatprep.subr.mxu0 0.0
    %946 = vmatpush1.msra.mxu0 0.0
    %947 = vmatprep.subr.mxu0 0.0
    %948 = vmatpush1.msra.mxu0 0.0
    %949 = vmatprep.subr.mxu0 0.0
    %950 = vmatpush1.msra.mxu0 0.0
    %951 = vmatprep.subr.mxu0 0.0
    %952 = vmatpush1.msra.mxu0 0.0
    %953 = vmatprep.subr.mxu0 0.0
    %954 = vmatpush1.msra.mxu0 0.0
    %955 = vmatprep.subr.mxu0 0.0
    %956 = vmatpush1.msra.mxu0 0.0
    %957 = vmatprep.subr.mxu0 0.0
    %958 = vmatpush1.msra.mxu0 0.0
    %959 = vmatprep.subr.mxu0 0.0
    %960 = vmatpush1.msra.mxu0 0.0
    %961 = vmatprep.subr.mxu0 0.0
    %962 = vmatpush1.msra.mxu0 0.0
    %963 = vmatprep.subr.mxu0 0.0
    %964 = vmatpush1.msra.mxu0 0.0
    %965 = vmatprep.subr.mxu0 0.0
    %966 = vmatpush1.msra.mxu0 0.0
    %967 = vmatprep.subr.mxu0 0.0
    %968 = vmatpush1.msra.mxu0 0.0
    %969 = vmatprep.subr.mxu0 0.0
    %970 = vmatpush1.msra.mxu0 0.0
    %971 = vmatprep.subr.mxu0 0.0
    %972 = vmatpush1.msra.mxu0 0.0
    %973 = vmatprep.subr.mxu0 0.0
    %974 = vmatpush1.msra.mxu0 0.0
    %975 = vmatprep.subr.mxu0 0.0
    %976 = vmatpush1.msra.mxu0 0.0
    %977 = vmatprep.subr.mxu0 0.0
    %978 = vmatpush1.msra.mxu0 0.0
    %979 = vmatprep.subr.mxu0 0.0
    %980 = vmatpush1.msra.mxu0 0.0
    %981 = vmatprep.subr.mxu0 0.0
    %982 = vmatpush1.msra.mxu0 0.0
    %983 = vmatprep.subr.mxu0 0.0
    %984 = vmatpush1.msra.mxu0 0.0
    %985 = vmatprep.subr.mxu0 0.0
    %986 = vmatpush1.msra.mxu0 0.0
    %987 = vmatprep.subr.mxu0 0.0
    %988 = vmatpush1.msra.mxu0 0.0
    %989 = vmatprep.subr.mxu0 0.0
    %990 = vmatpush1.msra.mxu0 0.0
    %991 = vmatprep.subr.mxu0 0.0
    %992 = vmatpush1.msra.mxu0 0.0
    %993 = vmatprep.subr.mxu0 0.0
    %994 = vmatpush1.msra.mxu0 0.0
    %995 = vmatprep.subr.mxu0 0.0
    %996 = vmatpush1.msra.mxu0 0.0
    %997 = vmatprep.subr.mxu0 0.0
    %998 = vmatpush1.msra.mxu0 0.0
    %999 = vmatprep.subr.mxu0 0.0
    %1000 = vmatpush1.msra.mxu0 0.0
    %1001 = vmatprep.mubr.f32.mxu0 0.0
    %1002 = vmatmul.mubr.f32.gmra.mrb[0].mxu0 %v935
    %v1003 = vpop.f32.mrb[0].mxu0
    %v1004 = vadd.f32 %v929, %v1003
    %v1005 = vpop.f32.mrb[0].mxu0
    %1006 = vdwg.mxu0
    %v1007 = vadd.f32 %v1004, %v131
    %v1008 = vxor.u32 %v1007, 2147483648
    %v1009 = vmul.f32 %v1008, 1.442695
    %v1010 = vpow.pop %v1009
    %v1011 = vadd.f32 %v1010, 1.0
    %v1012 = vrcp.pop %v1011
    %v1013 = vmul.f32 1.0, %v1012
    %v1014 = vtanh.pop %v1007
    %v1015 = vmul.f32 %v1013, %v751
    %1017 = vrot.lane.b32.xlu0 %v1014, 64
    %v1018 = vpop.permute.xlu0 %1017
    %v1020 = vmul.f32 %v1013, %v1018
    %1022 = vrot.lane.b32.xlu0 %v1020, 32
    %v1023 = vpop.permute.xlu0 %1022
    %v1025 = vadd.f32 %v1015, %v1023
    %v1026 = vtanh.pop %v1025
    %1028 = vrot.lane.b32.xlu0 %v1026, 64
    %v1029 = vpop.permute.xlu0 %1028
    %v1031 = vmul.f32 %v1013, %v1029
    %1033 = vrot.lane.b32.xlu0 %v1031, 32
    %v1034 = vpop.permute.xlu0 %1033
    %s1036 = scalar_lea.vmem [#allocation3], 8
    %1037 = vst.msk [vmem:[%s1036] sm:$0xff] %vm334, %v1034
    %s1038 = scalar_lea.vmem [#allocation2], 16
    %v1039 = vld [vmem:[%s1038] sm:$0xff]
    %1040 = vmatprep.subr.mxu0 0.0
    %1041 = vmatpush1.msra.mxu0 %v114
    %1042 = vmatprep.subr.mxu0 0.0
    %1043 = vmatpush1.msra.mxu0 %v115
    %1044 = vmatprep.subr.mxu0 0.0
    %1045 = vmatpush1.msra.mxu0 %v116
    %1046 = vmatprep.subr.mxu0 0.0
    %1047 = vmatpush1.msra.mxu0 %v117
    %1048 = vmatprep.subr.mxu0 0.0
    %1049 = vmatpush1.msra.mxu0 0.0
    %1050 = vmatprep.subr.mxu0 0.0
    %1051 = vmatpush1.msra.mxu0 0.0
    %1052 = vmatprep.subr.mxu0 0.0
    %1053 = vmatpush1.msra.mxu0 0.0
    %1054 = vmatprep.subr.mxu0 0.0
    %1055 = vmatpush1.msra.mxu0 0.0
    %1056 = vmatprep.subr.mxu0 0.0
    %1057 = vmatpush1.msra.mxu0 0.0
    %1058 = vmatprep.subr.mxu0 0.0
    %1059 = vmatpush1.msra.mxu0 0.0
    %1060 = vmatprep.subr.mxu0 0.0
    %1061 = vmatpush1.msra.mxu0 0.0
    %1062 = vmatprep.subr.mxu0 0.0
    %1063 = vmatpush1.msra.mxu0 0.0
    %1064 = vmatprep.subr.mxu0 0.0
    %1065 = vmatpush1.msra.mxu0 0.0
    %1066 = vmatprep.subr.mxu0 0.0
    %1067 = vmatpush1.msra.mxu0 0.0
    %1068 = vmatprep.subr.mxu0 0.0
    %1069 = vmatpush1.msra.mxu0 0.0
    %1070 = vmatprep.subr.mxu0 0.0
    %1071 = vmatpush1.msra.mxu0 0.0
    %1072 = vmatprep.subr.mxu0 0.0
    %1073 = vmatpush1.msra.mxu0 0.0
    %1074 = vmatprep.subr.mxu0 0.0
    %1075 = vmatpush1.msra.mxu0 0.0
    %1076 = vmatprep.subr.mxu0 0.0
    %1077 = vmatpush1.msra.mxu0 0.0
    %1078 = vmatprep.subr.mxu0 0.0
    %1079 = vmatpush1.msra.mxu0 0.0
    %1080 = vmatprep.subr.mxu0 0.0
    %1081 = vmatpush1.msra.mxu0 0.0
    %1082 = vmatprep.subr.mxu0 0.0
    %1083 = vmatpush1.msra.mxu0 0.0
    %1084 = vmatprep.subr.mxu0 0.0
    %1085 = vmatpush1.msra.mxu0 0.0
    %1086 = vmatprep.subr.mxu0 0.0
    %1087 = vmatpush1.msra.mxu0 0.0
    %1088 = vmatprep.subr.mxu0 0.0
    %1089 = vmatpush1.msra.mxu0 0.0
    %1090 = vmatprep.subr.mxu0 0.0
    %1091 = vmatpush1.msra.mxu0 0.0
    %1092 = vmatprep.subr.mxu0 0.0
    %1093 = vmatpush1.msra.mxu0 0.0
    %1094 = vmatprep.subr.mxu0 0.0
    %1095 = vmatpush1.msra.mxu0 0.0
    %1096 = vmatprep.subr.mxu0 0.0
    %1097 = vmatpush1.msra.mxu0 0.0
    %1098 = vmatprep.subr.mxu0 0.0
    %1099 = vmatpush1.msra.mxu0 0.0
    %1100 = vmatprep.subr.mxu0 0.0
    %1101 = vmatpush1.msra.mxu0 0.0
    %1102 = vmatprep.subr.mxu0 0.0
    %1103 = vmatpush1.msra.mxu0 0.0
    %1104 = vmatprep.mubr.f32.mxu0 0.0
    %1105 = vmatmul.mubr.f32.gmra.mrb[0].mxu0 %v935
    %v1106 = vpop.f32.mrb[0].mxu0
    %v1107 = vadd.f32 0.0, %v1106
    %v1108 = vpop.f32.mrb[0].mxu0
    %1109 = vdwg.mxu0
    %v1110 = vadd.f32 %v1039, %v1107
    %v1111 = vxor.u32 %v1110, 2147483648
    %v1112 = vmul.f32 %v1111, 1.442695
    %v1113 = vpow.pop %v1112
    %v1114 = vadd.f32 %v1113, 1.0
    %v1115 = vrcp.pop %v1114
    %v1116 = vmul.f32 1.0, %v1115
    %v1117 = vtanh.pop %v1110
    %v1118 = vmul.f32 %v1116, %v853
    %1120 = vrot.lane.b32.xlu0 %v1117, 64
    %v1121 = vpop.permute.xlu0 %1120
    %v1123 = vmul.f32 %v1116, %v1121
    %1125 = vrot.lane.b32.xlu0 %v1123, 32
    %v1126 = vpop.permute.xlu0 %1125
    %v1128 = vadd.f32 %v1118, %v1126
    %v1129 = vtanh.pop %v1128
    %1131 = vrot.lane.b32.xlu0 %v1129, 64
    %v1132 = vpop.permute.xlu0 %1131
    %v1134 = vmul.f32 %v1116, %v1132
    %v1135 = vsel %vm334, %v1034, 0
    %1137 = vmatprep.subr.mxu0 0.0
    %1138 = vmatpush1.msra.mxu0 %v122
    %1139 = vmatprep.subr.mxu0 0.0
    %1140 = vmatpush1.msra.mxu0 %v123
    %1141 = vmatprep.subr.mxu0 0.0
    %1142 = vmatpush1.msra.mxu0 %v124
    %1143 = vmatprep.subr.mxu0 0.0
    %1144 = vmatpush1.msra.mxu0 %v125
    %1145 = vmatprep.subr.mxu0 0.0
    %1146 = vmatpush1.msra.mxu0 0.0
    %1147 = vmatprep.subr.mxu0 0.0
    %1148 = vmatpush1.msra.mxu0 0.0
    %1149 = vmatprep.subr.mxu0 0.0
    %1150 = vmatpush1.msra.mxu0 0.0
    %1151 = vmatprep.subr.mxu0 0.0
    %1152 = vmatpush1.msra.mxu0 0.0
    %1153 = vmatprep.subr.mxu0 0.0
    %1154 = vmatpush1.msra.mxu0 0.0
    %1155 = vmatprep.subr.mxu0 0.0
    %1156 = vmatpush1.msra.mxu0 0.0
    %1157 = vmatprep.subr.mxu0 0.0
    %1158 = vmatpush1.msra.mxu0 0.0
    %1159 = vmatprep.subr.mxu0 0.0
    %1160 = vmatpush1.msra.mxu0 0.0
    %1161 = vmatprep.subr.mxu0 0.0
    %1162 = vmatpush1.msra.mxu0 0.0
    %1163 = vmatprep.subr.mxu0 0.0
    %1164 = vmatpush1.msra.mxu0 0.0
    %1165 = vmatprep.subr.mxu0 0.0
    %1166 = vmatpush1.msra.mxu0 0.0
    %1167 = vmatprep.subr.mxu0 0.0
    %1168 = vmatpush1.msra.mxu0 0.0
    %1169 = vmatprep.subr.mxu0 0.0
    %1170 = vmatpush1.msra.mxu0 0.0
    %1171 = vmatprep.subr.mxu0 0.0
    %1172 = vmatpush1.msra.mxu0 0.0
    %1173 = vmatprep.subr.mxu0 0.0
    %1174 = vmatpush1.msra.mxu0 0.0
    %1175 = vmatprep.subr.mxu0 0.0
    %1176 = vmatpush1.msra.mxu0 0.0
    %1177 = vmatprep.subr.mxu0 0.0
    %1178 = vmatpush1.msra.mxu0 0.0
    %1179 = vmatprep.subr.mxu0 0.0
    %1180 = vmatpush1.msra.mxu0 0.0
    %1181 = vmatprep.subr.mxu0 0.0
    %1182 = vmatpush1.msra.mxu0 0.0
    %1183 = vmatprep.subr.mxu0 0.0
    %1184 = vmatpush1.msra.mxu0 0.0
    %1185 = vmatprep.subr.mxu0 0.0
    %1186 = vmatpush1.msra.mxu0 0.0
    %1187 = vmatprep.subr.mxu0 0.0
    %1188 = vmatpush1.msra.mxu0 0.0
    %1189 = vmatprep.subr.mxu0 0.0
    %1190 = vmatpush1.msra.mxu0 0.0
    %1191 = vmatprep.subr.mxu0 0.0
    %1192 = vmatpush1.msra.mxu0 0.0
    %1193 = vmatprep.subr.mxu0 0.0
    %1194 = vmatpush1.msra.mxu0 0.0
    %1195 = vmatprep.subr.mxu0 0.0
    %1196 = vmatpush1.msra.mxu0 0.0
    %1197 = vmatprep.subr.mxu0 0.0
    %1198 = vmatpush1.msra.mxu0 0.0
    %1199 = vmatprep.subr.mxu0 0.0
    %1200 = vmatpush1.msra.mxu0 0.0
    %1201 = vmatprep.mubr.f32.mxu0 0.0
    %1202 = vmatmul.mubr.f32.gmra.mrb[0].mxu0 %v1135
    %v1203 = vpop.f32.mrb[0].mxu0
    %v1204 = vadd.f32 0.0, %v1203
    %v1205 = vpop.f32.mrb[0].mxu0
    %1206 = vdwg.mxu0
    %1208 = vrot.lane.b32.xlu0 %v1134, 32
    %v1209 = vpop.permute.xlu0 %1208
    %v1210 = vsel %vm334, %v1209, 0
    %1212 = vmatprep.subr.mxu0 0.0
    %1213 = vmatpush1.msra.mxu0 %v118
    %1214 = vmatprep.subr.mxu0 0.0
    %1215 = vmatpush1.msra.mxu0 %v119
    %1216 = vmatprep.subr.mxu0 0.0
    %1217 = vmatpush1.msra.mxu0 %v120
    %1218 = vmatprep.subr.mxu0 0.0
    %1219 = vmatpush1.msra.mxu0 %v121
    %1220 = vmatprep.subr.mxu0 0.0
    %1221 = vmatpush1.msra.mxu0 0.0
    %1222 = vmatprep.subr.mxu0 0.0
    %1223 = vmatpush1.msra.mxu0 0.0
    %1224 = vmatprep.subr.mxu0 0.0
    %1225 = vmatpush1.msra.mxu0 0.0
    %1226 = vmatprep.subr.mxu0 0.0
    %1227 = vmatpush1.msra.mxu0 0.0
    %1228 = vmatprep.subr.mxu0 0.0
    %1229 = vmatpush1.msra.mxu0 0.0
    %1230 = vmatprep.subr.mxu0 0.0
    %1231 = vmatpush1.msra.mxu0 0.0
    %1232 = vmatprep.subr.mxu0 0.0
    %1233 = vmatpush1.msra.mxu0 0.0
    %1234 = vmatprep.subr.mxu0 0.0
    %1235 = vmatpush1.msra.mxu0 0.0
    %1236 = vmatprep.subr.mxu0 0.0
    %1237 = vmatpush1.msra.mxu0 0.0
    %1238 = vmatprep.subr.mxu0 0.0
    %1239 = vmatpush1.msra.mxu0 0.0
    %1240 = vmatprep.subr.mxu0 0.0
    %1241 = vmatpush1.msra.mxu0 0.0
    %1242 = vmatprep.subr.mxu0 0.0
    %1243 = vmatpush1.msra.mxu0 0.0
    %1244 = vmatprep.subr.mxu0 0.0
    %1245 = vmatpush1.msra.mxu0 0.0
    %1246 = vmatprep.subr.mxu0 0.0
    %1247 = vmatpush1.msra.mxu0 0.0
    %1248 = vmatprep.subr.mxu0 0.0
    %1249 = vmatpush1.msra.mxu0 0.0
    %1250 = vmatprep.subr.mxu0 0.0
    %1251 = vmatpush1.msra.mxu0 0.0
    %1252 = vmatprep.subr.mxu0 0.0
    %1253 = vmatpush1.msra.mxu0 0.0
    %1254 = vmatprep.subr.mxu0 0.0
    %1255 = vmatpush1.msra.mxu0 0.0
    %1256 = vmatprep.subr.mxu0 0.0
    %1257 = vmatpush1.msra.mxu0 0.0
    %1258 = vmatprep.subr.mxu0 0.0
    %1259 = vmatpush1.msra.mxu0 0.0
    %1260 = vmatprep.subr.mxu0 0.0
    %1261 = vmatpush1.msra.mxu0 0.0
    %1262 = vmatprep.subr.mxu0 0.0
    %1263 = vmatpush1.msra.mxu0 0.0
    %1264 = vmatprep.subr.mxu0 0.0
    %1265 = vmatpush1.msra.mxu0 0.0
    %1266 = vmatprep.subr.mxu0 0.0
    %1267 = vmatpush1.msra.mxu0 0.0
    %1268 = vmatprep.subr.mxu0 0.0
    %1269 = vmatpush1.msra.mxu0 0.0
    %1270 = vmatprep.subr.mxu0 0.0
    %1271 = vmatpush1.msra.mxu0 0.0
    %1272 = vmatprep.subr.mxu0 0.0
    %1273 = vmatpush1.msra.mxu0 0.0
    %1274 = vmatprep.subr.mxu0 0.0
    %1275 = vmatpush1.msra.mxu0 0.0
    %1276 = vmatprep.mubr.f32.mxu0 0.0
    %1277 = vmatmul.mubr.f32.gmra.mrb[0].mxu0 %v1210
    %v1278 = vpop.f32.mrb[0].mxu0
    %v1279 = vadd.f32 %v1204, %v1278
    %v1280 = vpop.f32.mrb[0].mxu0
    %1281 = vdwg.mxu0
    %v1282 = vadd.f32 %v1279, %v131
    %v1283 = vxor.u32 %v1282, 2147483648
    %v1284 = vmul.f32 %v1283, 1.442695
    %v1285 = vpow.pop %v1284
    %v1286 = vadd.f32 %v1285, 1.0
    %v1287 = vrcp.pop %v1286
    %v1288 = vmul.f32 1.0, %v1287
    %v1289 = vtanh.pop %v1282
    %v1290 = vmul.f32 %v1288, %v1025
    %1292 = vrot.lane.b32.xlu0 %v1289, 64
    %v1293 = vpop.permute.xlu0 %1292
    %v1295 = vmul.f32 %v1288, %v1293
    %1297 = vrot.lane.b32.xlu0 %v1295, 32
    %v1298 = vpop.permute.xlu0 %1297
    %v1300 = vadd.f32 %v1290, %v1298
    %v1301 = vtanh.pop %v1300
    %1303 = vrot.lane.b32.xlu0 %v1301, 64
    %v1304 = vpop.permute.xlu0 %1303
    %v1306 = vmul.f32 %v1288, %v1304
    %1308 = vrot.lane.b32.xlu0 %v1306, 32
    %v1309 = vpop.permute.xlu0 %1308
    %s1311 = scalar_lea.vmem [#allocation3], 16
    %1312 = vst.msk [vmem:[%s1311] sm:$0xff] %vm334, %v1309
    %s1313 = scalar_lea.vmem [#allocation2], 24
    %v1314 = vld [vmem:[%s1313] sm:$0xff]
    %1315 = vmatprep.subr.mxu0 0.0
    %1316 = vmatpush1.msra.mxu0 %v114
    %1317 = vmatprep.subr.mxu0 0.0
    %1318 = vmatpush1.msra.mxu0 %v115
    %1319 = vmatprep.subr.mxu0 0.0
    %1320 = vmatpush1.msra.mxu0 %v116
    %1321 = vmatprep.subr.mxu0 0.0
    %1322 = vmatpush1.msra.mxu0 %v117
    %1323 = vmatprep.subr.mxu0 0.0
    %1324 = vmatpush1.msra.mxu0 0.0
    %1325 = vmatprep.subr.mxu0 0.0
    %1326 = vmatpush1.msra.mxu0 0.0
    %1327 = vmatprep.subr.mxu0 0.0
    %1328 = vmatpush1.msra.mxu0 0.0
    %1329 = vmatprep.subr.mxu0 0.0
    %1330 = vmatpush1.msra.mxu0 0.0
    %1331 = vmatprep.subr.mxu0 0.0
    %1332 = vmatpush1.msra.mxu0 0.0
    %1333 = vmatprep.subr.mxu0 0.0
    %1334 = vmatpush1.msra.mxu0 0.0
    %1335 = vmatprep.subr.mxu0 0.0
    %1336 = vmatpush1.msra.mxu0 0.0
    %1337 = vmatprep.subr.mxu0 0.0
    %1338 = vmatpush1.msra.mxu0 0.0
    %1339 = vmatprep.subr.mxu0 0.0
    %1340 = vmatpush1.msra.mxu0 0.0
    %1341 = vmatprep.subr.mxu0 0.0
    %1342 = vmatpush1.msra.mxu0 0.0
    %1343 = vmatprep.subr.mxu0 0.0
    %1344 = vmatpush1.msra.mxu0 0.0
    %1345 = vmatprep.subr.mxu0 0.0
    %1346 = vmatpush1.msra.mxu0 0.0
    %1347 = vmatprep.subr.mxu0 0.0
    %1348 = vmatpush1.msra.mxu0 0.0
    %1349 = vmatprep.subr.mxu0 0.0
    %1350 = vmatpush1.msra.mxu0 0.0
    %1351 = vmatprep.subr.mxu0 0.0
    %1352 = vmatpush1.msra.mxu0 0.0
    %1353 = vmatprep.subr.mxu0 0.0
    %1354 = vmatpush1.msra.mxu0 0.0
    %1355 = vmatprep.subr.mxu0 0.0
    %1356 = vmatpush1.msra.mxu0 0.0
    %1357 = vmatprep.subr.mxu0 0.0
    %1358 = vmatpush1.msra.mxu0 0.0
    %1359 = vmatprep.subr.mxu0 0.0
    %1360 = vmatpush1.msra.mxu0 0.0
    %1361 = vmatprep.subr.mxu0 0.0
    %1362 = vmatpush1.msra.mxu0 0.0
    %1363 = vmatprep.subr.mxu0 0.0
    %1364 = vmatpush1.msra.mxu0 0.0
    %1365 = vmatprep.subr.mxu0 0.0
    %1366 = vmatpush1.msra.mxu0 0.0
    %1367 = vmatprep.subr.mxu0 0.0
    %1368 = vmatpush1.msra.mxu0 0.0
    %1369 = vmatprep.subr.mxu0 0.0
    %1370 = vmatpush1.msra.mxu0 0.0
    %1371 = vmatprep.subr.mxu0 0.0
    %1372 = vmatpush1.msra.mxu0 0.0
    %1373 = vmatprep.subr.mxu0 0.0
    %1374 = vmatpush1.msra.mxu0 0.0
    %1375 = vmatprep.subr.mxu0 0.0
    %1376 = vmatpush1.msra.mxu0 0.0
    %1377 = vmatprep.subr.mxu0 0.0
    %1378 = vmatpush1.msra.mxu0 0.0
    %1379 = vmatprep.mubr.f32.mxu0 0.0
    %1380 = vmatmul.mubr.f32.gmra.mrb[0].mxu0 %v1210
    %v1381 = vpop.f32.mrb[0].mxu0
    %v1382 = vadd.f32 0.0, %v1381
    %v1383 = vpop.f32.mrb[0].mxu0
    %1384 = vdwg.mxu0
    %v1385 = vadd.f32 %v1314, %v1382
    %v1386 = vxor.u32 %v1385, 2147483648
    %v1387 = vmul.f32 %v1386, 1.442695
    %v1388 = vpow.pop %v1387
    %v1389 = vadd.f32 %v1388, 1.0
    %v1390 = vrcp.pop %v1389
    %v1391 = vmul.f32 1.0, %v1390
    %v1392 = vtanh.pop %v1385
    %v1393 = vmul.f32 %v1391, %v1128
    %1395 = vrot.lane.b32.xlu0 %v1392, 64
    %v1396 = vpop.permute.xlu0 %1395
    %v1398 = vmul.f32 %v1391, %v1396
    %1400 = vrot.lane.b32.xlu0 %v1398, 32
    %v1401 = vpop.permute.xlu0 %1400
    %v1403 = vadd.f32 %v1393, %v1401
    %v1404 = vtanh.pop %v1403
    %1406 = vrot.lane.b32.xlu0 %v1404, 64
    %v1407 = vpop.permute.xlu0 %1406
    %v1409 = vmul.f32 %v1391, %v1407
    %v1410 = vsel %vm334, %v1309, 0
    %1412 = vmatprep.subr.mxu0 0.0
    %1413 = vmatpush1.msra.mxu0 %v122
    %1414 = vmatprep.subr.mxu0 0.0
    %1415 = vmatpush1.msra.mxu0 %v123
    %1416 = vmatprep.subr.mxu0 0.0
    %1417 = vmatpush1.msra.mxu0 %v124
    %1418 = vmatprep.subr.mxu0 0.0
    %1419 = vmatpush1.msra.mxu0 %v125
    %1420 = vmatprep.subr.mxu0 0.0
    %1421 = vmatpush1.msra.mxu0 0.0
    %1422 = vmatprep.subr.mxu0 0.0
    %1423 = vmatpush1.msra.mxu0 0.0
    %1424 = vmatprep.subr.mxu0 0.0
    %1425 = vmatpush1.msra.mxu0 0.0
    %1426 = vmatprep.subr.mxu0 0.0
    %1427 = vmatpush1.msra.mxu0 0.0
    %1428 = vmatprep.subr.mxu0 0.0
    %1429 = vmatpush1.msra.mxu0 0.0
    %1430 = vmatprep.subr.mxu0 0.0
    %1431 = vmatpush1.msra.mxu0 0.0
    %1432 = vmatprep.subr.mxu0 0.0
    %1433 = vmatpush1.msra.mxu0 0.0
    %1434 = vmatprep.subr.mxu0 0.0
    %1435 = vmatpush1.msra.mxu0 0.0
    %1436 = vmatprep.subr.mxu0 0.0
    %1437 = vmatpush1.msra.mxu0 0.0
    %1438 = vmatprep.subr.mxu0 0.0
    %1439 = vmatpush1.msra.mxu0 0.0
    %1440 = vmatprep.subr.mxu0 0.0
    %1441 = vmatpush1.msra.mxu0 0.0
    %1442 = vmatprep.subr.mxu0 0.0
    %1443 = vmatpush1.msra.mxu0 0.0
    %1444 = vmatprep.subr.mxu0 0.0
    %1445 = vmatpush1.msra.mxu0 0.0
    %1446 = vmatprep.subr.mxu0 0.0
    %1447 = vmatpush1.msra.mxu0 0.0
    %1448 = vmatprep.subr.mxu0 0.0
    %1449 = vmatpush1.msra.mxu0 0.0
    %1450 = vmatprep.subr.mxu0 0.0
    %1451 = vmatpush1.msra.mxu0 0.0
    %1452 = vmatprep.subr.mxu0 0.0
    %1453 = vmatpush1.msra.mxu0 0.0
    %1454 = vmatprep.subr.mxu0 0.0
    %1455 = vmatpush1.msra.mxu0 0.0
    %1456 = vmatprep.subr.mxu0 0.0
    %1457 = vmatpush1.msra.mxu0 0.0
    %1458 = vmatprep.subr.mxu0 0.0
    %1459 = vmatpush1.msra.mxu0 0.0
    %1460 = vmatprep.subr.mxu0 0.0
    %1461 = vmatpush1.msra.mxu0 0.0
    %1462 = vmatprep.subr.mxu0 0.0
    %1463 = vmatpush1.msra.mxu0 0.0
    %1464 = vmatprep.subr.mxu0 0.0
    %1465 = vmatpush1.msra.mxu0 0.0
    %1466 = vmatprep.subr.mxu0 0.0
    %1467 = vmatpush1.msra.mxu0 0.0
    %1468 = vmatprep.subr.mxu0 0.0
    %1469 = vmatpush1.msra.mxu0 0.0
    %1470 = vmatprep.subr.mxu0 0.0
    %1471 = vmatpush1.msra.mxu0 0.0
    %1472 = vmatprep.subr.mxu0 0.0
    %1473 = vmatpush1.msra.mxu0 0.0
    %1474 = vmatprep.subr.mxu0 0.0
    %1475 = vmatpush1.msra.mxu0 0.0
    %1476 = vmatprep.mubr.f32.mxu0 0.0
    %1477 = vmatmul.mubr.f32.gmra.mrb[0].mxu0 %v1410
    %v1478 = vpop.f32.mrb[0].mxu0
    %v1479 = vadd.f32 0.0, %v1478
    %v1480 = vpop.f32.mrb[0].mxu0
    %1481 = vdwg.mxu0
    %1483 = vrot.lane.b32.xlu0 %v1409, 32
    %v1484 = vpop.permute.xlu0 %1483
    %v1485 = vsel %vm334, %v1484, 0
    %1487 = vmatprep.subr.mxu0 0.0
    %1488 = vmatpush1.msra.mxu0 %v118
    %1489 = vmatprep.subr.mxu0 0.0
    %1490 = vmatpush1.msra.mxu0 %v119
    %1491 = vmatprep.subr.mxu0 0.0
    %1492 = vmatpush1.msra.mxu0 %v120
    %1493 = vmatprep.subr.mxu0 0.0
    %1494 = vmatpush1.msra.mxu0 %v121
    %1495 = vmatprep.subr.mxu0 0.0
    %1496 = vmatpush1.msra.mxu0 0.0
    %1497 = vmatprep.subr.mxu0 0.0
    %1498 = vmatpush1.msra.mxu0 0.0
    %1499 = vmatprep.subr.mxu0 0.0
    %1500 = vmatpush1.msra.mxu0 0.0
    %1501 = vmatprep.subr.mxu0 0.0
    %1502 = vmatpush1.msra.mxu0 0.0
    %1503 = vmatprep.subr.mxu0 0.0
    %1504 = vmatpush1.msra.mxu0 0.0
    %1505 = vmatprep.subr.mxu0 0.0
    %1506 = vmatpush1.msra.mxu0 0.0
    %1507 = vmatprep.subr.mxu0 0.0
    %1508 = vmatpush1.msra.mxu0 0.0
    %1509 = vmatprep.subr.mxu0 0.0
    %1510 = vmatpush1.msra.mxu0 0.0
    %1511 = vmatprep.subr.mxu0 0.0
    %1512 = vmatpush1.msra.mxu0 0.0
    %1513 = vmatprep.subr.mxu0 0.0
    %1514 = vmatpush1.msra.mxu0 0.0
    %1515 = vmatprep.subr.mxu0 0.0
    %1516 = vmatpush1.msra.mxu0 0.0
    %1517 = vmatprep.subr.mxu0 0.0
    %1518 = vmatpush1.msra.mxu0 0.0
    %1519 = vmatprep.subr.mxu0 0.0
    %1520 = vmatpush1.msra.mxu0 0.0
    %1521 = vmatprep.subr.mxu0 0.0
    %1522 = vmatpush1.msra.mxu0 0.0
    %1523 = vmatprep.subr.mxu0 0.0
    %1524 = vmatpush1.msra.mxu0 0.0
    %1525 = vmatprep.subr.mxu0 0.0
    %1526 = vmatpush1.msra.mxu0 0.0
    %1527 = vmatprep.subr.mxu0 0.0
    %1528 = vmatpush1.msra.mxu0 0.0
    %1529 = vmatprep.subr.mxu0 0.0
    %1530 = vmatpush1.msra.mxu0 0.0
    %1531 = vmatprep.subr.mxu0 0.0
    %1532 = vmatpush1.msra.mxu0 0.0
    %1533 = vmatprep.subr.mxu0 0.0
    %1534 = vmatpush1.msra.mxu0 0.0
    %1535 = vmatprep.subr.mxu0 0.0
    %1536 = vmatpush1.msra.mxu0 0.0
    %1537 = vmatprep.subr.mxu0 0.0
    %1538 = vmatpush1.msra.mxu0 0.0
    %1539 = vmatprep.subr.mxu0 0.0
    %1540 = vmatpush1.msra.mxu0 0.0
    %1541 = vmatprep.subr.mxu0 0.0
    %1542 = vmatpush1.msra.mxu0 0.0
    %1543 = vmatprep.subr.mxu0 0.0
    %1544 = vmatpush1.msra.mxu0 0.0
    %1545 = vmatprep.subr.mxu0 0.0
    %1546 = vmatpush1.msra.mxu0 0.0
    %1547 = vmatprep.subr.mxu0 0.0
    %1548 = vmatpush1.msra.mxu0 0.0
    %1549 = vmatprep.subr.mxu0 0.0
    %1550 = vmatpush1.msra.mxu0 0.0
    %1551 = vmatprep.mubr.f32.mxu0 0.0
    %1552 = vmatmul.mubr.f32.gmra.mrb[0].mxu0 %v1485
    %v1553 = vpop.f32.mrb[0].mxu0
    %v1554 = vadd.f32 %v1479, %v1553
    %v1555 = vpop.f32.mrb[0].mxu0
    %1556 = vdwg.mxu0
    %v1557 = vadd.f32 %v1554, %v131
    %v1558 = vxor.u32 %v1557, 2147483648
    %v1559 = vmul.f32 %v1558, 1.442695
    %v1560 = vpow.pop %v1559
    %v1561 = vadd.f32 %v1560, 1.0
    %v1562 = vrcp.pop %v1561
    %v1563 = vmul.f32 1.0, %v1562
    %v1564 = vtanh.pop %v1557
    %v1565 = vmul.f32 %v1563, %v1300
    %1567 = vrot.lane.b32.xlu0 %v1564, 64
    %v1568 = vpop.permute.xlu0 %1567
    %v1570 = vmul.f32 %v1563, %v1568
    %1572 = vrot.lane.b32.xlu0 %v1570, 32
    %v1573 = vpop.permute.xlu0 %1572
    %v1575 = vadd.f32 %v1565, %v1573
    %v1576 = vtanh.pop %v1575
    %1578 = vrot.lane.b32.xlu0 %v1576, 64
    %v1579 = vpop.permute.xlu0 %1578
    %v1581 = vmul.f32 %v1563, %v1579
    %1583 = vrot.lane.b32.xlu0 %v1581, 32
    %v1584 = vpop.permute.xlu0 %1583
    %s1586 = scalar_lea.vmem [#allocation3], 24
    %1587 = vst.msk [vmem:[%s1586] sm:$0xff] %vm334, %v1584
    %s1588 = scalar_lea.vmem [#allocation2], 32
    %v1589 = vld [vmem:[%s1588] sm:$0xff]
    %1590 = vmatprep.subr.mxu0 0.0
    %1591 = vmatpush1.msra.mxu0 %v114
    %1592 = vmatprep.subr.mxu0 0.0
    %1593 = vmatpush1.msra.mxu0 %v115
    %1594 = vmatprep.subr.mxu0 0.0
    %1595 = vmatpush1.msra.mxu0 %v116
    %1596 = vmatprep.subr.mxu0 0.0
    %1597 = vmatpush1.msra.mxu0 %v117
    %1598 = vmatprep.subr.mxu0 0.0
    %1599 = vmatpush1.msra.mxu0 0.0
    %1600 = vmatprep.subr.mxu0 0.0
    %1601 = vmatpush1.msra.mxu0 0.0
    %1602 = vmatprep.subr.mxu0 0.0
    %1603 = vmatpush1.msra.mxu0 0.0
    %1604 = vmatprep.subr.mxu0 0.0
    %1605 = vmatpush1.msra.mxu0 0.0
    %1606 = vmatprep.subr.mxu0 0.0
    %1607 = vmatpush1.msra.mxu0 0.0
    %1608 = vmatprep.subr.mxu0 0.0
    %1609 = vmatpush1.msra.mxu0 0.0
    %1610 = vmatprep.subr.mxu0 0.0
    %1611 = vmatpush1.msra.mxu0 0.0
    %1612 = vmatprep.subr.mxu0 0.0
    %1613 = vmatpush1.msra.mxu0 0.0
    %1614 = vmatprep.subr.mxu0 0.0
    %1615 = vmatpush1.msra.mxu0 0.0
    %1616 = vmatprep.subr.mxu0 0.0
    %1617 = vmatpush1.msra.mxu0 0.0
    %1618 = vmatprep.subr.mxu0 0.0
    %1619 = vmatpush1.msra.mxu0 0.0
    %1620 = vmatprep.subr.mxu0 0.0
    %1621 = vmatpush1.msra.mxu0 0.0
    %1622 = vmatprep.subr.mxu0 0.0
    %1623 = vmatpush1.msra.mxu0 0.0
    %1624 = vmatprep.subr.mxu0 0.0
    %1625 = vmatpush1.msra.mxu0 0.0
    %1626 = vmatprep.subr.mxu0 0.0
    %1627 = vmatpush1.msra.mxu0 0.0
    %1628 = vmatprep.subr.mxu0 0.0
    %1629 = vmatpush1.msra.mxu0 0.0
    %1630 = vmatprep.subr.mxu0 0.0
    %1631 = vmatpush1.msra.mxu0 0.0
    %1632 = vmatprep.subr.mxu0 0.0
    %1633 = vmatpush1.msra.mxu0 0.0
    %1634 = vmatprep.subr.mxu0 0.0
    %1635 = vmatpush1.msra.mxu0 0.0
    %1636 = vmatprep.subr.mxu0 0.0
    %1637 = vmatpush1.msra.mxu0 0.0
    %1638 = vmatprep.subr.mxu0 0.0
    %1639 = vmatpush1.msra.mxu0 0.0
    %1640 = vmatprep.subr.mxu0 0.0
    %1641 = vmatpush1.msra.mxu0 0.0
    %1642 = vmatprep.subr.mxu0 0.0
    %1643 = vmatpush1.msra.mxu0 0.0
    %1644 = vmatprep.subr.mxu0 0.0
    %1645 = vmatpush1.msra.mxu0 0.0
    %1646 = vmatprep.subr.mxu0 0.0
    %1647 = vmatpush1.msra.mxu0 0.0
    %1648 = vmatprep.subr.mxu0 0.0
    %1649 = vmatpush1.msra.mxu0 0.0
    %1650 = vmatprep.subr.mxu0 0.0
    %1651 = vmatpush1.msra.mxu0 0.0
    %1652 = vmatprep.subr.mxu0 0.0
    %1653 = vmatpush1.msra.mxu0 0.0
    %1654 = vmatprep.mubr.f32.mxu0 0.0
    %1655 = vmatmul.mubr.f32.gmra.mrb[0].mxu0 %v1485
    %v1656 = vpop.f32.mrb[0].mxu0
    %v1657 = vadd.f32 0.0, %v1656
    %v1658 = vpop.f32.mrb[0].mxu0
    %1659 = vdwg.mxu0
    %v1660 = vadd.f32 %v1589, %v1657
    %v1661 = vxor.u32 %v1660, 2147483648
    %v1662 = vmul.f32 %v1661, 1.442695
    %v1663 = vpow.pop %v1662
    %v1664 = vadd.f32 %v1663, 1.0
    %v1665 = vrcp.pop %v1664
    %v1666 = vmul.f32 1.0, %v1665
    %v1667 = vtanh.pop %v1660
    %v1668 = vmul.f32 %v1666, %v1403
    %1670 = vrot.lane.b32.xlu0 %v1667, 64
    %v1671 = vpop.permute.xlu0 %1670
    %v1673 = vmul.f32 %v1666, %v1671
    %1675 = vrot.lane.b32.xlu0 %v1673, 32
    %v1676 = vpop.permute.xlu0 %1675
    %v1678 = vadd.f32 %v1668, %v1676
    %v1679 = vtanh.pop %v1678
    %1681 = vrot.lane.b32.xlu0 %v1679, 64
    %v1682 = vpop.permute.xlu0 %1681
    %v1684 = vmul.f32 %v1666, %v1682
    %v1685 = vsel %vm334, %v1584, 0
    %1687 = vmatprep.subr.mxu0 0.0
    %1688 = vmatpush1.msra.mxu0 %v122
    %1689 = vmatprep.subr.mxu0 0.0
    %1690 = vmatpush1.msra.mxu0 %v123
    %1691 = vmatprep.subr.mxu0 0.0
    %1692 = vmatpush1.msra.mxu0 %v124
    %1693 = vmatprep.subr.mxu0 0.0
    %1694 = vmatpush1.msra.mxu0 %v125
    %1695 = vmatprep.subr.mxu0 0.0
    %1696 = vmatpush1.msra.mxu0 0.0
    %1697 = vmatprep.subr.mxu0 0.0
    %1698 = vmatpush1.msra.mxu0 0.0
    %1699 = vmatprep.subr.mxu0 0.0
    %1700 = vmatpush1.msra.mxu0 0.0
    %1701 = vmatprep.subr.mxu0 0.0
    %1702 = vmatpush1.msra.mxu0 0.0
    %1703 = vmatprep.subr.mxu0 0.0
    %1704 = vmatpush1.msra.mxu0 0.0
    %1705 = vmatprep.subr.mxu0 0.0
    %1706 = vmatpush1.msra.mxu0 0.0
    %1707 = vmatprep.subr.mxu0 0.0
    %1708 = vmatpush1.msra.mxu0 0.0
    %1709 = vmatprep.subr.mxu0 0.0
    %1710 = vmatpush1.msra.mxu0 0.0
    %1711 = vmatprep.subr.mxu0 0.0
    %1712 = vmatpush1.msra.mxu0 0.0
    %1713 = vmatprep.subr.mxu0 0.0
    %1714 = vmatpush1.msra.mxu0 0.0
    %1715 = vmatprep.subr.mxu0 0.0
    %1716 = vmatpush1.msra.mxu0 0.0
    %1717 = vmatprep.subr.mxu0 0.0
    %1718 = vmatpush1.msra.mxu0 0.0
    %1719 = vmatprep.subr.mxu0 0.0
    %1720 = vmatpush1.msra.mxu0 0.0
    %1721 = vmatprep.subr.mxu0 0.0
    %1722 = vmatpush1.msra.mxu0 0.0
    %1723 = vmatprep.subr.mxu0 0.0
    %1724 = vmatpush1.msra.mxu0 0.0
    %1725 = vmatprep.subr.mxu0 0.0
    %1726 = vmatpush1.msra.mxu0 0.0
    %1727 = vmatprep.subr.mxu0 0.0
    %1728 = vmatpush1.msra.mxu0 0.0
    %1729 = vmatprep.subr.mxu0 0.0
    %1730 = vmatpush1.msra.mxu0 0.0
    %1731 = vmatprep.subr.mxu0 0.0
    %1732 = vmatpush1.msra.mxu0 0.0
    %1733 = vmatprep.subr.mxu0 0.0
    %1734 = vmatpush1.msra.mxu0 0.0
    %1735 = vmatprep.subr.mxu0 0.0
    %1736 = vmatpush1.msra.mxu0 0.0
    %1737 = vmatprep.subr.mxu0 0.0
    %1738 = vmatpush1.msra.mxu0 0.0
    %1739 = vmatprep.subr.mxu0 0.0
    %1740 = vmatpush1.msra.mxu0 0.0
    %1741 = vmatprep.subr.mxu0 0.0
    %1742 = vmatpush1.msra.mxu0 0.0
    %1743 = vmatprep.subr.mxu0 0.0
    %1744 = vmatpush1.msra.mxu0 0.0
    %1745 = vmatprep.subr.mxu0 0.0
    %1746 = vmatpush1.msra.mxu0 0.0
    %1747 = vmatprep.subr.mxu0 0.0
    %1748 = vmatpush1.msra.mxu0 0.0
    %1749 = vmatprep.subr.mxu0 0.0
    %1750 = vmatpush1.msra.mxu0 0.0
    %1751 = vmatprep.mubr.f32.mxu0 0.0
    %1752 = vmatmul.mubr.f32.gmra.mrb[0].mxu0 %v1685
    %v1753 = vpop.f32.mrb[0].mxu0
    %v1754 = vadd.f32 0.0, %v1753
    %v1755 = vpop.f32.mrb[0].mxu0
    %1756 = vdwg.mxu0
    %1758 = vrot.lane.b32.xlu0 %v1684, 32
    %v1759 = vpop.permute.xlu0 %1758
    %v1760 = vsel %vm334, %v1759, 0
    %1762 = vmatprep.subr.mxu0 0.0
    %1763 = vmatpush1.msra.mxu0 %v118
    %1764 = vmatprep.subr.mxu0 0.0
    %1765 = vmatpush1.msra.mxu0 %v119
    %1766 = vmatprep.subr.mxu0 0.0
    %1767 = vmatpush1.msra.mxu0 %v120
    %1768 = vmatprep.subr.mxu0 0.0
    %1769 = vmatpush1.msra.mxu0 %v121
    %1770 = vmatprep.subr.mxu0 0.0
    %1771 = vmatpush1.msra.mxu0 0.0
    %1772 = vmatprep.subr.mxu0 0.0
    %1773 = vmatpush1.msra.mxu0 0.0
    %1774 = vmatprep.subr.mxu0 0.0
    %1775 = vmatpush1.msra.mxu0 0.0
    %1776 = vmatprep.subr.mxu0 0.0
    %1777 = vmatpush1.msra.mxu0 0.0
    %1778 = vmatprep.subr.mxu0 0.0
    %1779 = vmatpush1.msra.mxu0 0.0
    %1780 = vmatprep.subr.mxu0 0.0
    %1781 = vmatpush1.msra.mxu0 0.0
    %1782 = vmatprep.subr.mxu0 0.0
    %1783 = vmatpush1.msra.mxu0 0.0
    %1784 = vmatprep.subr.mxu0 0.0
    %1785 = vmatpush1.msra.mxu0 0.0
    %1786 = vmatprep.subr.mxu0 0.0
    %1787 = vmatpush1.msra.mxu0 0.0
    %1788 = vmatprep.subr.mxu0 0.0
    %1789 = vmatpush1.msra.mxu0 0.0
    %1790 = vmatprep.subr.mxu0 0.0
    %1791 = vmatpush1.msra.mxu0 0.0
    %1792 = vmatprep.subr.mxu0 0.0
    %1793 = vmatpush1.msra.mxu0 0.0
    %1794 = vmatprep.subr.mxu0 0.0
    %1795 = vmatpush1.msra.mxu0 0.0
    %1796 = vmatprep.subr.mxu0 0.0
    %1797 = vmatpush1.msra.mxu0 0.0
    %1798 = vmatprep.subr.mxu0 0.0
    %1799 = vmatpush1.msra.mxu0 0.0
    %1800 = vmatprep.subr.mxu0 0.0
    %1801 = vmatpush1.msra.mxu0 0.0
    %1802 = vmatprep.subr.mxu0 0.0
    %1803 = vmatpush1.msra.mxu0 0.0
    %1804 = vmatprep.subr.mxu0 0.0
    %1805 = vmatpush1.msra.mxu0 0.0
    %1806 = vmatprep.subr.mxu0 0.0
    %1807 = vmatpush1.msra.mxu0 0.0
    %1808 = vmatprep.subr.mxu0 0.0
    %1809 = vmatpush1.msra.mxu0 0.0
    %1810 = vmatprep.subr.mxu0 0.0
    %1811 = vmatpush1.msra.mxu0 0.0
    %1812 = vmatprep.subr.mxu0 0.0
    %1813 = vmatpush1.msra.mxu0 0.0
    %1814 = vmatprep.subr.mxu0 0.0
    %1815 = vmatpush1.msra.mxu0 0.0
    %1816 = vmatprep.subr.mxu0 0.0
    %1817 = vmatpush1.msra.mxu0 0.0
    %1818 = vmatprep.subr.mxu0 0.0
    %1819 = vmatpush1.msra.mxu0 0.0
    %1820 = vmatprep.subr.mxu0 0.0
    %1821 = vmatpush1.msra.mxu0 0.0
    %1822 = vmatprep.subr.mxu0 0.0
    %1823 = vmatpush1.msra.mxu0 0.0
    %1824 = vmatprep.subr.mxu0 0.0
    %1825 = vmatpush1.msra.mxu0 0.0
    %1826 = vmatprep.mubr.f32.mxu0 0.0
    %1827 = vmatmul.mubr.f32.gmra.mrb[0].mxu0 %v1760
    %v1828 = vpop.f32.mrb[0].mxu0
    %v1829 = vadd.f32 %v1754, %v1828
    %v1830 = vpop.f32.mrb[0].mxu0
    %1831 = vdwg.mxu0
    %v1832 = vadd.f32 %v1829, %v131
    %v1833 = vxor.u32 %v1832, 2147483648
    %v1834 = vmul.f32 %v1833, 1.442695
    %v1835 = vpow.pop %v1834
    %v1836 = vadd.f32 %v1835, 1.0
    %v1837 = vrcp.pop %v1836
    %v1838 = vmul.f32 1.0, %v1837
    %v1839 = vtanh.pop %v1832
    %v1840 = vmul.f32 %v1838, %v1575
    %1842 = vrot.lane.b32.xlu0 %v1839, 64
    %v1843 = vpop.permute.xlu0 %1842
    %v1845 = vmul.f32 %v1838, %v1843
    %1847 = vrot.lane.b32.xlu0 %v1845, 32
    %v1848 = vpop.permute.xlu0 %1847
    %v1850 = vadd.f32 %v1840, %v1848
    %v1851 = vtanh.pop %v1850
    %1853 = vrot.lane.b32.xlu0 %v1851, 64
    %v1854 = vpop.permute.xlu0 %1853
    %v1856 = vmul.f32 %v1838, %v1854
    %1858 = vrot.lane.b32.xlu0 %v1856, 32
    %v1859 = vpop.permute.xlu0 %1858
    %s1861 = scalar_lea.vmem [#allocation3], 32
    %1862 = vst.msk [vmem:[%s1861] sm:$0xff] %vm334, %v1859
    %s1863 = scalar_lea.vmem [#allocation2], 40
    %v1864 = vld [vmem:[%s1863] sm:$0xff]
    %1865 = vmatprep.subr.mxu0 0.0
    %1866 = vmatpush1.msra.mxu0 %v114
    %1867 = vmatprep.subr.mxu0 0.0
    %1868 = vmatpush1.msra.mxu0 %v115
    %1869 = vmatprep.subr.mxu0 0.0
    %1870 = vmatpush1.msra.mxu0 %v116
    %1871 = vmatprep.subr.mxu0 0.0
    %1872 = vmatpush1.msra.mxu0 %v117
    %1873 = vmatprep.subr.mxu0 0.0
    %1874 = vmatpush1.msra.mxu0 0.0
    %1875 = vmatprep.subr.mxu0 0.0
    %1876 = vmatpush1.msra.mxu0 0.0
    %1877 = vmatprep.subr.mxu0 0.0
    %1878 = vmatpush1.msra.mxu0 0.0
    %1879 = vmatprep.subr.mxu0 0.0
    %1880 = vmatpush1.msra.mxu0 0.0
    %1881 = vmatprep.subr.mxu0 0.0
    %1882 = vmatpush1.msra.mxu0 0.0
    %1883 = vmatprep.subr.mxu0 0.0
    %1884 = vmatpush1.msra.mxu0 0.0
    %1885 = vmatprep.subr.mxu0 0.0
    %1886 = vmatpush1.msra.mxu0 0.0
    %1887 = vmatprep.subr.mxu0 0.0
    %1888 = vmatpush1.msra.mxu0 0.0
    %1889 = vmatprep.subr.mxu0 0.0
    %1890 = vmatpush1.msra.mxu0 0.0
    %1891 = vmatprep.subr.mxu0 0.0
    %1892 = vmatpush1.msra.mxu0 0.0
    %1893 = vmatprep.subr.mxu0 0.0
    %1894 = vmatpush1.msra.mxu0 0.0
    %1895 = vmatprep.subr.mxu0 0.0
    %1896 = vmatpush1.msra.mxu0 0.0
    %1897 = vmatprep.subr.mxu0 0.0
    %1898 = vmatpush1.msra.mxu0 0.0
    %1899 = vmatprep.subr.mxu0 0.0
    %1900 = vmatpush1.msra.mxu0 0.0
    %1901 = vmatprep.subr.mxu0 0.0
    %1902 = vmatpush1.msra.mxu0 0.0
    %1903 = vmatprep.subr.mxu0 0.0
    %1904 = vmatpush1.msra.mxu0 0.0
    %1905 = vmatprep.subr.mxu0 0.0
    %1906 = vmatpush1.msra.mxu0 0.0
    %1907 = vmatprep.subr.mxu0 0.0
    %1908 = vmatpush1.msra.mxu0 0.0
    %1909 = vmatprep.subr.mxu0 0.0
    %1910 = vmatpush1.msra.mxu0 0.0
    %1911 = vmatprep.subr.mxu0 0.0
    %1912 = vmatpush1.msra.mxu0 0.0
    %1913 = vmatprep.subr.mxu0 0.0
    %1914 = vmatpush1.msra.mxu0 0.0
    %1915 = vmatprep.subr.mxu0 0.0
    %1916 = vmatpush1.msra.mxu0 0.0
    %1917 = vmatprep.subr.mxu0 0.0
    %1918 = vmatpush1.msra.mxu0 0.0
    %1919 = vmatprep.subr.mxu0 0.0
    %1920 = vmatpush1.msra.mxu0 0.0
    %1921 = vmatprep.subr.mxu0 0.0
    %1922 = vmatpush1.msra.mxu0 0.0
    %1923 = vmatprep.subr.mxu0 0.0
    %1924 = vmatpush1.msra.mxu0 0.0
    %1925 = vmatprep.subr.mxu0 0.0
    %1926 = vmatpush1.msra.mxu0 0.0
    %1927 = vmatprep.subr.mxu0 0.0
    %1928 = vmatpush1.msra.mxu0 0.0
    %1929 = vmatprep.mubr.f32.mxu0 0.0
    %1930 = vmatmul.mubr.f32.gmra.mrb[0].mxu0 %v1760
    %v1931 = vpop.f32.mrb[0].mxu0
    %v1932 = vadd.f32 0.0, %v1931
    %v1933 = vpop.f32.mrb[0].mxu0
    %1934 = vdwg.mxu0
    %v1935 = vadd.f32 %v1864, %v1932
    %v1936 = vxor.u32 %v1935, 2147483648
    %v1937 = vmul.f32 %v1936, 1.442695
    %v1938 = vpow.pop %v1937
    %v1939 = vadd.f32 %v1938, 1.0
    %v1940 = vrcp.pop %v1939
    %v1941 = vmul.f32 1.0, %v1940
    %v1942 = vtanh.pop %v1935
    %v1943 = vmul.f32 %v1941, %v1678
    %1945 = vrot.lane.b32.xlu0 %v1942, 64
    %v1946 = vpop.permute.xlu0 %1945
    %v1948 = vmul.f32 %v1941, %v1946
    %1950 = vrot.lane.b32.xlu0 %v1948, 32
    %v1951 = vpop.permute.xlu0 %1950
    %v1953 = vadd.f32 %v1943, %v1951
    %v1954 = vtanh.pop %v1953
    %1956 = vrot.lane.b32.xlu0 %v1954, 64
    %v1957 = vpop.permute.xlu0 %1956
    %v1959 = vmul.f32 %v1941, %v1957
    %v1960 = vsel %vm334, %v1859, 0
    %1962 = vmatprep.subr.mxu0 0.0
    %1963 = vmatpush1.msra.mxu0 %v122
    %1964 = vmatprep.subr.mxu0 0.0
    %1965 = vmatpush1.msra.mxu0 %v123
    %1966 = vmatprep.subr.mxu0 0.0
    %1967 = vmatpush1.msra.mxu0 %v124
    %1968 = vmatprep.subr.mxu0 0.0
    %1969 = vmatpush1.msra.mxu0 %v125
    %1970 = vmatprep.subr.mxu0 0.0
    %1971 = vmatpush1.msra.mxu0 0.0
    %1972 = vmatprep.subr.mxu0 0.0
    %1973 = vmatpush1.msra.mxu0 0.0
    %1974 = vmatprep.subr.mxu0 0.0
    %1975 = vmatpush1.msra.mxu0 0.0
    %1976 = vmatprep.subr.mxu0 0.0
    %1977 = vmatpush1.msra.mxu0 0.0
    %1978 = vmatprep.subr.mxu0 0.0
    %1979 = vmatpush1.msra.mxu0 0.0
    %1980 = vmatprep.subr.mxu0 0.0
    %1981 = vmatpush1.msra.mxu0 0.0
    %1982 = vmatprep.subr.mxu0 0.0
    %1983 = vmatpush1.msra.mxu0 0.0
    %1984 = vmatprep.subr.mxu0 0.0
    %1985 = vmatpush1.msra.mxu0 0.0
    %1986 = vmatprep.subr.mxu0 0.0
    %1987 = vmatpush1.msra.mxu0 0.0
    %1988 = vmatprep.subr.mxu0 0.0
    %1989 = vmatpush1.msra.mxu0 0.0
    %1990 = vmatprep.subr.mxu0 0.0
    %1991 = vmatpush1.msra.mxu0 0.0
    %1992 = vmatprep.subr.mxu0 0.0
    %1993 = vmatpush1.msra.mxu0 0.0
    %1994 = vmatprep.subr.mxu0 0.0
    %1995 = vmatpush1.msra.mxu0 0.0
    %1996 = vmatprep.subr.mxu0 0.0
    %1997 = vmatpush1.msra.mxu0 0.0
    %1998 = vmatprep.subr.mxu0 0.0
    %1999 = vmatpush1.msra.mxu0 0.0
    %2000 = vmatprep.subr.mxu0 0.0
    %2001 = vmatpush1.msra.mxu0 0.0
    %2002 = vmatprep.subr.mxu0 0.0
    %2003 = vmatpush1.msra.mxu0 0.0
    %2004 = vmatprep.subr.mxu0 0.0
    %2005 = vmatpush1.msra.mxu0 0.0
    %2006 = vmatprep.subr.mxu0 0.0
    %2007 = vmatpush1.msra.mxu0 0.0
    %2008 = vmatprep.subr.mxu0 0.0
    %2009 = vmatpush1.msra.mxu0 0.0
    %2010 = vmatprep.subr.mxu0 0.0
    %2011 = vmatpush1.msra.mxu0 0.0
    %2012 = vmatprep.subr.mxu0 0.0
    %2013 = vmatpush1.msra.mxu0 0.0
    %2014 = vmatprep.subr.mxu0 0.0
    %2015 = vmatpush1.msra.mxu0 0.0
    %2016 = vmatprep.subr.mxu0 0.0
    %2017 = vmatpush1.msra.mxu0 0.0
    %2018 = vmatprep.subr.mxu0 0.0
    %2019 = vmatpush1.msra.mxu0 0.0
    %2020 = vmatprep.subr.mxu0 0.0
    %2021 = vmatpush1.msra.mxu0 0.0
    %2022 = vmatprep.subr.mxu0 0.0
    %2023 = vmatpush1.msra.mxu0 0.0
    %2024 = vmatprep.subr.mxu0 0.0
    %2025 = vmatpush1.msra.mxu0 0.0
    %2026 = vmatprep.mubr.f32.mxu0 0.0
    %2027 = vmatmul.mubr.f32.gmra.mrb[0].mxu0 %v1960
    %v2028 = vpop.f32.mrb[0].mxu0
    %v2029 = vadd.f32 0.0, %v2028
    %v2030 = vpop.f32.mrb[0].mxu0
    %2031 = vdwg.mxu0
    %2033 = vrot.lane.b32.xlu0 %v1959, 32
    %v2034 = vpop.permute.xlu0 %2033
    %v2035 = vsel %vm334, %v2034, 0
    %2037 = vmatprep.subr.mxu0 0.0
    %2038 = vmatpush1.msra.mxu0 %v118
    %2039 = vmatprep.subr.mxu0 0.0
    %2040 = vmatpush1.msra.mxu0 %v119
    %2041 = vmatprep.subr.mxu0 0.0
    %2042 = vmatpush1.msra.mxu0 %v120
    %2043 = vmatprep.subr.mxu0 0.0
    %2044 = vmatpush1.msra.mxu0 %v121
    %2045 = vmatprep.subr.mxu0 0.0
    %2046 = vmatpush1.msra.mxu0 0.0
    %2047 = vmatprep.subr.mxu0 0.0
    %2048 = vmatpush1.msra.mxu0 0.0
    %2049 = vmatprep.subr.mxu0 0.0
    %2050 = vmatpush1.msra.mxu0 0.0
    %2051 = vmatprep.subr.mxu0 0.0
    %2052 = vmatpush1.msra.mxu0 0.0
    %2053 = vmatprep.subr.mxu0 0.0
    %2054 = vmatpush1.msra.mxu0 0.0
    %2055 = vmatprep.subr.mxu0 0.0
    %2056 = vmatpush1.msra.mxu0 0.0
    %2057 = vmatprep.subr.mxu0 0.0
    %2058 = vmatpush1.msra.mxu0 0.0
    %2059 = vmatprep.subr.mxu0 0.0
    %2060 = vmatpush1.msra.mxu0 0.0
    %2061 = vmatprep.subr.mxu0 0.0
    %2062 = vmatpush1.msra.mxu0 0.0
    %2063 = vmatprep.subr.mxu0 0.0
    %2064 = vmatpush1.msra.mxu0 0.0
    %2065 = vmatprep.subr.mxu0 0.0
    %2066 = vmatpush1.msra.mxu0 0.0
    %2067 = vmatprep.subr.mxu0 0.0
    %2068 = vmatpush1.msra.mxu0 0.0
    %2069 = vmatprep.subr.mxu0 0.0
    %2070 = vmatpush1.msra.mxu0 0.0
    %2071 = vmatprep.subr.mxu0 0.0
    %2072 = vmatpush1.msra.mxu0 0.0
    %2073 = vmatprep.subr.mxu0 0.0
    %2074 = vmatpush1.msra.mxu0 0.0
    %2075 = vmatprep.subr.mxu0 0.0
    %2076 = vmatpush1.msra.mxu0 0.0
    %2077 = vmatprep.subr.mxu0 0.0
    %2078 = vmatpush1.msra.mxu0 0.0
    %2079 = vmatprep.subr.mxu0 0.0
    %2080 = vmatpush1.msra.mxu0 0.0
    %2081 = vmatprep.subr.mxu0 0.0
    %2082 = vmatpush1.msra.mxu0 0.0
    %2083 = vmatprep.subr.mxu0 0.0
    %2084 = vmatpush1.msra.mxu0 0.0
    %2085 = vmatprep.subr.mxu0 0.0
    %2086 = vmatpush1.msra.mxu0 0.0
    %2087 = vmatprep.subr.mxu0 0.0
    %2088 = vmatpush1.msra.mxu0 0.0
    %2089 = vmatprep.subr.mxu0 0.0
    %2090 = vmatpush1.msra.mxu0 0.0
    %2091 = vmatprep.subr.mxu0 0.0
    %2092 = vmatpush1.msra.mxu0 0.0
    %2093 = vmatprep.subr.mxu0 0.0
    %2094 = vmatpush1.msra.mxu0 0.0
    %2095 = vmatprep.subr.mxu0 0.0
    %2096 = vmatpush1.msra.mxu0 0.0
    %2097 = vmatprep.subr.mxu0 0.0
    %2098 = vmatpush1.msra.mxu0 0.0
    %2099 = vmatprep.subr.mxu0 0.0
    %2100 = vmatpush1.msra.mxu0 0.0
    %2101 = vmatprep.mubr.f32.mxu0 0.0
    %2102 = vmatmul.mubr.f32.gmra.mrb[0].mxu0 %v2035
    %v2103 = vpop.f32.mrb[0].mxu0
    %v2104 = vadd.f32 %v2029, %v2103
    %v2105 = vpop.f32.mrb[0].mxu0
    %2106 = vdwg.mxu0
    %v2107 = vadd.f32 %v2104, %v131
    %v2108 = vxor.u32 %v2107, 2147483648
    %v2109 = vmul.f32 %v2108, 1.442695
    %v2110 = vpow.pop %v2109
    %v2111 = vadd.f32 %v2110, 1.0
    %v2112 = vrcp.pop %v2111
    %v2113 = vmul.f32 1.0, %v2112
    %v2114 = vtanh.pop %v2107
    %v2115 = vmul.f32 %v2113, %v1850
    %2117 = vrot.lane.b32.xlu0 %v2114, 64
    %v2118 = vpop.permute.xlu0 %2117
    %v2120 = vmul.f32 %v2113, %v2118
    %2122 = vrot.lane.b32.xlu0 %v2120, 32
    %v2123 = vpop.permute.xlu0 %2122
    %v2125 = vadd.f32 %v2115, %v2123
    %v2126 = vtanh.pop %v2125
    %2128 = vrot.lane.b32.xlu0 %v2126, 64
    %v2129 = vpop.permute.xlu0 %2128
    %v2131 = vmul.f32 %v2113, %v2129
    %2133 = vrot.lane.b32.xlu0 %v2131, 32
    %v2134 = vpop.permute.xlu0 %2133
    %s2136 = scalar_lea.vmem [#allocation3], 40
    %2137 = vst.msk [vmem:[%s2136] sm:$0xff] %vm334, %v2134
    %s2138 = scalar_lea.vmem [#allocation2], 48
    %v2139 = vld [vmem:[%s2138] sm:$0xff]
    %2140 = vmatprep.subr.mxu0 0.0
    %2141 = vmatpush1.msra.mxu0 %v114
    %2142 = vmatprep.subr.mxu0 0.0
    %2143 = vmatpush1.msra.mxu0 %v115
    %2144 = vmatprep.subr.mxu0 0.0
    %2145 = vmatpush1.msra.mxu0 %v116
    %2146 = vmatprep.subr.mxu0 0.0
    %2147 = vmatpush1.msra.mxu0 %v117
    %2148 = vmatprep.subr.mxu0 0.0
    %2149 = vmatpush1.msra.mxu0 0.0
    %2150 = vmatprep.subr.mxu0 0.0
    %2151 = vmatpush1.msra.mxu0 0.0
    %2152 = vmatprep.subr.mxu0 0.0
    %2153 = vmatpush1.msra.mxu0 0.0
    %2154 = vmatprep.subr.mxu0 0.0
    %2155 = vmatpush1.msra.mxu0 0.0
    %2156 = vmatprep.subr.mxu0 0.0
    %2157 = vmatpush1.msra.mxu0 0.0
    %2158 = vmatprep.subr.mxu0 0.0
    %2159 = vmatpush1.msra.mxu0 0.0
    %2160 = vmatprep.subr.mxu0 0.0
    %2161 = vmatpush1.msra.mxu0 0.0
    %2162 = vmatprep.subr.mxu0 0.0
    %2163 = vmatpush1.msra.mxu0 0.0
    %2164 = vmatprep.subr.mxu0 0.0
    %2165 = vmatpush1.msra.mxu0 0.0
    %2166 = vmatprep.subr.mxu0 0.0
    %2167 = vmatpush1.msra.mxu0 0.0
    %2168 = vmatprep.subr.mxu0 0.0
    %2169 = vmatpush1.msra.mxu0 0.0
    %2170 = vmatprep.subr.mxu0 0.0
    %2171 = vmatpush1.msra.mxu0 0.0
    %2172 = vmatprep.subr.mxu0 0.0
    %2173 = vmatpush1.msra.mxu0 0.0
    %2174 = vmatprep.subr.mxu0 0.0
    %2175 = vmatpush1.msra.mxu0 0.0
    %2176 = vmatprep.subr.mxu0 0.0
    %2177 = vmatpush1.msra.mxu0 0.0
    %2178 = vmatprep.subr.mxu0 0.0
    %2179 = vmatpush1.msra.mxu0 0.0
    %2180 = vmatprep.subr.mxu0 0.0
    %2181 = vmatpush1.msra.mxu0 0.0
    %2182 = vmatprep.subr.mxu0 0.0
    %2183 = vmatpush1.msra.mxu0 0.0
    %2184 = vmatprep.subr.mxu0 0.0
    %2185 = vmatpush1.msra.mxu0 0.0
    %2186 = vmatprep.subr.mxu0 0.0
    %2187 = vmatpush1.msra.mxu0 0.0
    %2188 = vmatprep.subr.mxu0 0.0
    %2189 = vmatpush1.msra.mxu0 0.0
    %2190 = vmatprep.subr.mxu0 0.0
    %2191 = vmatpush1.msra.mxu0 0.0
    %2192 = vmatprep.subr.mxu0 0.0
    %2193 = vmatpush1.msra.mxu0 0.0
    %2194 = vmatprep.subr.mxu0 0.0
    %2195 = vmatpush1.msra.mxu0 0.0
    %2196 = vmatprep.subr.mxu0 0.0
    %2197 = vmatpush1.msra.mxu0 0.0
    %2198 = vmatprep.subr.mxu0 0.0
    %2199 = vmatpush1.msra.mxu0 0.0
    %2200 = vmatprep.subr.mxu0 0.0
    %2201 = vmatpush1.msra.mxu0 0.0
    %2202 = vmatprep.subr.mxu0 0.0
    %2203 = vmatpush1.msra.mxu0 0.0
    %2204 = vmatprep.mubr.f32.mxu0 0.0
    %2205 = vmatmul.mubr.f32.gmra.mrb[0].mxu0 %v2035
    %v2206 = vpop.f32.mrb[0].mxu0
    %v2207 = vadd.f32 0.0, %v2206
    %v2208 = vpop.f32.mrb[0].mxu0
    %2209 = vdwg.mxu0
    %v2210 = vadd.f32 %v2139, %v2207
    %v2211 = vxor.u32 %v2210, 2147483648
    %v2212 = vmul.f32 %v2211, 1.442695
    %v2213 = vpow.pop %v2212
    %v2214 = vadd.f32 %v2213, 1.0
    %v2215 = vrcp.pop %v2214
    %v2216 = vmul.f32 1.0, %v2215
    %v2217 = vtanh.pop %v2210
    %v2218 = vmul.f32 %v2216, %v1953
    %2220 = vrot.lane.b32.xlu0 %v2217, 64
    %v2221 = vpop.permute.xlu0 %2220
    %v2223 = vmul.f32 %v2216, %v2221
    %2225 = vrot.lane.b32.xlu0 %v2223, 32
    %v2226 = vpop.permute.xlu0 %2225
    %v2228 = vadd.f32 %v2218, %v2226
    %v2229 = vtanh.pop %v2228
    %2231 = vrot.lane.b32.xlu0 %v2229, 64
    %v2232 = vpop.permute.xlu0 %2231
    %v2234 = vmul.f32 %v2216, %v2232
    %v2235 = vsel %vm334, %v2134, 0
    %2237 = vmatprep.subr.mxu0 0.0
    %2238 = vmatpush1.msra.mxu0 %v122
    %2239 = vmatprep.subr.mxu0 0.0
    %2240 = vmatpush1.msra.mxu0 %v123
    %2241 = vmatprep.subr.mxu0 0.0
    %2242 = vmatpush1.msra.mxu0 %v124
    %2243 = vmatprep.subr.mxu0 0.0
    %2244 = vmatpush1.msra.mxu0 %v125
    %2245 = vmatprep.subr.mxu0 0.0
    %2246 = vmatpush1.msra.mxu0 0.0
    %2247 = vmatprep.subr.mxu0 0.0
    %2248 = vmatpush1.msra.mxu0 0.0
    %2249 = vmatprep.subr.mxu0 0.0
    %2250 = vmatpush1.msra.mxu0 0.0
    %2251 = vmatprep.subr.mxu0 0.0
    %2252 = vmatpush1.msra.mxu0 0.0
    %2253 = vmatprep.subr.mxu0 0.0
    %2254 = vmatpush1.msra.mxu0 0.0
    %2255 = vmatprep.subr.mxu0 0.0
    %2256 = vmatpush1.msra.mxu0 0.0
    %2257 = vmatprep.subr.mxu0 0.0
    %2258 = vmatpush1.msra.mxu0 0.0
    %2259 = vmatprep.subr.mxu0 0.0
    %2260 = vmatpush1.msra.mxu0 0.0
    %2261 = vmatprep.subr.mxu0 0.0
    %2262 = vmatpush1.msra.mxu0 0.0
    %2263 = vmatprep.subr.mxu0 0.0
    %2264 = vmatpush1.msra.mxu0 0.0
    %2265 = vmatprep.subr.mxu0 0.0
    %2266 = vmatpush1.msra.mxu0 0.0
    %2267 = vmatprep.subr.mxu0 0.0
    %2268 = vmatpush1.msra.mxu0 0.0
    %2269 = vmatprep.subr.mxu0 0.0
    %2270 = vmatpush1.msra.mxu0 0.0
    %2271 = vmatprep.subr.mxu0 0.0
    %2272 = vmatpush1.msra.mxu0 0.0
    %2273 = vmatprep.subr.mxu0 0.0
    %2274 = vmatpush1.msra.mxu0 0.0
    %2275 = vmatprep.subr.mxu0 0.0
    %2276 = vmatpush1.msra.mxu0 0.0
    %2277 = vmatprep.subr.mxu0 0.0
    %2278 = vmatpush1.msra.mxu0 0.0
    %2279 = vmatprep.subr.mxu0 0.0
    %2280 = vmatpush1.msra.mxu0 0.0
    %2281 = vmatprep.subr.mxu0 0.0
    %2282 = vmatpush1.msra.mxu0 0.0
    %2283 = vmatprep.subr.mxu0 0.0
    %2284 = vmatpush1.msra.mxu0 0.0
    %2285 = vmatprep.subr.mxu0 0.0
    %2286 = vmatpush1.msra.mxu0 0.0
    %2287 = vmatprep.subr.mxu0 0.0
    %2288 = vmatpush1.msra.mxu0 0.0
    %2289 = vmatprep.subr.mxu0 0.0
    %2290 = vmatpush1.msra.mxu0 0.0
    %2291 = vmatprep.subr.mxu0 0.0
    %2292 = vmatpush1.msra.mxu0 0.0
    %2293 = vmatprep.subr.mxu0 0.0
    %2294 = vmatpush1.msra.mxu0 0.0
    %2295 = vmatprep.subr.mxu0 0.0
    %2296 = vmatpush1.msra.mxu0 0.0
    %2297 = vmatprep.subr.mxu0 0.0
    %2298 = vmatpush1.msra.mxu0 0.0
    %2299 = vmatprep.subr.mxu0 0.0
    %2300 = vmatpush1.msra.mxu0 0.0
    %2301 = vmatprep.mubr.f32.mxu0 0.0
    %2302 = vmatmul.mubr.f32.gmra.mrb[0].mxu0 %v2235
    %v2303 = vpop.f32.mrb[0].mxu0
    %v2304 = vadd.f32 0.0, %v2303
    %v2305 = vpop.f32.mrb[0].mxu0
    %2306 = vdwg.mxu0
    %2308 = vrot.lane.b32.xlu0 %v2234, 32
    %v2309 = vpop.permute.xlu0 %2308
    %v2310 = vsel %vm334, %v2309, 0
    %2312 = vmatprep.subr.mxu0 0.0
    %2313 = vmatpush1.msra.mxu0 %v118
    %2314 = vmatprep.subr.mxu0 0.0
    %2315 = vmatpush1.msra.mxu0 %v119
    %2316 = vmatprep.subr.mxu0 0.0
    %2317 = vmatpush1.msra.mxu0 %v120
    %2318 = vmatprep.subr.mxu0 0.0
    %2319 = vmatpush1.msra.mxu0 %v121
    %2320 = vmatprep.subr.mxu0 0.0
    %2321 = vmatpush1.msra.mxu0 0.0
    %2322 = vmatprep.subr.mxu0 0.0
    %2323 = vmatpush1.msra.mxu0 0.0
    %2324 = vmatprep.subr.mxu0 0.0
    %2325 = vmatpush1.msra.mxu0 0.0
    %2326 = vmatprep.subr.mxu0 0.0
    %2327 = vmatpush1.msra.mxu0 0.0
    %2328 = vmatprep.subr.mxu0 0.0
    %2329 = vmatpush1.msra.mxu0 0.0
    %2330 = vmatprep.subr.mxu0 0.0
    %2331 = vmatpush1.msra.mxu0 0.0
    %2332 = vmatprep.subr.mxu0 0.0
    %2333 = vmatpush1.msra.mxu0 0.0
    %2334 = vmatprep.subr.mxu0 0.0
    %2335 = vmatpush1.msra.mxu0 0.0
    %2336 = vmatprep.subr.mxu0 0.0
    %2337 = vmatpush1.msra.mxu0 0.0
    %2338 = vmatprep.subr.mxu0 0.0
    %2339 = vmatpush1.msra.mxu0 0.0
    %2340 = vmatprep.subr.mxu0 0.0
    %2341 = vmatpush1.msra.mxu0 0.0
    %2342 = vmatprep.subr.mxu0 0.0
    %2343 = vmatpush1.msra.mxu0 0.0
    %2344 = vmatprep.subr.mxu0 0.0
    %2345 = vmatpush1.msra.mxu0 0.0
    %2346 = vmatprep.subr.mxu0 0.0
    %2347 = vmatpush1.msra.mxu0 0.0
    %2348 = vmatprep.subr.mxu0 0.0
    %2349 = vmatpush1.msra.mxu0 0.0
    %2350 = vmatprep.subr.mxu0 0.0
    %2351 = vmatpush1.msra.mxu0 0.0
    %2352 = vmatprep.subr.mxu0 0.0
    %2353 = vmatpush1.msra.mxu0 0.0
    %2354 = vmatprep.subr.mxu0 0.0
    %2355 = vmatpush1.msra.mxu0 0.0
    %2356 = vmatprep.subr.mxu0 0.0
    %2357 = vmatpush1.msra.mxu0 0.0
    %2358 = vmatprep.subr.mxu0 0.0
    %2359 = vmatpush1.msra.mxu0 0.0
    %2360 = vmatprep.subr.mxu0 0.0
    %2361 = vmatpush1.msra.mxu0 0.0
    %2362 = vmatprep.subr.mxu0 0.0
    %2363 = vmatpush1.msra.mxu0 0.0
    %2364 = vmatprep.subr.mxu0 0.0
    %2365 = vmatpush1.msra.mxu0 0.0
    %2366 = vmatprep.subr.mxu0 0.0
    %2367 = vmatpush1.msra.mxu0 0.0
    %2368 = vmatprep.subr.mxu0 0.0
    %2369 = vmatpush1.msra.mxu0 0.0
    %2370 = vmatprep.subr.mxu0 0.0
    %2371 = vmatpush1.msra.mxu0 0.0
    %2372 = vmatprep.subr.mxu0 0.0
    %2373 = vmatpush1.msra.mxu0 0.0
    %2374 = vmatprep.subr.mxu0 0.0
    %2375 = vmatpush1.msra.mxu0 0.0
    %2376 = vmatprep.mubr.f32.mxu0 0.0
    %2377 = vmatmul.mubr.f32.gmra.mrb[0].mxu0 %v2310
    %v2378 = vpop.f32.mrb[0].mxu0
    %v2379 = vadd.f32 %v2304, %v2378
    %v2380 = vpop.f32.mrb[0].mxu0
    %2381 = vdwg.mxu0
    %v2382 = vadd.f32 %v2379, %v131
    %v2383 = vxor.u32 %v2382, 2147483648
    %v2384 = vmul.f32 %v2383, 1.442695
    %v2385 = vpow.pop %v2384
    %v2386 = vadd.f32 %v2385, 1.0
    %v2387 = vrcp.pop %v2386
    %v2388 = vmul.f32 1.0, %v2387
    %v2389 = vtanh.pop %v2382
    %v2390 = vmul.f32 %v2388, %v2125
    %2392 = vrot.lane.b32.xlu0 %v2389, 64
    %v2393 = vpop.permute.xlu0 %2392
    %v2395 = vmul.f32 %v2388, %v2393
    %2397 = vrot.lane.b32.xlu0 %v2395, 32
    %v2398 = vpop.permute.xlu0 %2397
    %v2400 = vadd.f32 %v2390, %v2398
    %v2401 = vtanh.pop %v2400
    %2403 = vrot.lane.b32.xlu0 %v2401, 64
    %v2404 = vpop.permute.xlu0 %2403
    %v2406 = vmul.f32 %v2388, %v2404
    %2408 = vrot.lane.b32.xlu0 %v2406, 32
    %v2409 = vpop.permute.xlu0 %2408
    %s2411 = scalar_lea.vmem [#allocation3], 48
    %2412 = vst.msk [vmem:[%s2411] sm:$0xff] %vm334, %v2409
    %s2413 = scalar_lea.vmem [#allocation2], 56
    %v2414 = vld [vmem:[%s2413] sm:$0xff]
    %2415 = vmatprep.subr.mxu0 0.0
    %2416 = vmatpush1.msra.mxu0 %v114
    %2417 = vmatprep.subr.mxu0 0.0
    %2418 = vmatpush1.msra.mxu0 %v115
    %2419 = vmatprep.subr.mxu0 0.0
    %2420 = vmatpush1.msra.mxu0 %v116
    %2421 = vmatprep.subr.mxu0 0.0
    %2422 = vmatpush1.msra.mxu0 %v117
    %2423 = vmatprep.subr.mxu0 0.0
    %2424 = vmatpush1.msra.mxu0 0.0
    %2425 = vmatprep.subr.mxu0 0.0
    %2426 = vmatpush1.msra.mxu0 0.0
    %2427 = vmatprep.subr.mxu0 0.0
    %2428 = vmatpush1.msra.mxu0 0.0
    %2429 = vmatprep.subr.mxu0 0.0
    %2430 = vmatpush1.msra.mxu0 0.0
    %2431 = vmatprep.subr.mxu0 0.0
    %2432 = vmatpush1.msra.mxu0 0.0
    %2433 = vmatprep.subr.mxu0 0.0
    %2434 = vmatpush1.msra.mxu0 0.0
    %2435 = vmatprep.subr.mxu0 0.0
    %2436 = vmatpush1.msra.mxu0 0.0
    %2437 = vmatprep.subr.mxu0 0.0
    %2438 = vmatpush1.msra.mxu0 0.0
    %2439 = vmatprep.subr.mxu0 0.0
    %2440 = vmatpush1.msra.mxu0 0.0
    %2441 = vmatprep.subr.mxu0 0.0
    %2442 = vmatpush1.msra.mxu0 0.0
    %2443 = vmatprep.subr.mxu0 0.0
    %2444 = vmatpush1.msra.mxu0 0.0
    %2445 = vmatprep.subr.mxu0 0.0
    %2446 = vmatpush1.msra.mxu0 0.0
    %2447 = vmatprep.subr.mxu0 0.0
    %2448 = vmatpush1.msra.mxu0 0.0
    %2449 = vmatprep.subr.mxu0 0.0
    %2450 = vmatpush1.msra.mxu0 0.0
    %2451 = vmatprep.subr.mxu0 0.0
    %2452 = vmatpush1.msra.mxu0 0.0
    %2453 = vmatprep.subr.mxu0 0.0
    %2454 = vmatpush1.msra.mxu0 0.0
    %2455 = vmatprep.subr.mxu0 0.0
    %2456 = vmatpush1.msra.mxu0 0.0
    %2457 = vmatprep.subr.mxu0 0.0
    %2458 = vmatpush1.msra.mxu0 0.0
    %2459 = vmatprep.subr.mxu0 0.0
    %2460 = vmatpush1.msra.mxu0 0.0
    %2461 = vmatprep.subr.mxu0 0.0
    %2462 = vmatpush1.msra.mxu0 0.0
    %2463 = vmatprep.subr.mxu0 0.0
    %2464 = vmatpush1.msra.mxu0 0.0
    %2465 = vmatprep.subr.mxu0 0.0
    %2466 = vmatpush1.msra.mxu0 0.0
    %2467 = vmatprep.subr.mxu0 0.0
    %2468 = vmatpush1.msra.mxu0 0.0
    %2469 = vmatprep.subr.mxu0 0.0
    %2470 = vmatpush1.msra.mxu0 0.0
    %2471 = vmatprep.subr.mxu0 0.0
    %2472 = vmatpush1.msra.mxu0 0.0
    %2473 = vmatprep.subr.mxu0 0.0
    %2474 = vmatpush1.msra.mxu0 0.0
    %2475 = vmatprep.subr.mxu0 0.0
    %2476 = vmatpush1.msra.mxu0 0.0
    %2477 = vmatprep.subr.mxu0 0.0
    %2478 = vmatpush1.msra.mxu0 0.0
    %2479 = vmatprep.mubr.f32.mxu0 0.0
    %2480 = vmatmul.mubr.f32.gmra.mrb[0].mxu0 %v2310
    %v2481 = vpop.f32.mrb[0].mxu0
    %v2482 = vadd.f32 0.0, %v2481
    %v2483 = vpop.f32.mrb[0].mxu0
    %2484 = vdwg.mxu0
    %v2485 = vadd.f32 %v2414, %v2482
    %v2486 = vxor.u32 %v2485, 2147483648
    %v2487 = vmul.f32 %v2486, 1.442695
    %v2488 = vpow.pop %v2487
    %v2489 = vadd.f32 %v2488, 1.0
    %v2490 = vrcp.pop %v2489
    %v2491 = vmul.f32 1.0, %v2490
    %v2492 = vtanh.pop %v2485
    %v2493 = vmul.f32 %v2491, %v2228
    %2495 = vrot.lane.b32.xlu0 %v2492, 64
    %v2496 = vpop.permute.xlu0 %2495
    %v2498 = vmul.f32 %v2491, %v2496
    %2500 = vrot.lane.b32.xlu0 %v2498, 32
    %v2501 = vpop.permute.xlu0 %2500
    %v2503 = vadd.f32 %v2493, %v2501
    %v2504 = vtanh.pop %v2503
    %2506 = vrot.lane.b32.xlu0 %v2504, 64
    %v2507 = vpop.permute.xlu0 %2506
    %v2509 = vmul.f32 %v2491, %v2507
    %v2510 = vsel %vm334, %v2409, 0
    %2512 = vmatprep.subr.mxu0 0.0
    %2513 = vmatpush1.msra.mxu0 %v122
    %2514 = vmatprep.subr.mxu0 0.0
    %2515 = vmatpush1.msra.mxu0 %v123
    %2516 = vmatprep.subr.mxu0 0.0
    %2517 = vmatpush1.msra.mxu0 %v124
    %2518 = vmatprep.subr.mxu0 0.0
    %2519 = vmatpush1.msra.mxu0 %v125
    %2520 = vmatprep.subr.mxu0 0.0
    %2521 = vmatpush1.msra.mxu0 0.0
    %2522 = vmatprep.subr.mxu0 0.0
    %2523 = vmatpush1.msra.mxu0 0.0
    %2524 = vmatprep.subr.mxu0 0.0
    %2525 = vmatpush1.msra.mxu0 0.0
    %2526 = vmatprep.subr.mxu0 0.0
    %2527 = vmatpush1.msra.mxu0 0.0
    %2528 = vmatprep.subr.mxu0 0.0
    %2529 = vmatpush1.msra.mxu0 0.0
    %2530 = vmatprep.subr.mxu0 0.0
    %2531 = vmatpush1.msra.mxu0 0.0
    %2532 = vmatprep.subr.mxu0 0.0
    %2533 = vmatpush1.msra.mxu0 0.0
    %2534 = vmatprep.subr.mxu0 0.0
    %2535 = vmatpush1.msra.mxu0 0.0
    %2536 = vmatprep.subr.mxu0 0.0
    %2537 = vmatpush1.msra.mxu0 0.0
    %2538 = vmatprep.subr.mxu0 0.0
    %2539 = vmatpush1.msra.mxu0 0.0
    %2540 = vmatprep.subr.mxu0 0.0
    %2541 = vmatpush1.msra.mxu0 0.0
    %2542 = vmatprep.subr.mxu0 0.0
    %2543 = vmatpush1.msra.mxu0 0.0
    %2544 = vmatprep.subr.mxu0 0.0
    %2545 = vmatpush1.msra.mxu0 0.0
    %2546 = vmatprep.subr.mxu0 0.0
    %2547 = vmatpush1.msra.mxu0 0.0
    %2548 = vmatprep.subr.mxu0 0.0
    %2549 = vmatpush1.msra.mxu0 0.0
    %2550 = vmatprep.subr.mxu0 0.0
    %2551 = vmatpush1.msra.mxu0 0.0
    %2552 = vmatprep.subr.mxu0 0.0
    %2553 = vmatpush1.msra.mxu0 0.0
    %2554 = vmatprep.subr.mxu0 0.0
    %2555 = vmatpush1.msra.mxu0 0.0
    %2556 = vmatprep.subr.mxu0 0.0
    %2557 = vmatpush1.msra.mxu0 0.0
    %2558 = vmatprep.subr.mxu0 0.0
    %2559 = vmatpush1.msra.mxu0 0.0
    %2560 = vmatprep.subr.mxu0 0.0
    %2561 = vmatpush1.msra.mxu0 0.0
    %2562 = vmatprep.subr.mxu0 0.0
    %2563 = vmatpush1.msra.mxu0 0.0
    %2564 = vmatprep.subr.mxu0 0.0
    %2565 = vmatpush1.msra.mxu0 0.0
    %2566 = vmatprep.subr.mxu0 0.0
    %2567 = vmatpush1.msra.mxu0 0.0
    %2568 = vmatprep.subr.mxu0 0.0
    %2569 = vmatpush1.msra.mxu0 0.0
    %2570 = vmatprep.subr.mxu0 0.0
    %2571 = vmatpush1.msra.mxu0 0.0
    %2572 = vmatprep.subr.mxu0 0.0
    %2573 = vmatpush1.msra.mxu0 0.0
    %2574 = vmatprep.subr.mxu0 0.0
    %2575 = vmatpush1.msra.mxu0 0.0
    %2576 = vmatprep.mubr.f32.mxu0 0.0
    %2577 = vmatmul.mubr.f32.gmra.mrb[0].mxu0 %v2510
    %v2578 = vpop.f32.mrb[0].mxu0
    %v2579 = vadd.f32 0.0, %v2578
    %v2580 = vpop.f32.mrb[0].mxu0
    %2581 = vdwg.mxu0
    %2583 = vrot.lane.b32.xlu0 %v2509, 32
    %v2584 = vpop.permute.xlu0 %2583
    %v2585 = vsel %vm334, %v2584, 0
    %2587 = vmatprep.subr.mxu0 0.0
    %2588 = vmatpush1.msra.mxu0 %v118
    %2589 = vmatprep.subr.mxu0 0.0
    %2590 = vmatpush1.msra.mxu0 %v119
    %2591 = vmatprep.subr.mxu0 0.0
    %2592 = vmatpush1.msra.mxu0 %v120
    %2593 = vmatprep.subr.mxu0 0.0
    %2594 = vmatpush1.msra.mxu0 %v121
    %2595 = vmatprep.subr.mxu0 0.0
    %2596 = vmatpush1.msra.mxu0 0.0
    %2597 = vmatprep.subr.mxu0 0.0
    %2598 = vmatpush1.msra.mxu0 0.0
    %2599 = vmatprep.subr.mxu0 0.0
    %2600 = vmatpush1.msra.mxu0 0.0
    %2601 = vmatprep.subr.mxu0 0.0
    %2602 = vmatpush1.msra.mxu0 0.0
    %2603 = vmatprep.subr.mxu0 0.0
    %2604 = vmatpush1.msra.mxu0 0.0
    %2605 = vmatprep.subr.mxu0 0.0
    %2606 = vmatpush1.msra.mxu0 0.0
    %2607 = vmatprep.subr.mxu0 0.0
    %2608 = vmatpush1.msra.mxu0 0.0
    %2609 = vmatprep.subr.mxu0 0.0
    %2610 = vmatpush1.msra.mxu0 0.0
    %2611 = vmatprep.subr.mxu0 0.0
    %2612 = vmatpush1.msra.mxu0 0.0
    %2613 = vmatprep.subr.mxu0 0.0
    %2614 = vmatpush1.msra.mxu0 0.0
    %2615 = vmatprep.subr.mxu0 0.0
    %2616 = vmatpush1.msra.mxu0 0.0
    %2617 = vmatprep.subr.mxu0 0.0
    %2618 = vmatpush1.msra.mxu0 0.0
    %2619 = vmatprep.subr.mxu0 0.0
    %2620 = vmatpush1.msra.mxu0 0.0
    %2621 = vmatprep.subr.mxu0 0.0
    %2622 = vmatpush1.msra.mxu0 0.0
    %2623 = vmatprep.subr.mxu0 0.0
    %2624 = vmatpush1.msra.mxu0 0.0
    %2625 = vmatprep.subr.mxu0 0.0
    %2626 = vmatpush1.msra.mxu0 0.0
    %2627 = vmatprep.subr.mxu0 0.0
    %2628 = vmatpush1.msra.mxu0 0.0
    %2629 = vmatprep.subr.mxu0 0.0
    %2630 = vmatpush1.msra.mxu0 0.0
    %2631 = vmatprep.subr.mxu0 0.0
    %2632 = vmatpush1.msra.mxu0 0.0
    %2633 = vmatprep.subr.mxu0 0.0
    %2634 = vmatpush1.msra.mxu0 0.0
    %2635 = vmatprep.subr.mxu0 0.0
    %2636 = vmatpush1.msra.mxu0 0.0
    %2637 = vmatprep.subr.mxu0 0.0
    %2638 = vmatpush1.msra.mxu0 0.0
    %2639 = vmatprep.subr.mxu0 0.0
    %2640 = vmatpush1.msra.mxu0 0.0
    %2641 = vmatprep.subr.mxu0 0.0
    %2642 = vmatpush1.msra.mxu0 0.0
    %2643 = vmatprep.subr.mxu0 0.0
    %2644 = vmatpush1.msra.mxu0 0.0
    %2645 = vmatprep.subr.mxu0 0.0
    %2646 = vmatpush1.msra.mxu0 0.0
    %2647 = vmatprep.subr.mxu0 0.0
    %2648 = vmatpush1.msra.mxu0 0.0
    %2649 = vmatprep.subr.mxu0 0.0
    %2650 = vmatpush1.msra.mxu0 0.0
    %2651 = vmatprep.mubr.f32.mxu0 0.0
    %2652 = vmatmul.mubr.f32.gmra.mrb[0].mxu0 %v2585
    %v2653 = vpop.f32.mrb[0].mxu0
    %v2654 = vadd.f32 %v2579, %v2653
    %v2655 = vpop.f32.mrb[0].mxu0
    %2656 = vdwg.mxu0
    %v2657 = vadd.f32 %v2654, %v131
    %v2658 = vxor.u32 %v2657, 2147483648
    %v2659 = vmul.f32 %v2658, 1.442695
    %v2660 = vpow.pop %v2659
    %v2661 = vadd.f32 %v2660, 1.0
    %v2662 = vrcp.pop %v2661
    %v2663 = vmul.f32 1.0, %v2662
    %v2664 = vtanh.pop %v2657
    %v2665 = vmul.f32 %v2663, %v2400
    %2667 = vrot.lane.b32.xlu0 %v2664, 64
    %v2668 = vpop.permute.xlu0 %2667
    %v2670 = vmul.f32 %v2663, %v2668
    %2672 = vrot.lane.b32.xlu0 %v2670, 32
    %v2673 = vpop.permute.xlu0 %2672
    %v2675 = vadd.f32 %v2665, %v2673
    %v2676 = vtanh.pop %v2675
    %2678 = vrot.lane.b32.xlu0 %v2676, 64
    %v2679 = vpop.permute.xlu0 %2678
    %v2681 = vmul.f32 %v2663, %v2679
    %2683 = vrot.lane.b32.xlu0 %v2681, 32
    %v2684 = vpop.permute.xlu0 %2683
    %s2686 = scalar_lea.vmem [#allocation3], 56
    %2687 = vst.msk [vmem:[%s2686] sm:$0xff] %vm334, %v2684
    %2689 = vst.msk [vmem:[#allocation14] sm:$0xff] %vm334, %v2584
    %s2690 = scalar_lea.vmem [#allocation14], 8
    %2691 = vst.msk [vmem:[%s2690] sm:$0xff] %vm334, %v2684
    %2693 = vrot.lane.b32.xlu0 %v2503, 96
    %v2694 = vpop.permute.xlu0 %2693
    %2696 = vst.msk [vmem:[#allocation16] sm:$0xff] %vm334, %v2694
    %2698 = vrot.lane.b32.xlu0 %v2675, 96
    %v2699 = vpop.permute.xlu0 %2698
    %s2701 = scalar_lea.vmem [#allocation16], 8
    %2702 = vst.msk [vmem:[%s2701] sm:$0xff] %vm334, %v2699
    %v2703 = vld [vmem:[#allocation3] sm:$0xff]
    %v2704 = vld [vmem:[#allocation3 + $0x8] sm:$0xff]
    %v2705 = vld [vmem:[#allocation3 + $0x10] sm:$0xff]
    %v2706 = vld [vmem:[#allocation3 + $0x18] sm:$0xff]
    %v2707 = vld [vmem:[#allocation3 + $0x20] sm:$0xff]
    %v2708 = vld [vmem:[#allocation3 + $0x28] sm:$0xff]
    %v2709 = vld [vmem:[#allocation3 + $0x30] sm:$0xff]
    %v2710 = vld [vmem:[#allocation3 + $0x38] sm:$0xff]
    %v2711 = vld [vmem:[%s10] sm:$0xff]
    %v2712 = vld [vmem:[%s10 + $0x8] sm:$0xff]
    %v2713 = vld [vmem:[%s10 + $0x10] sm:$0xff]
    %v2714 = vld [vmem:[%s10 + $0x18] sm:$0xff]
    %v2715 = vld [vmem:[%s11] sm:$0x1]
    %v2717 = vlaneseq
    %v2718 = vshrl.u32 %v2717, 7
    %v2719 = vsub.s32 0, %v2718
    %v2720 = vrot.slane %v2715, %v2719
    %v2723 = vsel %vm334, %v2703, 0
    %v2726 = vsel %vm334, %v2704, 0
    %v2729 = vsel %vm334, %v2705, 0
    %v2732 = vsel %vm334, %v2706, 0
    %v2735 = vsel %vm334, %v2707, 0
    %v2738 = vsel %vm334, %v2708, 0
    %v2741 = vsel %vm334, %v2709, 0
    %v2744 = vsel %vm334, %v2710, 0
    %2746 = vmatprep.subr.mxu0 0.0
    %2747 = vmatpush1.msra.mxu0 %v2711
    %2748 = vmatprep.subr.mxu0 0.0
    %2749 = vmatpush1.msra.mxu0 %v2712
    %2750 = vmatprep.subr.mxu0 0.0
    %2751 = vmatpush1.msra.mxu0 %v2713
    %2752 = vmatprep.subr.mxu0 0.0
    %2753 = vmatpush1.msra.mxu0 %v2714
    %2754 = vmatprep.subr.mxu0 0.0
    %2755 = vmatpush1.msra.mxu0 0.0
    %2756 = vmatprep.subr.mxu0 0.0
    %2757 = vmatpush1.msra.mxu0 0.0
    %2758 = vmatprep.subr.mxu0 0.0
    %2759 = vmatpush1.msra.mxu0 0.0
    %2760 = vmatprep.subr.mxu0 0.0
    %2761 = vmatpush1.msra.mxu0 0.0
    %2762 = vmatprep.subr.mxu0 0.0
    %2763 = vmatpush1.msra.mxu0 0.0
    %2764 = vmatprep.subr.mxu0 0.0
    %2765 = vmatpush1.msra.mxu0 0.0
    %2766 = vmatprep.subr.mxu0 0.0
    %2767 = vmatpush1.msra.mxu0 0.0
    %2768 = vmatprep.subr.mxu0 0.0
    %2769 = vmatpush1.msra.mxu0 0.0
    %2770 = vmatprep.subr.mxu0 0.0
    %2771 = vmatpush1.msra.mxu0 0.0
    %2772 = vmatprep.subr.mxu0 0.0
    %2773 = vmatpush1.msra.mxu0 0.0
    %2774 = vmatprep.subr.mxu0 0.0
    %2775 = vmatpush1.msra.mxu0 0.0
    %2776 = vmatprep.subr.mxu0 0.0
    %2777 = vmatpush1.msra.mxu0 0.0
    %2778 = vmatprep.subr.mxu0 0.0
    %2779 = vmatpush1.msra.mxu0 0.0
    %2780 = vmatprep.subr.mxu0 0.0
    %2781 = vmatpush1.msra.mxu0 0.0
    %2782 = vmatprep.subr.mxu0 0.0
    %2783 = vmatpush1.msra.mxu0 0.0
    %2784 = vmatprep.subr.mxu0 0.0
    %2785 = vmatpush1.msra.mxu0 0.0
    %2786 = vmatprep.subr.mxu0 0.0
    %2787 = vmatpush1.msra.mxu0 0.0
    %2788 = vmatprep.subr.mxu0 0.0
    %2789 = vmatpush1.msra.mxu0 0.0
    %2790 = vmatprep.subr.mxu0 0.0
    %2791 = vmatpush1.msra.mxu0 0.0
    %2792 = vmatprep.subr.mxu0 0.0
    %2793 = vmatpush1.msra.mxu0 0.0
    %2794 = vmatprep.subr.mxu0 0.0
    %2795 = vmatpush1.msra.mxu0 0.0
    %2796 = vmatprep.subr.mxu0 0.0
    %2797 = vmatpush1.msra.mxu0 0.0
    %2798 = vmatprep.subr.mxu0 0.0
    %2799 = vmatpush1.msra.mxu0 0.0
    %2800 = vmatprep.subr.mxu0 0.0
    %2801 = vmatpush1.msra.mxu0 0.0
    %2802 = vmatprep.subr.mxu0 0.0
    %2803 = vmatpush1.msra.mxu0 0.0
    %2804 = vmatprep.subr.mxu0 0.0
    %2805 = vmatpush1.msra.mxu0 0.0
    %2806 = vmatprep.subr.mxu0 0.0
    %2807 = vmatpush1.msra.mxu0 0.0
    %2808 = vmatprep.subr.mxu0 0.0
    %2809 = vmatpush1.msra.mxu0 0.0
    %2810 = vmatprep.mubr.f32.mxu0 0.0
    %2811 = vmatmul.mubr.f32.gmra.mrb[0].mxu0 %v2723
    %v2812 = vpop.f32.mrb[0].mxu0
    %v2813 = vadd.f32 %v2720, %v2812
    %v2814 = vpop.f32.mrb[0].mxu0
    %2815 = vmatprep.mubr.f32.mxu0 0.0
    %2816 = vmatmul.mubr.f32.gmra.mrb[0].mxu0 %v2726
    %v2817 = vpop.f32.mrb[0].mxu0
    %v2818 = vadd.f32 %v2720, %v2817
    %v2819 = vpop.f32.mrb[0].mxu0
    %2820 = vmatprep.mubr.f32.mxu0 0.0
    %2821 = vmatmul.mubr.f32.gmra.mrb[0].mxu0 %v2729
    %v2822 = vpop.f32.mrb[0].mxu0
    %v2823 = vadd.f32 %v2720, %v2822
    %v2824 = vpop.f32.mrb[0].mxu0
    %2825 = vmatprep.mubr.f32.mxu0 0.0
    %2826 = vmatmul.mubr.f32.gmra.mrb[0].mxu0 %v2732
    %v2827 = vpop.f32.mrb[0].mxu0
    %v2828 = vadd.f32 %v2720, %v2827
    %v2829 = vpop.f32.mrb[0].mxu0
    %2830 = vmatprep.mubr.f32.mxu0 0.0
    %2831 = vmatmul.mubr.f32.gmra.mrb[0].mxu0 %v2735
    %v2832 = vpop.f32.mrb[0].mxu0
    %v2833 = vadd.f32 %v2720, %v2832
    %v2834 = vpop.f32.mrb[0].mxu0
    %2835 = vmatprep.mubr.f32.mxu0 0.0
    %2836 = vmatmul.mubr.f32.gmra.mrb[0].mxu0 %v2738
    %v2837 = vpop.f32.mrb[0].mxu0
    %v2838 = vadd.f32 %v2720, %v2837
    %v2839 = vpop.f32.mrb[0].mxu0
    %2840 = vmatprep.mubr.f32.mxu0 0.0
    %2841 = vmatmul.mubr.f32.gmra.mrb[0].mxu0 %v2741
    %v2842 = vpop.f32.mrb[0].mxu0
    %v2843 = vadd.f32 %v2720, %v2842
    %v2844 = vpop.f32.mrb[0].mxu0
    %2845 = vmatprep.mubr.f32.mxu0 0.0
    %2846 = vmatmul.mubr.f32.gmra.mrb[0].mxu0 %v2744
    %v2847 = vpop.f32.mrb[0].mxu0
    %v2848 = vadd.f32 %v2720, %v2847
    %v2849 = vpop.f32.mrb[0].mxu0
    %2850 = vdwg.mxu0
    %2851 = vmax.xlane.f32.xlu0 %v2813
    %v2852 = vpop.xlane.xlu0 %2851
    %2853 = vmax.xlane.f32.xlu0 %v2818
    %v2854 = vpop.xlane.xlu0 %2853
    %2855 = vmax.xlane.f32.xlu0 %v2823
    %v2856 = vpop.xlane.xlu0 %2855
    %2857 = vmax.xlane.f32.xlu0 %v2828
    %v2858 = vpop.xlane.xlu0 %2857
    %2859 = vmax.xlane.f32.xlu0 %v2833
    %v2860 = vpop.xlane.xlu0 %2859
    %2861 = vmax.xlane.f32.xlu0 %v2838
    %v2862 = vpop.xlane.xlu0 %2861
    %2863 = vmax.xlane.f32.xlu0 %v2843
    %v2864 = vpop.xlane.xlu0 %2863
    %2865 = vmax.xlane.f32.xlu0 %v2848
    %v2866 = vpop.xlane.xlu0 %2865
    %v2867 = vsub.f32 %v2813, %v2852
    %v2868 = vsub.f32 %v2818, %v2854
    %v2869 = vsub.f32 %v2823, %v2856
    %v2870 = vsub.f32 %v2828, %v2858
    %v2871 = vsub.f32 %v2833, %v2860
    %v2872 = vsub.f32 %v2838, %v2862
    %v2873 = vsub.f32 %v2843, %v2864
    %v2874 = vsub.f32 %v2848, %v2866
    %v2875 = vmul.f32 %v2867, 1.442695
    %v2876 = vpow.pop %v2875
    %v2877 = vmul.f32 %v2868, 1.442695
    %v2878 = vpow.pop %v2877
    %v2879 = vmul.f32 %v2869, 1.442695
    %v2880 = vpow.pop %v2879
    %v2881 = vmul.f32 %v2870, 1.442695
    %v2882 = vpow.pop %v2881
    %v2883 = vmul.f32 %v2871, 1.442695
    %v2884 = vpow.pop %v2883
    %v2885 = vmul.f32 %v2872, 1.442695
    %v2886 = vpow.pop %v2885
    %v2887 = vmul.f32 %v2873, 1.442695
    %v2888 = vpow.pop %v2887
    %v2889 = vmul.f32 %v2874, 1.442695
    %v2890 = vpow.pop %v2889
    %2891 = vadd.xlane.f32.xlu0 %v2876
    %v2892 = vpop.xlane.xlu0 %2891
    %2893 = vadd.xlane.f32.xlu0 %v2878
    %v2894 = vpop.xlane.xlu0 %2893
    %2895 = vadd.xlane.f32.xlu0 %v2880
    %v2896 = vpop.xlane.xlu0 %2895
    %2897 = vadd.xlane.f32.xlu0 %v2882
    %v2898 = vpop.xlane.xlu0 %2897
    %2899 = vadd.xlane.f32.xlu0 %v2884
    %v2900 = vpop.xlane.xlu0 %2899
    %2901 = vadd.xlane.f32.xlu0 %v2886
    %v2902 = vpop.xlane.xlu0 %2901
    %2903 = vadd.xlane.f32.xlu0 %v2888
    %v2904 = vpop.xlane.xlu0 %2903
    %2905 = vadd.xlane.f32.xlu0 %v2890
    %v2906 = vpop.xlane.xlu0 %2905
    %v2907 = vlog2.pop %v2892
    %v2908 = vmul.f32 %v2907, 0.6931472
    %v2909 = vlog2.pop %v2894
    %v2910 = vmul.f32 %v2909, 0.6931472
    %v2911 = vlog2.pop %v2896
    %v2912 = vmul.f32 %v2911, 0.6931472
    %v2913 = vlog2.pop %v2898
    %v2914 = vmul.f32 %v2913, 0.6931472
    %v2915 = vlog2.pop %v2900
    %v2916 = vmul.f32 %v2915, 0.6931472
    %v2917 = vlog2.pop %v2902
    %v2918 = vmul.f32 %v2917, 0.6931472
    %v2919 = vlog2.pop %v2904
    %v2920 = vmul.f32 %v2919, 0.6931472
    %v2921 = vlog2.pop %v2906
    %v2922 = vmul.f32 %v2921, 0.6931472
    %v2923 = vsub.f32 %v2867, %v2908
    %v2924 = vsub.f32 %v2868, %v2910
    %v2925 = vsub.f32 %v2869, %v2912
    %v2926 = vsub.f32 %v2870, %v2914
    %v2927 = vsub.f32 %v2871, %v2916
    %v2928 = vsub.f32 %v2872, %v2918
    %v2929 = vsub.f32 %v2873, %v2920
    %v2930 = vsub.f32 %v2874, %v2922
    %2931 = vst [vmem:[#allocation13] sm:$0xff] %v2923
    %2932 = vst [vmem:[#allocation13 + $0x8] sm:$0xff] %v2924
    %2933 = vst [vmem:[#allocation13 + $0x10] sm:$0xff] %v2925
    %2934 = vst [vmem:[#allocation13 + $0x18] sm:$0xff] %v2926
    %2935 = vst [vmem:[#allocation13 + $0x20] sm:$0xff] %v2927
    %2936 = vst [vmem:[#allocation13 + $0x28] sm:$0xff] %v2928
    %2937 = vst [vmem:[#allocation13 + $0x30] sm:$0xff] %v2929
    %2938 = vst [vmem:[#allocation13 + $0x38] sm:$0xff] %v2930
    // Predicated region
    $region70: #{tpu_custom_call.1} parent=1 // pred_check
      _
    $region71: #{tpu_custom_call.1} parent=1 // pred_check_branch
      %2940 = sbr.rel (0) target = $region73
    $region72: #{tpu_custom_call.1} parent=1 // pred_region
      %s2942 = ssub.s32 1024, 1024
      %2943 = vsyncadd [#allocation6], %s2942
      %s2944 = sshll.u32 [#allocation13], 4
      %s2945 = int_to_ptr.vmem [resolvable:$true] %s2944
      %2950 = dma.vmem_to_hbm [thread:$0]  %s2945, 1024, %s12, [#allocation6], 128, 128, 8
    $region73: #{tpu_custom_call.1} parent=1 // pred_fallthru
      _
    // Predicated region
    $region74: #{tpu_custom_call.1} parent=1 // pred_check
      _
    $region75: #{tpu_custom_call.1} parent=1 // pred_check_branch
      %2952 = sbr.rel (0) target = $region77
    $region76: #{tpu_custom_call.1} parent=1 // pred_region
      %s2954 = ssub.s32 256, 256
      %2955 = vsyncadd [#allocation15], %s2954
      %s2956 = sshll.u32 [#allocation14], 4
      %s2957 = int_to_ptr.vmem [resolvable:$true] %s2956
      %2962 = dma.vmem_to_hbm [thread:$0]  %s2957, 256, %s13, [#allocation15], 128, 128, 8
    $region77: #{tpu_custom_call.1} parent=1 // pred_fallthru
      _
    // Predicated region
    $region78: #{tpu_custom_call.1} parent=1 // pred_check
      _
    $region79: #{tpu_custom_call.1} parent=1 // pred_check_branch
      %2964 = sbr.rel (0) target = $region81
    $region80: #{tpu_custom_call.1} parent=1 // pred_region
      %s2966 = ssub.s32 256, 256
      %2967 = vsyncadd [#allocation15], %s2966
      %s2968 = sshll.u32 [#allocation16], 4
      %s2969 = int_to_ptr.vmem [resolvable:$true] %s2968
      %2974 = dma.vmem_to_hbm [thread:$0]  %s2969, 256, %s14, [#allocation15], 128, 128, 8
    $region81: #{tpu_custom_call.1} parent=1 // pred_fallthru
      _
    // Predicated region
    $region82: #{tpu_custom_call.1} parent=1 // pred_check
      _
    $region83: #{tpu_custom_call.1} parent=1 // pred_check_branch
      %2976 = sbr.rel (0) target = $region85
    $region84: #{tpu_custom_call.1} parent=1 // pred_region
      %2977 = dma.done [#allocation6], 1024
    $region85: #{tpu_custom_call.1} parent=1 // pred_fallthru
      _
    // Predicated region
    $region86: #{tpu_custom_call.1} parent=1 // pred_check
      _
    $region87: #{tpu_custom_call.1} parent=1 // pred_check_branch
      %2979 = sbr.rel (0) target = $region89
    $region88: #{tpu_custom_call.1} parent=1 // pred_region
      %2980 = dma.done [#allocation15], 256
    $region89: #{tpu_custom_call.1} parent=1 // pred_fallthru
      _
    // Predicated region
    $region90: #{tpu_custom_call.1} parent=1 // pred_check
      _
    $region91: #{tpu_custom_call.1} parent=1 // pred_check_branch
      %2982 = sbr.rel (0) target = $region93
    $region92: #{tpu_custom_call.1} parent=1 // pred_region
      %2983 = dma.done [#allocation15], 256
    $region93: #{tpu_custom_call.1} parent=1 // pred_fallthru
      _
    %2984 = vsyncpa [#allocation5], 1
    %2985 = vsyncpa [#allocation8], 1
    %2986 = vsyncpa [#allocation11], 1
    %2987 = vsyncpa [#allocation6], 1
    %2988 = vsyncpa [#allocation15], 1

</llo_original>
